<compile_context>
chip_gen: v6e
topology: v6e:2x2x1
jax: 0.10.0
libtpu: 0.0.40
codegen_flags: <defaults>
</compile_context>

<pallas_src>
import math
from functools import partial

import jax
import jax.numpy as jnp
from jax.experimental import pallas as pl
from jax.experimental.pallas import tpu as pltpu


def make_distillog_kernel(num_layers, seq_len, bp, batch, input_size, hidden):
    S, BP, B, I, H = seq_len, bp, batch, input_size, hidden
    R = S * BP  # total rows, time-major, batch padded to sublane multiple

    def kernel(*args):
        idx = 0
        x_ref = args[idx]; idx += 1          # (R, I) f32, time-major flattened
        m_ref = args[idx]; idx += 1          # (R, 1) f32 row-validity mask
        gru = []
        for _ in range(num_layers):
            gru.append(args[idx:idx + 10]); idx += 10
        (enc_w, enc_b, encs_w, encs_b,
         decs_w, decs_b, dec_w, dec_b) = args[idx:idx + 8]; idx += 8
        loss_ref, pred_ref, recst_ref = args[idx:idx + 3]

        x = x_ref[...]                                   # (R, I) f32 (kept for MSE)
        act_bf = x.astype(jnp.bfloat16)                  # current-layer matmul operand

        # -------- stacked GRU --------
        for l in range(num_layers):
            (wih_r_ref, wih_z_ref, wih_n_ref,
             whh_r_ref, whh_z_ref, whh_n_ref,
             b_r_ref, b_z_ref, b_in_ref, b_hn_ref) = gru[l]

            whh_r = whh_r_ref[...]                       # (H, H) bf16
            whh_z = whh_z_ref[...]
            whh_n = whh_n_ref[...]

            # Hoisted input projection: ONE tall matmul per gate for all S*BP
            # rows; r/z gates get (b_ih + b_hh) folded in, n gate gets b_ih only
            # (b_hh_n must stay inside the r * (.) term).
            gi_r = jnp.dot(act_bf, wih_r_ref[...],
                           preferred_element_type=jnp.float32) + b_r_ref[...]
            gi_z = jnp.dot(act_bf, wih_z_ref[...],
                           preferred_element_type=jnp.float32) + b_z_ref[...]
            gi_n = jnp.dot(act_bf, wih_n_ref[...],
                           preferred_element_type=jnp.float32) + b_in_ref[...]
            # Pre-broadcast the hh bias of the n gate once (not per timestep).
            b_hn = jnp.broadcast_to(b_hn_ref[...], (BP, H))

            h = jnp.zeros((BP, H), jnp.float32)          # hidden state stays f32
            outs = []
            for t in range(S):                           # fully unrolled recurrence
                lo = t * BP                              # 8-sublane aligned static slice
                h_bf = h.astype(jnp.bfloat16)
                gh_r = jnp.dot(h_bf, whh_r, preferred_element_type=jnp.float32)
                gh_z = jnp.dot(h_bf, whh_z, preferred_element_type=jnp.float32)
                gh_n = jnp.dot(h_bf, whh_n, preferred_element_type=jnp.float32)
                r = jax.nn.sigmoid(gi_r[lo:lo + BP, :] + gh_r)
                z = jax.nn.sigmoid(gi_z[lo:lo + BP, :] + gh_z)
                n = jnp.tanh(gi_n[lo:lo + BP, :] + r * (gh_n + b_hn))
                h = (1.0 - z) * n + z * h
                outs.append(h)
            seq = jnp.concatenate(outs, axis=0)          # (R, H) f32, aligned pieces
            act_bf = seq.astype(jnp.bfloat16)
            # TODO(synk): inter-layer dropout (p=0.1) omitted (eval forward).

        # -------- encoder / decoder stack fused over all R rows --------
        h1 = jnp.dot(act_bf, enc_w[...],
                     preferred_element_type=jnp.float32) + enc_b[...]       # (R, H4)
        h2 = jnp.sum(h1 * encs_w[...], axis=1, keepdims=True) + encs_b[...]  # (R, 1)
        r1 = h2 * decs_w[...] + decs_b[...]                                  # (R, H4)
        rc = jnp.dot(r1.astype(jnp.bfloat16), dec_w[...],
                     preferred_element_type=jnp.float32) + dec_b[...]        # (R, I)
        recst_ref[...] = rc

        diff = rc - x
        pred = jnp.mean(diff * diff, axis=-1, keepdims=True)                 # (R, 1)
        pred_ref[...] = pred
        # Padded batch rows are masked out; divide by the real element count.
        loss_ref[0] = jnp.sum(pred * m_ref[...]) * (1.0 / (S * B))

    return kernel


def init_params(key, input_size, hidden, num_layers):
    """Deterministic init mirroring PyTorch default (uniform +-1/sqrt(fan))."""
    params = {"gru": []}
    kg = 1.0 / math.sqrt(hidden)
    for _ in range(num_layers):
        in_l = input_size if len(params["gru"]) == 0 else hidden
        key, k1, k2, k3, k4 = jax.random.split(key, 5)
        params["gru"].append(dict(
            w_ih=jax.random.uniform(k1, (3 * hidden, in_l), jnp.float32, -kg, kg),
            w_hh=jax.random.uniform(k2, (3 * hidden, hidden), jnp.float32, -kg, kg),
            b_ih=jax.random.uniform(k3, (3 * hidden,), jnp.float32, -kg, kg),
            b_hh=jax.random.uniform(k4, (3 * hidden,), jnp.float32, -kg, kg),
        ))

    def linear(key, fan_in, fan_out):
        kk = 1.0 / math.sqrt(fan_in)
        k1, k2 = jax.random.split(key)
        w = jax.random.uniform(k1, (fan_out, fan_in), jnp.float32, -kk, kk)
        b = jax.random.uniform(k2, (fan_out,), jnp.float32, -kk, kk)
        return w, b

    h4 = hidden // 4
    key, k1, k2, k3, k4 = jax.random.split(key, 5)
    params["encoder"] = linear(k1, hidden, h4)       # (H//4, H)
    params["encoders"] = linear(k2, h4, 1)           # (1, H//4)
    params["decoders"] = linear(k3, 1, h4)           # (H//4, 1)
    params["decoder"] = linear(k4, h4, input_size)   # (I, H//4)
    return params


@partial(jax.jit, static_argnums=(2, 3))
def distillog_forward(x, params, hidden, num_layers):
    B, S, I = x.shape
    H = hidden
    H4 = H // 4
    BP = max(8, ((B + 7) // 8) * 8)      # pad batch rows to a sublane multiple
    R = S * BP

    # layout plumbing (all outside the kernel): time-major, batch padded,
    # rows flattened so every kernel matmul is a plain 2-D GEMM.
    x_sb = jnp.transpose(x, (1, 0, 2)).astype(jnp.float32)       # (S, B, I)
    x_sb = jnp.pad(x_sb, ((0, 0), (0, BP - B), (0, 0)))          # (S, BP, I)
    x_flat = x_sb.reshape(R, I)

    row_valid = (jnp.arange(BP) < B).astype(jnp.float32)         # (BP,)
    mask = jnp.tile(row_valid, S).reshape(R, 1)                  # (R, 1)

    bf16, f32 = jnp.bfloat16, jnp.float32
    inputs = [x_flat, mask]
    for l in range(num_layers):
        g = params["gru"][l]
        w_ih, w_hh = g["w_ih"], g["w_hh"]            # (3H, in_l), (3H, H)
        b_ih, b_hh = g["b_ih"], g["b_hh"]            # (3H,)
        wir, wiz, win = w_ih[:H], w_ih[H:2 * H], w_ih[2 * H:]
        whr, whz, whn = w_hh[:H], w_hh[H:2 * H], w_hh[2 * H:]
        bir, biz, bin_ = b_ih[:H], b_ih[H:2 * H], b_ih[2 * H:]
        bhr, bhz, bhn = b_hh[:H], b_hh[H:2 * H], b_hh[2 * H:]
        inputs += [
            wir.T.astype(bf16), wiz.T.astype(bf16), win.T.astype(bf16),   # (in_l, H)
            whr.T.astype(bf16), whz.T.astype(bf16), whn.T.astype(bf16),   # (H, H)
            (bir + bhr).reshape(1, H).astype(f32),                        # r: bih+bhh folded
            (biz + bhz).reshape(1, H).astype(f32),                        # z: bih+bhh folded
            bin_.reshape(1, H).astype(f32),                               # n: bih
            bhn.reshape(1, H).astype(f32),                                # n: bhh (stays inside r*(.))
        ]

    enc_w, enc_b = params["encoder"]      # (H4, H), (H4,)
    encs_w, encs_b = params["encoders"]   # (1, H4), (1,)
    decs_w, decs_b = params["decoders"]   # (H4, 1), (H4,)
    dec_w, dec_b = params["decoder"]      # (I, H4), (I,)
    inputs += [
        enc_w.T.astype(bf16), enc_b.reshape(1, H4).astype(f32),
        encs_w.reshape(1, H4).astype(f32), encs_b.reshape(1, 1).astype(f32),
        decs_w.reshape(1, H4).astype(f32), decs_b.reshape(1, H4).astype(f32),
        dec_w.T.astype(bf16), dec_b.reshape(1, I).astype(f32),
    ]

    kernel = make_distillog_kernel(num_layers, S, BP, B, I, H)
    vmem = pl.BlockSpec(memory_space=pltpu.MemorySpace.VMEM)
    smem = pl.BlockSpec(memory_space=pltpu.MemorySpace.SMEM)

    out_shape = (
        jax.ShapeDtypeStruct((1,), f32),        # loss
        jax.ShapeDtypeStruct((R, 1), f32),      # pred  (time-major padded rows)
        jax.ShapeDtypeStruct((R, I), f32),      # reconstruction (time-major padded rows)
    )

    loss, pred_flat, recst_flat = pl.pallas_call(
        kernel,
        out_shape=out_shape,
        in_specs=[vmem] * len(inputs),
        out_specs=(smem, vmem, vmem),
    )(*inputs)

    y_pred = pred_flat.reshape(S, BP)[:, :B].T                           # (B, S)
    recst = recst_flat.reshape(S, BP, I)[:, :B].transpose(1, 0, 2)       # (B, S, I)
    return {"loss": loss[0], "y_pred": y_pred, "reconstruction": recst}


if __name__ == "__main__":
    batch, seq_len, input_size, hidden, num_layers = 2, 8, 32, 32, 2

    key = jax.random.PRNGKey(0)
    kx, kp = jax.random.split(key)
    x = jax.random.normal(kx, (batch, seq_len, input_size), jnp.float32)
    params = init_params(kp, input_size, hidden, num_layers)

    out = distillog_forward(x, params, hidden, num_layers)
    jax.block_until_ready(out)

    assert out["loss"].shape == ()
    assert out["y_pred"].shape == (batch, seq_len)
    assert out["reconstruction"].shape == (batch, seq_len, input_size)
    assert bool(jnp.isfinite(out["loss"]))
    print("KERNEL_OK")
</pallas_src>

<mosaic_0001>
module attributes {stable_mosaic.version = 11 : i64} {
  func.func @kernel(%arg0: memref<64x32xf32, #tpu.memory_space<vmem>>, %arg1: memref<64x1xf32, #tpu.memory_space<vmem>>, %arg2: memref<32x32xbf16, #tpu.memory_space<vmem>>, %arg3: memref<32x32xbf16, #tpu.memory_space<vmem>>, %arg4: memref<32x32xbf16, #tpu.memory_space<vmem>>, %arg5: memref<32x32xbf16, #tpu.memory_space<vmem>>, %arg6: memref<32x32xbf16, #tpu.memory_space<vmem>>, %arg7: memref<32x32xbf16, #tpu.memory_space<vmem>>, %arg8: memref<1x32xf32, #tpu.memory_space<vmem>>, %arg9: memref<1x32xf32, #tpu.memory_space<vmem>>, %arg10: memref<1x32xf32, #tpu.memory_space<vmem>>, %arg11: memref<1x32xf32, #tpu.memory_space<vmem>>, %arg12: memref<32x32xbf16, #tpu.memory_space<vmem>>, %arg13: memref<32x32xbf16, #tpu.memory_space<vmem>>, %arg14: memref<32x32xbf16, #tpu.memory_space<vmem>>, %arg15: memref<32x32xbf16, #tpu.memory_space<vmem>>, %arg16: memref<32x32xbf16, #tpu.memory_space<vmem>>, %arg17: memref<32x32xbf16, #tpu.memory_space<vmem>>, %arg18: memref<1x32xf32, #tpu.memory_space<vmem>>, %arg19: memref<1x32xf32, #tpu.memory_space<vmem>>, %arg20: memref<1x32xf32, #tpu.memory_space<vmem>>, %arg21: memref<1x32xf32, #tpu.memory_space<vmem>>, %arg22: memref<32x8xbf16, #tpu.memory_space<vmem>>, %arg23: memref<1x8xf32, #tpu.memory_space<vmem>>, %arg24: memref<1x8xf32, #tpu.memory_space<vmem>>, %arg25: memref<1x1xf32, #tpu.memory_space<vmem>>, %arg26: memref<1x8xf32, #tpu.memory_space<vmem>>, %arg27: memref<1x8xf32, #tpu.memory_space<vmem>>, %arg28: memref<8x32xbf16, #tpu.memory_space<vmem>>, %arg29: memref<1x32xf32, #tpu.memory_space<vmem>>, %arg30: memref<1xf32, #tpu.memory_space<smem>>, %arg31: memref<64x1xf32, #tpu.memory_space<vmem>>, %arg32: memref<64x32xf32, #tpu.memory_space<vmem>>) attributes {dimension_semantics = [], scalar_prefetch = 0 : i64, scratch_operands = 0 : i64, tpu.core_type = #tpu.core_type<tc>} {
    %c0 = arith.constant 0 : index
    %c0_0 = arith.constant 0 : index
    %0 = vector.load %arg0[%c0, %c0_0] : memref<64x32xf32, #tpu.memory_space<vmem>>, vector<64x32xf32>
    %1 = arith.truncf %0 : vector<64x32xf32> to vector<64x32xbf16>
    %c0_1 = arith.constant 0 : index
    %c0_2 = arith.constant 0 : index
    %2 = vector.load %arg5[%c0_1, %c0_2] : memref<32x32xbf16, #tpu.memory_space<vmem>>, vector<32x32xbf16>
    %c0_3 = arith.constant 0 : index
    %c0_4 = arith.constant 0 : index
    %3 = vector.load %arg6[%c0_3, %c0_4] : memref<32x32xbf16, #tpu.memory_space<vmem>>, vector<32x32xbf16>
    %c0_5 = arith.constant 0 : index
    %c0_6 = arith.constant 0 : index
    %4 = vector.load %arg7[%c0_5, %c0_6] : memref<32x32xbf16, #tpu.memory_space<vmem>>, vector<32x32xbf16>
    %c0_7 = arith.constant 0 : index
    %c0_8 = arith.constant 0 : index
    %5 = vector.load %arg2[%c0_7, %c0_8] : memref<32x32xbf16, #tpu.memory_space<vmem>>, vector<32x32xbf16>
    %cst = arith.constant dense<0.000000e+00> : vector<64x32xf32>
    %6 = tpu.matmul %1, %5, %cst {dimension_numbers = #tpu.dot_dimension_numbers<[1], [0], [0], [1], [0, 0, 1, 1], [], []>} : vector<64x32xbf16>, vector<32x32xbf16>, vector<64x32xf32> -> vector<64x32xf32>
    %c0_9 = arith.constant 0 : index
    %c0_10 = arith.constant 0 : index
    %7 = vector.load %arg8[%c0_9, %c0_10] : memref<1x32xf32, #tpu.memory_space<vmem>>, vector<1x32xf32>
    %8 = vector.broadcast %7 : vector<1x32xf32> to vector<64x32xf32>
    %9 = arith.addf %6, %8 : vector<64x32xf32>
    %c0_11 = arith.constant 0 : index
    %c0_12 = arith.constant 0 : index
    %10 = vector.load %arg3[%c0_11, %c0_12] : memref<32x32xbf16, #tpu.memory_space<vmem>>, vector<32x32xbf16>
    %cst_13 = arith.constant dense<0.000000e+00> : vector<64x32xf32>
    %11 = tpu.matmul %1, %10, %cst_13 {dimension_numbers = #tpu.dot_dimension_numbers<[1], [0], [0], [1], [0, 0, 1, 1], [], []>} : vector<64x32xbf16>, vector<32x32xbf16>, vector<64x32xf32> -> vector<64x32xf32>
    %c0_14 = arith.constant 0 : index
    %c0_15 = arith.constant 0 : index
    %12 = vector.load %arg9[%c0_14, %c0_15] : memref<1x32xf32, #tpu.memory_space<vmem>>, vector<1x32xf32>
    %13 = vector.broadcast %12 : vector<1x32xf32> to vector<64x32xf32>
    %14 = arith.addf %11, %13 : vector<64x32xf32>
    %c0_16 = arith.constant 0 : index
    %c0_17 = arith.constant 0 : index
    %15 = vector.load %arg4[%c0_16, %c0_17] : memref<32x32xbf16, #tpu.memory_space<vmem>>, vector<32x32xbf16>
    %cst_18 = arith.constant dense<0.000000e+00> : vector<64x32xf32>
    %16 = tpu.matmul %1, %15, %cst_18 {dimension_numbers = #tpu.dot_dimension_numbers<[1], [0], [0], [1], [0, 0, 1, 1], [], []>} : vector<64x32xbf16>, vector<32x32xbf16>, vector<64x32xf32> -> vector<64x32xf32>
    %c0_19 = arith.constant 0 : index
    %c0_20 = arith.constant 0 : index
    %17 = vector.load %arg10[%c0_19, %c0_20] : memref<1x32xf32, #tpu.memory_space<vmem>>, vector<1x32xf32>
    %18 = vector.broadcast %17 : vector<1x32xf32> to vector<64x32xf32>
    %19 = arith.addf %16, %18 : vector<64x32xf32>
    %c0_21 = arith.constant 0 : index
    %c0_22 = arith.constant 0 : index
    %20 = vector.load %arg11[%c0_21, %c0_22] : memref<1x32xf32, #tpu.memory_space<vmem>>, vector<1x32xf32>
    %21 = vector.shape_cast %20 : vector<1x32xf32> to vector<1x32xf32>
    %22 = vector.broadcast %21 : vector<1x32xf32> to vector<8x32xf32>
    %cst_23 = arith.constant 0.000000e+00 : f32
    %23 = vector.broadcast %cst_23 : f32 to vector<8x32xf32>
    %24 = arith.truncf %23 : vector<8x32xf32> to vector<8x32xbf16>
    %cst_24 = arith.constant dense<0.000000e+00> : vector<8x32xf32>
    %25 = tpu.matmul %24, %2, %cst_24 {dimension_numbers = #tpu.dot_dimension_numbers<[1], [0], [0], [1], [0, 0, 1, 1], [], []>} : vector<8x32xbf16>, vector<32x32xbf16>, vector<8x32xf32> -> vector<8x32xf32>
    %cst_25 = arith.constant dense<0.000000e+00> : vector<8x32xf32>
    %26 = tpu.matmul %24, %3, %cst_25 {dimension_numbers = #tpu.dot_dimension_numbers<[1], [0], [0], [1], [0, 0, 1, 1], [], []>} : vector<8x32xbf16>, vector<32x32xbf16>, vector<8x32xf32> -> vector<8x32xf32>
    %cst_26 = arith.constant dense<0.000000e+00> : vector<8x32xf32>
    %27 = tpu.matmul %24, %4, %cst_26 {dimension_numbers = #tpu.dot_dimension_numbers<[1], [0], [0], [1], [0, 0, 1, 1], [], []>} : vector<8x32xbf16>, vector<32x32xbf16>, vector<8x32xf32> -> vector<8x32xf32>
    %28 = vector.extract_strided_slice %9 {offsets = [0, 0], sizes = [8, 32], strides = [1, 1]} : vector<64x32xf32> to vector<8x32xf32>
    %29 = arith.addf %28, %25 : vector<8x32xf32>
    %30 = arith.negf %29 : vector<8x32xf32>
    %31 = math.exp %30 : vector<8x32xf32>
    %cst_27 = arith.constant 1.000000e+00 : f32
    %32 = vector.broadcast %cst_27 : f32 to vector<8x32xf32>
    %33 = arith.addf %32, %31 : vector<8x32xf32>
    %34 = arith.divf %32, %33 : vector<8x32xf32>
    %35 = vector.extract_strided_slice %14 {offsets = [0, 0], sizes = [8, 32], strides = [1, 1]} : vector<64x32xf32> to vector<8x32xf32>
    %36 = arith.addf %35, %26 : vector<8x32xf32>
    %37 = arith.negf %36 : vector<8x32xf32>
    %38 = math.exp %37 : vector<8x32xf32>
    %cst_28 = arith.constant 1.000000e+00 : f32
    %39 = vector.broadcast %cst_28 : f32 to vector<8x32xf32>
    %40 = arith.addf %39, %38 : vector<8x32xf32>
    %41 = arith.divf %39, %40 : vector<8x32xf32>
    %42 = vector.extract_strided_slice %19 {offsets = [0, 0], sizes = [8, 32], strides = [1, 1]} : vector<64x32xf32> to vector<8x32xf32>
    %43 = arith.addf %27, %22 : vector<8x32xf32>
    %44 = arith.mulf %34, %43 : vector<8x32xf32>
    %45 = arith.addf %42, %44 : vector<8x32xf32>
    %46 = math.tanh %45 : vector<8x32xf32>
    %cst_29 = arith.constant 1.000000e+00 : f32
    %47 = vector.broadcast %cst_29 : f32 to vector<8x32xf32>
    %48 = arith.subf %47, %41 : vector<8x32xf32>
    %49 = arith.mulf %48, %46 : vector<8x32xf32>
    %50 = arith.mulf %41, %23 : vector<8x32xf32>
    %51 = arith.addf %49, %50 : vector<8x32xf32>
    %52 = arith.truncf %51 : vector<8x32xf32> to vector<8x32xbf16>
    %cst_30 = arith.constant dense<0.000000e+00> : vector<8x32xf32>
    %53 = tpu.matmul %52, %2, %cst_30 {dimension_numbers = #tpu.dot_dimension_numbers<[1], [0], [0], [1], [0, 0, 1, 1], [], []>} : vector<8x32xbf16>, vector<32x32xbf16>, vector<8x32xf32> -> vector<8x32xf32>
    %cst_31 = arith.constant dense<0.000000e+00> : vector<8x32xf32>
    %54 = tpu.matmul %52, %3, %cst_31 {dimension_numbers = #tpu.dot_dimension_numbers<[1], [0], [0], [1], [0, 0, 1, 1], [], []>} : vector<8x32xbf16>, vector<32x32xbf16>, vector<8x32xf32> -> vector<8x32xf32>
    %cst_32 = arith.constant dense<0.000000e+00> : vector<8x32xf32>
    %55 = tpu.matmul %52, %4, %cst_32 {dimension_numbers = #tpu.dot_dimension_numbers<[1], [0], [0], [1], [0, 0, 1, 1], [], []>} : vector<8x32xbf16>, vector<32x32xbf16>, vector<8x32xf32> -> vector<8x32xf32>
    %56 = vector.extract_strided_slice %9 {offsets = [8, 0], sizes = [8, 32], strides = [1, 1]} : vector<64x32xf32> to vector<8x32xf32>
    %57 = arith.addf %56, %53 : vector<8x32xf32>
    %58 = arith.negf %57 : vector<8x32xf32>
    %59 = math.exp %58 : vector<8x32xf32>
    %cst_33 = arith.constant 1.000000e+00 : f32
    %60 = vector.broadcast %cst_33 : f32 to vector<8x32xf32>
    %61 = arith.addf %60, %59 : vector<8x32xf32>
    %62 = arith.divf %60, %61 : vector<8x32xf32>
    %63 = vector.extract_strided_slice %14 {offsets = [8, 0], sizes = [8, 32], strides = [1, 1]} : vector<64x32xf32> to vector<8x32xf32>
    %64 = arith.addf %63, %54 : vector<8x32xf32>
    %65 = arith.negf %64 : vector<8x32xf32>
    %66 = math.exp %65 : vector<8x32xf32>
    %cst_34 = arith.constant 1.000000e+00 : f32
    %67 = vector.broadcast %cst_34 : f32 to vector<8x32xf32>
    %68 = arith.addf %67, %66 : vector<8x32xf32>
    %69 = arith.divf %67, %68 : vector<8x32xf32>
    %70 = vector.extract_strided_slice %19 {offsets = [8, 0], sizes = [8, 32], strides = [1, 1]} : vector<64x32xf32> to vector<8x32xf32>
    %71 = arith.addf %55, %22 : vector<8x32xf32>
    %72 = arith.mulf %62, %71 : vector<8x32xf32>
    %73 = arith.addf %70, %72 : vector<8x32xf32>
    %74 = math.tanh %73 : vector<8x32xf32>
    %cst_35 = arith.constant 1.000000e+00 : f32
    %75 = vector.broadcast %cst_35 : f32 to vector<8x32xf32>
    %76 = arith.subf %75, %69 : vector<8x32xf32>
    %77 = arith.mulf %76, %74 : vector<8x32xf32>
    %78 = arith.mulf %69, %51 : vector<8x32xf32>
    %79 = arith.addf %77, %78 : vector<8x32xf32>
    %80 = arith.truncf %79 : vector<8x32xf32> to vector<8x32xbf16>
    %cst_36 = arith.constant dense<0.000000e+00> : vector<8x32xf32>
    %81 = tpu.matmul %80, %2, %cst_36 {dimension_numbers = #tpu.dot_dimension_numbers<[1], [0], [0], [1], [0, 0, 1, 1], [], []>} : vector<8x32xbf16>, vector<32x32xbf16>, vector<8x32xf32> -> vector<8x32xf32>
    %cst_37 = arith.constant dense<0.000000e+00> : vector<8x32xf32>
    %82 = tpu.matmul %80, %3, %cst_37 {dimension_numbers = #tpu.dot_dimension_numbers<[1], [0], [0], [1], [0, 0, 1, 1], [], []>} : vector<8x32xbf16>, vector<32x32xbf16>, vector<8x32xf32> -> vector<8x32xf32>
    %cst_38 = arith.constant dense<0.000000e+00> : vector<8x32xf32>
    %83 = tpu.matmul %80, %4, %cst_38 {dimension_numbers = #tpu.dot_dimension_numbers<[1], [0], [0], [1], [0, 0, 1, 1], [], []>} : vector<8x32xbf16>, vector<32x32xbf16>, vector<8x32xf32> -> vector<8x32xf32>
    %84 = vector.extract_strided_slice %9 {offsets = [16, 0], sizes = [8, 32], strides = [1, 1]} : vector<64x32xf32> to vector<8x32xf32>
    %85 = arith.addf %84, %81 : vector<8x32xf32>
    %86 = arith.negf %85 : vector<8x32xf32>
    %87 = math.exp %86 : vector<8x32xf32>
    %cst_39 = arith.constant 1.000000e+00 : f32
    %88 = vector.broadcast %cst_39 : f32 to vector<8x32xf32>
    %89 = arith.addf %88, %87 : vector<8x32xf32>
    %90 = arith.divf %88, %89 : vector<8x32xf32>
    %91 = vector.extract_strided_slice %14 {offsets = [16, 0], sizes = [8, 32], strides = [1, 1]} : vector<64x32xf32> to vector<8x32xf32>
    %92 = arith.addf %91, %82 : vector<8x32xf32>
    %93 = arith.negf %92 : vector<8x32xf32>
    %94 = math.exp %93 : vector<8x32xf32>
    %cst_40 = arith.constant 1.000000e+00 : f32
    %95 = vector.broadcast %cst_40 : f32 to vector<8x32xf32>
    %96 = arith.addf %95, %94 : vector<8x32xf32>
    %97 = arith.divf %95, %96 : vector<8x32xf32>
    %98 = vector.extract_strided_slice %19 {offsets = [16, 0], sizes = [8, 32], strides = [1, 1]} : vector<64x32xf32> to vector<8x32xf32>
    %99 = arith.addf %83, %22 : vector<8x32xf32>
    %100 = arith.mulf %90, %99 : vector<8x32xf32>
    %101 = arith.addf %98, %100 : vector<8x32xf32>
    %102 = math.tanh %101 : vector<8x32xf32>
    %cst_41 = arith.constant 1.000000e+00 : f32
    %103 = vector.broadcast %cst_41 : f32 to vector<8x32xf32>
    %104 = arith.subf %103, %97 : vector<8x32xf32>
    %105 = arith.mulf %104, %102 : vector<8x32xf32>
    %106 = arith.mulf %97, %79 : vector<8x32xf32>
    %107 = arith.addf %105, %106 : vector<8x32xf32>
    %108 = arith.truncf %107 : vector<8x32xf32> to vector<8x32xbf16>
    %cst_42 = arith.constant dense<0.000000e+00> : vector<8x32xf32>
    %109 = tpu.matmul %108, %2, %cst_42 {dimension_numbers = #tpu.dot_dimension_numbers<[1], [0], [0], [1], [0, 0, 1, 1], [], []>} : vector<8x32xbf16>, vector<32x32xbf16>, vector<8x32xf32> -> vector<8x32xf32>
    %cst_43 = arith.constant dense<0.000000e+00> : vector<8x32xf32>
    %110 = tpu.matmul %108, %3, %cst_43 {dimension_numbers = #tpu.dot_dimension_numbers<[1], [0], [0], [1], [0, 0, 1, 1], [], []>} : vector<8x32xbf16>, vector<32x32xbf16>, vector<8x32xf32> -> vector<8x32xf32>
    %cst_44 = arith.constant dense<0.000000e+00> : vector<8x32xf32>
    %111 = tpu.matmul %108, %4, %cst_44 {dimension_numbers = #tpu.dot_dimension_numbers<[1], [0], [0], [1], [0, 0, 1, 1], [], []>} : vector<8x32xbf16>, vector<32x32xbf16>, vector<8x32xf32> -> vector<8x32xf32>
    %112 = vector.extract_strided_slice %9 {offsets = [24, 0], sizes = [8, 32], strides = [1, 1]} : vector<64x32xf32> to vector<8x32xf32>
    %113 = arith.addf %112, %109 : vector<8x32xf32>
    %114 = arith.negf %113 : vector<8x32xf32>
    %115 = math.exp %114 : vector<8x32xf32>
    %cst_45 = arith.constant 1.000000e+00 : f32
    %116 = vector.broadcast %cst_45 : f32 to vector<8x32xf32>
    %117 = arith.addf %116, %115 : vector<8x32xf32>
    %118 = arith.divf %116, %117 : vector<8x32xf32>
    %119 = vector.extract_strided_slice %14 {offsets = [24, 0], sizes = [8, 32], strides = [1, 1]} : vector<64x32xf32> to vector<8x32xf32>
    %120 = arith.addf %119, %110 : vector<8x32xf32>
    %121 = arith.negf %120 : vector<8x32xf32>
    %122 = math.exp %121 : vector<8x32xf32>
    %cst_46 = arith.constant 1.000000e+00 : f32
    %123 = vector.broadcast %cst_46 : f32 to vector<8x32xf32>
    %124 = arith.addf %123, %122 : vector<8x32xf32>
    %125 = arith.divf %123, %124 : vector<8x32xf32>
    %126 = vector.extract_strided_slice %19 {offsets = [24, 0], sizes = [8, 32], strides = [1, 1]} : vector<64x32xf32> to vector<8x32xf32>
    %127 = arith.addf %111, %22 : vector<8x32xf32>
    %128 = arith.mulf %118, %127 : vector<8x32xf32>
    %129 = arith.addf %126, %128 : vector<8x32xf32>
    %130 = math.tanh %129 : vector<8x32xf32>
    %cst_47 = arith.constant 1.000000e+00 : f32
    %131 = vector.broadcast %cst_47 : f32 to vector<8x32xf32>
    %132 = arith.subf %131, %125 : vector<8x32xf32>
    %133 = arith.mulf %132, %130 : vector<8x32xf32>
    %134 = arith.mulf %125, %107 : vector<8x32xf32>
    %135 = arith.addf %133, %134 : vector<8x32xf32>
    %136 = arith.truncf %135 : vector<8x32xf32> to vector<8x32xbf16>
    %cst_48 = arith.constant dense<0.000000e+00> : vector<8x32xf32>
    %137 = tpu.matmul %136, %2, %cst_48 {dimension_numbers = #tpu.dot_dimension_numbers<[1], [0], [0], [1], [0, 0, 1, 1], [], []>} : vector<8x32xbf16>, vector<32x32xbf16>, vector<8x32xf32> -> vector<8x32xf32>
    %cst_49 = arith.constant dense<0.000000e+00> : vector<8x32xf32>
    %138 = tpu.matmul %136, %3, %cst_49 {dimension_numbers = #tpu.dot_dimension_numbers<[1], [0], [0], [1], [0, 0, 1, 1], [], []>} : vector<8x32xbf16>, vector<32x32xbf16>, vector<8x32xf32> -> vector<8x32xf32>
    %cst_50 = arith.constant dense<0.000000e+00> : vector<8x32xf32>
    %139 = tpu.matmul %136, %4, %cst_50 {dimension_numbers = #tpu.dot_dimension_numbers<[1], [0], [0], [1], [0, 0, 1, 1], [], []>} : vector<8x32xbf16>, vector<32x32xbf16>, vector<8x32xf32> -> vector<8x32xf32>
    %140 = vector.extract_strided_slice %9 {offsets = [32, 0], sizes = [8, 32], strides = [1, 1]} : vector<64x32xf32> to vector<8x32xf32>
    %141 = arith.addf %140, %137 : vector<8x32xf32>
    %142 = arith.negf %141 : vector<8x32xf32>
    %143 = math.exp %142 : vector<8x32xf32>
    %cst_51 = arith.constant 1.000000e+00 : f32
    %144 = vector.broadcast %cst_51 : f32 to vector<8x32xf32>
    %145 = arith.addf %144, %143 : vector<8x32xf32>
    %146 = arith.divf %144, %145 : vector<8x32xf32>
    %147 = vector.extract_strided_slice %14 {offsets = [32, 0], sizes = [8, 32], strides = [1, 1]} : vector<64x32xf32> to vector<8x32xf32>
    %148 = arith.addf %147, %138 : vector<8x32xf32>
    %149 = arith.negf %148 : vector<8x32xf32>
    %150 = math.exp %149 : vector<8x32xf32>
    %cst_52 = arith.constant 1.000000e+00 : f32
    %151 = vector.broadcast %cst_52 : f32 to vector<8x32xf32>
    %152 = arith.addf %151, %150 : vector<8x32xf32>
    %153 = arith.divf %151, %152 : vector<8x32xf32>
    %154 = vector.extract_strided_slice %19 {offsets = [32, 0], sizes = [8, 32], strides = [1, 1]} : vector<64x32xf32> to vector<8x32xf32>
    %155 = arith.addf %139, %22 : vector<8x32xf32>
    %156 = arith.mulf %146, %155 : vector<8x32xf32>
    %157 = arith.addf %154, %156 : vector<8x32xf32>
    %158 = math.tanh %157 : vector<8x32xf32>
    %cst_53 = arith.constant 1.000000e+00 : f32
    %159 = vector.broadcast %cst_53 : f32 to vector<8x32xf32>
    %160 = arith.subf %159, %153 : vector<8x32xf32>
    %161 = arith.mulf %160, %158 : vector<8x32xf32>
    %162 = arith.mulf %153, %135 : vector<8x32xf32>
    %163 = arith.addf %161, %162 : vector<8x32xf32>
    %164 = arith.truncf %163 : vector<8x32xf32> to vector<8x32xbf16>
    %cst_54 = arith.constant dense<0.000000e+00> : vector<8x32xf32>
    %165 = tpu.matmul %164, %2, %cst_54 {dimension_numbers = #tpu.dot_dimension_numbers<[1], [0], [0], [1], [0, 0, 1, 1], [], []>} : vector<8x32xbf16>, vector<32x32xbf16>, vector<8x32xf32> -> vector<8x32xf32>
    %cst_55 = arith.constant dense<0.000000e+00> : vector<8x32xf32>
    %166 = tpu.matmul %164, %3, %cst_55 {dimension_numbers = #tpu.dot_dimension_numbers<[1], [0], [0], [1], [0, 0, 1, 1], [], []>} : vector<8x32xbf16>, vector<32x32xbf16>, vector<8x32xf32> -> vector<8x32xf32>
    %cst_56 = arith.constant dense<0.000000e+00> : vector<8x32xf32>
    %167 = tpu.matmul %164, %4, %cst_56 {dimension_numbers = #tpu.dot_dimension_numbers<[1], [0], [0], [1], [0, 0, 1, 1], [], []>} : vector<8x32xbf16>, vector<32x32xbf16>, vector<8x32xf32> -> vector<8x32xf32>
    %168 = vector.extract_strided_slice %9 {offsets = [40, 0], sizes = [8, 32], strides = [1, 1]} : vector<64x32xf32> to vector<8x32xf32>
    %169 = arith.addf %168, %165 : vector<8x32xf32>
    %170 = arith.negf %169 : vector<8x32xf32>
    %171 = math.exp %170 : vector<8x32xf32>
    %cst_57 = arith.constant 1.000000e+00 : f32
    %172 = vector.broadcast %cst_57 : f32 to vector<8x32xf32>
    %173 = arith.addf %172, %171 : vector<8x32xf32>
    %174 = arith.divf %172, %173 : vector<8x32xf32>
    %175 = vector.extract_strided_slice %14 {offsets = [40, 0], sizes = [8, 32], strides = [1, 1]} : vector<64x32xf32> to vector<8x32xf32>
    %176 = arith.addf %175, %166 : vector<8x32xf32>
    %177 = arith.negf %176 : vector<8x32xf32>
    %178 = math.exp %177 : vector<8x32xf32>
    %cst_58 = arith.constant 1.000000e+00 : f32
    %179 = vector.broadcast %cst_58 : f32 to vector<8x32xf32>
    %180 = arith.addf %179, %178 : vector<8x32xf32>
    %181 = arith.divf %179, %180 : vector<8x32xf32>
    %182 = vector.extract_strided_slice %19 {offsets = [40, 0], sizes = [8, 32], strides = [1, 1]} : vector<64x32xf32> to vector<8x32xf32>
    %183 = arith.addf %167, %22 : vector<8x32xf32>
    %184 = arith.mulf %174, %183 : vector<8x32xf32>
    %185 = arith.addf %182, %184 : vector<8x32xf32>
    %186 = math.tanh %185 : vector<8x32xf32>
    %cst_59 = arith.constant 1.000000e+00 : f32
    %187 = vector.broadcast %cst_59 : f32 to vector<8x32xf32>
    %188 = arith.subf %187, %181 : vector<8x32xf32>
    %189 = arith.mulf %188, %186 : vector<8x32xf32>
    %190 = arith.mulf %181, %163 : vector<8x32xf32>
    %191 = arith.addf %189, %190 : vector<8x32xf32>
    %192 = arith.truncf %191 : vector<8x32xf32> to vector<8x32xbf16>
    %cst_60 = arith.constant dense<0.000000e+00> : vector<8x32xf32>
    %193 = tpu.matmul %192, %2, %cst_60 {dimension_numbers = #tpu.dot_dimension_numbers<[1], [0], [0], [1], [0, 0, 1, 1], [], []>} : vector<8x32xbf16>, vector<32x32xbf16>, vector<8x32xf32> -> vector<8x32xf32>
    %cst_61 = arith.constant dense<0.000000e+00> : vector<8x32xf32>
    %194 = tpu.matmul %192, %3, %cst_61 {dimension_numbers = #tpu.dot_dimension_numbers<[1], [0], [0], [1], [0, 0, 1, 1], [], []>} : vector<8x32xbf16>, vector<32x32xbf16>, vector<8x32xf32> -> vector<8x32xf32>
    %cst_62 = arith.constant dense<0.000000e+00> : vector<8x32xf32>
    %195 = tpu.matmul %192, %4, %cst_62 {dimension_numbers = #tpu.dot_dimension_numbers<[1], [0], [0], [1], [0, 0, 1, 1], [], []>} : vector<8x32xbf16>, vector<32x32xbf16>, vector<8x32xf32> -> vector<8x32xf32>
    %196 = vector.extract_strided_slice %9 {offsets = [48, 0], sizes = [8, 32], strides = [1, 1]} : vector<64x32xf32> to vector<8x32xf32>
    %197 = arith.addf %196, %193 : vector<8x32xf32>
    %198 = arith.negf %197 : vector<8x32xf32>
    %199 = math.exp %198 : vector<8x32xf32>
    %cst_63 = arith.constant 1.000000e+00 : f32
    %200 = vector.broadcast %cst_63 : f32 to vector<8x32xf32>
    %201 = arith.addf %200, %199 : vector<8x32xf32>
    %202 = arith.divf %200, %201 : vector<8x32xf32>
    %203 = vector.extract_strided_slice %14 {offsets = [48, 0], sizes = [8, 32], strides = [1, 1]} : vector<64x32xf32> to vector<8x32xf32>
    %204 = arith.addf %203, %194 : vector<8x32xf32>
    %205 = arith.negf %204 : vector<8x32xf32>
    %206 = math.exp %205 : vector<8x32xf32>
    %cst_64 = arith.constant 1.000000e+00 : f32
    %207 = vector.broadcast %cst_64 : f32 to vector<8x32xf32>
    %208 = arith.addf %207, %206 : vector<8x32xf32>
    %209 = arith.divf %207, %208 : vector<8x32xf32>
    %210 = vector.extract_strided_slice %19 {offsets = [48, 0], sizes = [8, 32], strides = [1, 1]} : vector<64x32xf32> to vector<8x32xf32>
    %211 = arith.addf %195, %22 : vector<8x32xf32>
    %212 = arith.mulf %202, %211 : vector<8x32xf32>
    %213 = arith.addf %210, %212 : vector<8x32xf32>
    %214 = math.tanh %213 : vector<8x32xf32>
    %cst_65 = arith.constant 1.000000e+00 : f32
    %215 = vector.broadcast %cst_65 : f32 to vector<8x32xf32>
    %216 = arith.subf %215, %209 : vector<8x32xf32>
    %217 = arith.mulf %216, %214 : vector<8x32xf32>
    %218 = arith.mulf %209, %191 : vector<8x32xf32>
    %219 = arith.addf %217, %218 : vector<8x32xf32>
    %220 = arith.truncf %219 : vector<8x32xf32> to vector<8x32xbf16>
    %cst_66 = arith.constant dense<0.000000e+00> : vector<8x32xf32>
    %221 = tpu.matmul %220, %2, %cst_66 {dimension_numbers = #tpu.dot_dimension_numbers<[1], [0], [0], [1], [0, 0, 1, 1], [], []>} : vector<8x32xbf16>, vector<32x32xbf16>, vector<8x32xf32> -> vector<8x32xf32>
    %cst_67 = arith.constant dense<0.000000e+00> : vector<8x32xf32>
    %222 = tpu.matmul %220, %3, %cst_67 {dimension_numbers = #tpu.dot_dimension_numbers<[1], [0], [0], [1], [0, 0, 1, 1], [], []>} : vector<8x32xbf16>, vector<32x32xbf16>, vector<8x32xf32> -> vector<8x32xf32>
    %cst_68 = arith.constant dense<0.000000e+00> : vector<8x32xf32>
    %223 = tpu.matmul %220, %4, %cst_68 {dimension_numbers = #tpu.dot_dimension_numbers<[1], [0], [0], [1], [0, 0, 1, 1], [], []>} : vector<8x32xbf16>, vector<32x32xbf16>, vector<8x32xf32> -> vector<8x32xf32>
    %224 = vector.extract_strided_slice %9 {offsets = [56, 0], sizes = [8, 32], strides = [1, 1]} : vector<64x32xf32> to vector<8x32xf32>
    %225 = arith.addf %224, %221 : vector<8x32xf32>
    %226 = arith.negf %225 : vector<8x32xf32>
    %227 = math.exp %226 : vector<8x32xf32>
    %cst_69 = arith.constant 1.000000e+00 : f32
    %228 = vector.broadcast %cst_69 : f32 to vector<8x32xf32>
    %229 = arith.addf %228, %227 : vector<8x32xf32>
    %230 = arith.divf %228, %229 : vector<8x32xf32>
    %231 = vector.extract_strided_slice %14 {offsets = [56, 0], sizes = [8, 32], strides = [1, 1]} : vector<64x32xf32> to vector<8x32xf32>
    %232 = arith.addf %231, %222 : vector<8x32xf32>
    %233 = arith.negf %232 : vector<8x32xf32>
    %234 = math.exp %233 : vector<8x32xf32>
    %cst_70 = arith.constant 1.000000e+00 : f32
    %235 = vector.broadcast %cst_70 : f32 to vector<8x32xf32>
    %236 = arith.addf %235, %234 : vector<8x32xf32>
    %237 = arith.divf %235, %236 : vector<8x32xf32>
    %238 = vector.extract_strided_slice %19 {offsets = [56, 0], sizes = [8, 32], strides = [1, 1]} : vector<64x32xf32> to vector<8x32xf32>
    %239 = arith.addf %223, %22 : vector<8x32xf32>
    %240 = arith.mulf %230, %239 : vector<8x32xf32>
    %241 = arith.addf %238, %240 : vector<8x32xf32>
    %242 = math.tanh %241 : vector<8x32xf32>
    %cst_71 = arith.constant 1.000000e+00 : f32
    %243 = vector.broadcast %cst_71 : f32 to vector<8x32xf32>
    %244 = arith.subf %243, %237 : vector<8x32xf32>
    %245 = arith.mulf %244, %242 : vector<8x32xf32>
    %246 = arith.mulf %237, %219 : vector<8x32xf32>
    %247 = arith.addf %245, %246 : vector<8x32xf32>
    %248 = tpu.concatenate %51, %79, %107, %135, %163, %191, %219, %247 in 0 : vector<8x32xf32>, vector<8x32xf32>, vector<8x32xf32>, vector<8x32xf32>, vector<8x32xf32>, vector<8x32xf32>, vector<8x32xf32>, vector<8x32xf32> -> vector<64x32xf32>
    %249 = arith.truncf %248 : vector<64x32xf32> to vector<64x32xbf16>
    %c0_72 = arith.constant 0 : index
    %c0_73 = arith.constant 0 : index
    %250 = vector.load %arg15[%c0_72, %c0_73] : memref<32x32xbf16, #tpu.memory_space<vmem>>, vector<32x32xbf16>
    %c0_74 = arith.constant 0 : index
    %c0_75 = arith.constant 0 : index
    %251 = vector.load %arg16[%c0_74, %c0_75] : memref<32x32xbf16, #tpu.memory_space<vmem>>, vector<32x32xbf16>
    %c0_76 = arith.constant 0 : index
    %c0_77 = arith.constant 0 : index
    %252 = vector.load %arg17[%c0_76, %c0_77] : memref<32x32xbf16, #tpu.memory_space<vmem>>, vector<32x32xbf16>
    %c0_78 = arith.constant 0 : index
    %c0_79 = arith.constant 0 : index
    %253 = vector.load %arg12[%c0_78, %c0_79] : memref<32x32xbf16, #tpu.memory_space<vmem>>, vector<32x32xbf16>
    %cst_80 = arith.constant dense<0.000000e+00> : vector<64x32xf32>
    %254 = tpu.matmul %249, %253, %cst_80 {dimension_numbers = #tpu.dot_dimension_numbers<[1], [0], [0], [1], [0, 0, 1, 1], [], []>} : vector<64x32xbf16>, vector<32x32xbf16>, vector<64x32xf32> -> vector<64x32xf32>
    %c0_81 = arith.constant 0 : index
    %c0_82 = arith.constant 0 : index
    %255 = vector.load %arg18[%c0_81, %c0_82] : memref<1x32xf32, #tpu.memory_space<vmem>>, vector<1x32xf32>
    %256 = vector.broadcast %255 : vector<1x32xf32> to vector<64x32xf32>
    %257 = arith.addf %254, %256 : vector<64x32xf32>
    %c0_83 = arith.constant 0 : index
    %c0_84 = arith.constant 0 : index
    %258 = vector.load %arg13[%c0_83, %c0_84] : memref<32x32xbf16, #tpu.memory_space<vmem>>, vector<32x32xbf16>
    %cst_85 = arith.constant dense<0.000000e+00> : vector<64x32xf32>
    %259 = tpu.matmul %249, %258, %cst_85 {dimension_numbers = #tpu.dot_dimension_numbers<[1], [0], [0], [1], [0, 0, 1, 1], [], []>} : vector<64x32xbf16>, vector<32x32xbf16>, vector<64x32xf32> -> vector<64x32xf32>
    %c0_86 = arith.constant 0 : index
    %c0_87 = arith.constant 0 : index
    %260 = vector.load %arg19[%c0_86, %c0_87] : memref<1x32xf32, #tpu.memory_space<vmem>>, vector<1x32xf32>
    %261 = vector.broadcast %260 : vector<1x32xf32> to vector<64x32xf32>
    %262 = arith.addf %259, %261 : vector<64x32xf32>
    %c0_88 = arith.constant 0 : index
    %c0_89 = arith.constant 0 : index
    %263 = vector.load %arg14[%c0_88, %c0_89] : memref<32x32xbf16, #tpu.memory_space<vmem>>, vector<32x32xbf16>
    %cst_90 = arith.constant dense<0.000000e+00> : vector<64x32xf32>
    %264 = tpu.matmul %249, %263, %cst_90 {dimension_numbers = #tpu.dot_dimension_numbers<[1], [0], [0], [1], [0, 0, 1, 1], [], []>} : vector<64x32xbf16>, vector<32x32xbf16>, vector<64x32xf32> -> vector<64x32xf32>
    %c0_91 = arith.constant 0 : index
    %c0_92 = arith.constant 0 : index
    %265 = vector.load %arg20[%c0_91, %c0_92] : memref<1x32xf32, #tpu.memory_space<vmem>>, vector<1x32xf32>
    %266 = vector.broadcast %265 : vector<1x32xf32> to vector<64x32xf32>
    %267 = arith.addf %264, %266 : vector<64x32xf32>
    %c0_93 = arith.constant 0 : index
    %c0_94 = arith.constant 0 : index
    %268 = vector.load %arg21[%c0_93, %c0_94] : memref<1x32xf32, #tpu.memory_space<vmem>>, vector<1x32xf32>
    %269 = vector.shape_cast %268 : vector<1x32xf32> to vector<1x32xf32>
    %270 = vector.broadcast %269 : vector<1x32xf32> to vector<8x32xf32>
    %cst_95 = arith.constant 0.000000e+00 : f32
    %271 = vector.broadcast %cst_95 : f32 to vector<8x32xf32>
    %272 = arith.truncf %271 : vector<8x32xf32> to vector<8x32xbf16>
    %cst_96 = arith.constant dense<0.000000e+00> : vector<8x32xf32>
    %273 = tpu.matmul %272, %250, %cst_96 {dimension_numbers = #tpu.dot_dimension_numbers<[1], [0], [0], [1], [0, 0, 1, 1], [], []>} : vector<8x32xbf16>, vector<32x32xbf16>, vector<8x32xf32> -> vector<8x32xf32>
    %cst_97 = arith.constant dense<0.000000e+00> : vector<8x32xf32>
    %274 = tpu.matmul %272, %251, %cst_97 {dimension_numbers = #tpu.dot_dimension_numbers<[1], [0], [0], [1], [0, 0, 1, 1], [], []>} : vector<8x32xbf16>, vector<32x32xbf16>, vector<8x32xf32> -> vector<8x32xf32>
    %cst_98 = arith.constant dense<0.000000e+00> : vector<8x32xf32>
    %275 = tpu.matmul %272, %252, %cst_98 {dimension_numbers = #tpu.dot_dimension_numbers<[1], [0], [0], [1], [0, 0, 1, 1], [], []>} : vector<8x32xbf16>, vector<32x32xbf16>, vector<8x32xf32> -> vector<8x32xf32>
    %276 = vector.extract_strided_slice %257 {offsets = [0, 0], sizes = [8, 32], strides = [1, 1]} : vector<64x32xf32> to vector<8x32xf32>
    %277 = arith.addf %276, %273 : vector<8x32xf32>
    %278 = arith.negf %277 : vector<8x32xf32>
    %279 = math.exp %278 : vector<8x32xf32>
    %cst_99 = arith.constant 1.000000e+00 : f32
    %280 = vector.broadcast %cst_99 : f32 to vector<8x32xf32>
    %281 = arith.addf %280, %279 : vector<8x32xf32>
    %282 = arith.divf %280, %281 : vector<8x32xf32>
    %283 = vector.extract_strided_slice %262 {offsets = [0, 0], sizes = [8, 32], strides = [1, 1]} : vector<64x32xf32> to vector<8x32xf32>
    %284 = arith.addf %283, %274 : vector<8x32xf32>
    %285 = arith.negf %284 : vector<8x32xf32>
    %286 = math.exp %285 : vector<8x32xf32>
    %cst_100 = arith.constant 1.000000e+00 : f32
    %287 = vector.broadcast %cst_100 : f32 to vector<8x32xf32>
    %288 = arith.addf %287, %286 : vector<8x32xf32>
    %289 = arith.divf %287, %288 : vector<8x32xf32>
    %290 = vector.extract_strided_slice %267 {offsets = [0, 0], sizes = [8, 32], strides = [1, 1]} : vector<64x32xf32> to vector<8x32xf32>
    %291 = arith.addf %275, %270 : vector<8x32xf32>
    %292 = arith.mulf %282, %291 : vector<8x32xf32>
    %293 = arith.addf %290, %292 : vector<8x32xf32>
    %294 = math.tanh %293 : vector<8x32xf32>
    %cst_101 = arith.constant 1.000000e+00 : f32
    %295 = vector.broadcast %cst_101 : f32 to vector<8x32xf32>
    %296 = arith.subf %295, %289 : vector<8x32xf32>
    %297 = arith.mulf %296, %294 : vector<8x32xf32>
    %298 = arith.mulf %289, %271 : vector<8x32xf32>
    %299 = arith.addf %297, %298 : vector<8x32xf32>
    %300 = arith.truncf %299 : vector<8x32xf32> to vector<8x32xbf16>
    %cst_102 = arith.constant dense<0.000000e+00> : vector<8x32xf32>
    %301 = tpu.matmul %300, %250, %cst_102 {dimension_numbers = #tpu.dot_dimension_numbers<[1], [0], [0], [1], [0, 0, 1, 1], [], []>} : vector<8x32xbf16>, vector<32x32xbf16>, vector<8x32xf32> -> vector<8x32xf32>
    %cst_103 = arith.constant dense<0.000000e+00> : vector<8x32xf32>
    %302 = tpu.matmul %300, %251, %cst_103 {dimension_numbers = #tpu.dot_dimension_numbers<[1], [0], [0], [1], [0, 0, 1, 1], [], []>} : vector<8x32xbf16>, vector<32x32xbf16>, vector<8x32xf32> -> vector<8x32xf32>
    %cst_104 = arith.constant dense<0.000000e+00> : vector<8x32xf32>
    %303 = tpu.matmul %300, %252, %cst_104 {dimension_numbers = #tpu.dot_dimension_numbers<[1], [0], [0], [1], [0, 0, 1, 1], [], []>} : vector<8x32xbf16>, vector<32x32xbf16>, vector<8x32xf32> -> vector<8x32xf32>
    %304 = vector.extract_strided_slice %257 {offsets = [8, 0], sizes = [8, 32], strides = [1, 1]} : vector<64x32xf32> to vector<8x32xf32>
    %305 = arith.addf %304, %301 : vector<8x32xf32>
    %306 = arith.negf %305 : vector<8x32xf32>
    %307 = math.exp %306 : vector<8x32xf32>
    %cst_105 = arith.constant 1.000000e+00 : f32
    %308 = vector.broadcast %cst_105 : f32 to vector<8x32xf32>
    %309 = arith.addf %308, %307 : vector<8x32xf32>
    %310 = arith.divf %308, %309 : vector<8x32xf32>
    %311 = vector.extract_strided_slice %262 {offsets = [8, 0], sizes = [8, 32], strides = [1, 1]} : vector<64x32xf32> to vector<8x32xf32>
    %312 = arith.addf %311, %302 : vector<8x32xf32>
    %313 = arith.negf %312 : vector<8x32xf32>
    %314 = math.exp %313 : vector<8x32xf32>
    %cst_106 = arith.constant 1.000000e+00 : f32
    %315 = vector.broadcast %cst_106 : f32 to vector<8x32xf32>
    %316 = arith.addf %315, %314 : vector<8x32xf32>
    %317 = arith.divf %315, %316 : vector<8x32xf32>
    %318 = vector.extract_strided_slice %267 {offsets = [8, 0], sizes = [8, 32], strides = [1, 1]} : vector<64x32xf32> to vector<8x32xf32>
    %319 = arith.addf %303, %270 : vector<8x32xf32>
    %320 = arith.mulf %310, %319 : vector<8x32xf32>
    %321 = arith.addf %318, %320 : vector<8x32xf32>
    %322 = math.tanh %321 : vector<8x32xf32>
    %cst_107 = arith.constant 1.000000e+00 : f32
    %323 = vector.broadcast %cst_107 : f32 to vector<8x32xf32>
    %324 = arith.subf %323, %317 : vector<8x32xf32>
    %325 = arith.mulf %324, %322 : vector<8x32xf32>
    %326 = arith.mulf %317, %299 : vector<8x32xf32>
    %327 = arith.addf %325, %326 : vector<8x32xf32>
    %328 = arith.truncf %327 : vector<8x32xf32> to vector<8x32xbf16>
    %cst_108 = arith.constant dense<0.000000e+00> : vector<8x32xf32>
    %329 = tpu.matmul %328, %250, %cst_108 {dimension_numbers = #tpu.dot_dimension_numbers<[1], [0], [0], [1], [0, 0, 1, 1], [], []>} : vector<8x32xbf16>, vector<32x32xbf16>, vector<8x32xf32> -> vector<8x32xf32>
    %cst_109 = arith.constant dense<0.000000e+00> : vector<8x32xf32>
    %330 = tpu.matmul %328, %251, %cst_109 {dimension_numbers = #tpu.dot_dimension_numbers<[1], [0], [0], [1], [0, 0, 1, 1], [], []>} : vector<8x32xbf16>, vector<32x32xbf16>, vector<8x32xf32> -> vector<8x32xf32>
    %cst_110 = arith.constant dense<0.000000e+00> : vector<8x32xf32>
    %331 = tpu.matmul %328, %252, %cst_110 {dimension_numbers = #tpu.dot_dimension_numbers<[1], [0], [0], [1], [0, 0, 1, 1], [], []>} : vector<8x32xbf16>, vector<32x32xbf16>, vector<8x32xf32> -> vector<8x32xf32>
    %332 = vector.extract_strided_slice %257 {offsets = [16, 0], sizes = [8, 32], strides = [1, 1]} : vector<64x32xf32> to vector<8x32xf32>
    %333 = arith.addf %332, %329 : vector<8x32xf32>
    %334 = arith.negf %333 : vector<8x32xf32>
    %335 = math.exp %334 : vector<8x32xf32>
    %cst_111 = arith.constant 1.000000e+00 : f32
    %336 = vector.broadcast %cst_111 : f32 to vector<8x32xf32>
    %337 = arith.addf %336, %335 : vector<8x32xf32>
    %338 = arith.divf %336, %337 : vector<8x32xf32>
    %339 = vector.extract_strided_slice %262 {offsets = [16, 0], sizes = [8, 32], strides = [1, 1]} : vector<64x32xf32> to vector<8x32xf32>
    %340 = arith.addf %339, %330 : vector<8x32xf32>
    %341 = arith.negf %340 : vector<8x32xf32>
    %342 = math.exp %341 : vector<8x32xf32>
    %cst_112 = arith.constant 1.000000e+00 : f32
    %343 = vector.broadcast %cst_112 : f32 to vector<8x32xf32>
    %344 = arith.addf %343, %342 : vector<8x32xf32>
    %345 = arith.divf %343, %344 : vector<8x32xf32>
    %346 = vector.extract_strided_slice %267 {offsets = [16, 0], sizes = [8, 32], strides = [1, 1]} : vector<64x32xf32> to vector<8x32xf32>
    %347 = arith.addf %331, %270 : vector<8x32xf32>
    %348 = arith.mulf %338, %347 : vector<8x32xf32>
    %349 = arith.addf %346, %348 : vector<8x32xf32>
    %350 = math.tanh %349 : vector<8x32xf32>
    %cst_113 = arith.constant 1.000000e+00 : f32
    %351 = vector.broadcast %cst_113 : f32 to vector<8x32xf32>
    %352 = arith.subf %351, %345 : vector<8x32xf32>
    %353 = arith.mulf %352, %350 : vector<8x32xf32>
    %354 = arith.mulf %345, %327 : vector<8x32xf32>
    %355 = arith.addf %353, %354 : vector<8x32xf32>
    %356 = arith.truncf %355 : vector<8x32xf32> to vector<8x32xbf16>
    %cst_114 = arith.constant dense<0.000000e+00> : vector<8x32xf32>
    %357 = tpu.matmul %356, %250, %cst_114 {dimension_numbers = #tpu.dot_dimension_numbers<[1], [0], [0], [1], [0, 0, 1, 1], [], []>} : vector<8x32xbf16>, vector<32x32xbf16>, vector<8x32xf32> -> vector<8x32xf32>
    %cst_115 = arith.constant dense<0.000000e+00> : vector<8x32xf32>
    %358 = tpu.matmul %356, %251, %cst_115 {dimension_numbers = #tpu.dot_dimension_numbers<[1], [0], [0], [1], [0, 0, 1, 1], [], []>} : vector<8x32xbf16>, vector<32x32xbf16>, vector<8x32xf32> -> vector<8x32xf32>
    %cst_116 = arith.constant dense<0.000000e+00> : vector<8x32xf32>
    %359 = tpu.matmul %356, %252, %cst_116 {dimension_numbers = #tpu.dot_dimension_numbers<[1], [0], [0], [1], [0, 0, 1, 1], [], []>} : vector<8x32xbf16>, vector<32x32xbf16>, vector<8x32xf32> -> vector<8x32xf32>
    %360 = vector.extract_strided_slice %257 {offsets = [24, 0], sizes = [8, 32], strides = [1, 1]} : vector<64x32xf32> to vector<8x32xf32>
    %361 = arith.addf %360, %357 : vector<8x32xf32>
    %362 = arith.negf %361 : vector<8x32xf32>
    %363 = math.exp %362 : vector<8x32xf32>
    %cst_117 = arith.constant 1.000000e+00 : f32
    %364 = vector.broadcast %cst_117 : f32 to vector<8x32xf32>
    %365 = arith.addf %364, %363 : vector<8x32xf32>
    %366 = arith.divf %364, %365 : vector<8x32xf32>
    %367 = vector.extract_strided_slice %262 {offsets = [24, 0], sizes = [8, 32], strides = [1, 1]} : vector<64x32xf32> to vector<8x32xf32>
    %368 = arith.addf %367, %358 : vector<8x32xf32>
    %369 = arith.negf %368 : vector<8x32xf32>
    %370 = math.exp %369 : vector<8x32xf32>
    %cst_118 = arith.constant 1.000000e+00 : f32
    %371 = vector.broadcast %cst_118 : f32 to vector<8x32xf32>
    %372 = arith.addf %371, %370 : vector<8x32xf32>
    %373 = arith.divf %371, %372 : vector<8x32xf32>
    %374 = vector.extract_strided_slice %267 {offsets = [24, 0], sizes = [8, 32], strides = [1, 1]} : vector<64x32xf32> to vector<8x32xf32>
    %375 = arith.addf %359, %270 : vector<8x32xf32>
    %376 = arith.mulf %366, %375 : vector<8x32xf32>
    %377 = arith.addf %374, %376 : vector<8x32xf32>
    %378 = math.tanh %377 : vector<8x32xf32>
    %cst_119 = arith.constant 1.000000e+00 : f32
    %379 = vector.broadcast %cst_119 : f32 to vector<8x32xf32>
    %380 = arith.subf %379, %373 : vector<8x32xf32>
    %381 = arith.mulf %380, %378 : vector<8x32xf32>
    %382 = arith.mulf %373, %355 : vector<8x32xf32>
    %383 = arith.addf %381, %382 : vector<8x32xf32>
    %384 = arith.truncf %383 : vector<8x32xf32> to vector<8x32xbf16>
    %cst_120 = arith.constant dense<0.000000e+00> : vector<8x32xf32>
    %385 = tpu.matmul %384, %250, %cst_120 {dimension_numbers = #tpu.dot_dimension_numbers<[1], [0], [0], [1], [0, 0, 1, 1], [], []>} : vector<8x32xbf16>, vector<32x32xbf16>, vector<8x32xf32> -> vector<8x32xf32>
    %cst_121 = arith.constant dense<0.000000e+00> : vector<8x32xf32>
    %386 = tpu.matmul %384, %251, %cst_121 {dimension_numbers = #tpu.dot_dimension_numbers<[1], [0], [0], [1], [0, 0, 1, 1], [], []>} : vector<8x32xbf16>, vector<32x32xbf16>, vector<8x32xf32> -> vector<8x32xf32>
    %cst_122 = arith.constant dense<0.000000e+00> : vector<8x32xf32>
    %387 = tpu.matmul %384, %252, %cst_122 {dimension_numbers = #tpu.dot_dimension_numbers<[1], [0], [0], [1], [0, 0, 1, 1], [], []>} : vector<8x32xbf16>, vector<32x32xbf16>, vector<8x32xf32> -> vector<8x32xf32>
    %388 = vector.extract_strided_slice %257 {offsets = [32, 0], sizes = [8, 32], strides = [1, 1]} : vector<64x32xf32> to vector<8x32xf32>
    %389 = arith.addf %388, %385 : vector<8x32xf32>
    %390 = arith.negf %389 : vector<8x32xf32>
    %391 = math.exp %390 : vector<8x32xf32>
    %cst_123 = arith.constant 1.000000e+00 : f32
    %392 = vector.broadcast %cst_123 : f32 to vector<8x32xf32>
    %393 = arith.addf %392, %391 : vector<8x32xf32>
    %394 = arith.divf %392, %393 : vector<8x32xf32>
    %395 = vector.extract_strided_slice %262 {offsets = [32, 0], sizes = [8, 32], strides = [1, 1]} : vector<64x32xf32> to vector<8x32xf32>
    %396 = arith.addf %395, %386 : vector<8x32xf32>
    %397 = arith.negf %396 : vector<8x32xf32>
    %398 = math.exp %397 : vector<8x32xf32>
    %cst_124 = arith.constant 1.000000e+00 : f32
    %399 = vector.broadcast %cst_124 : f32 to vector<8x32xf32>
    %400 = arith.addf %399, %398 : vector<8x32xf32>
    %401 = arith.divf %399, %400 : vector<8x32xf32>
    %402 = vector.extract_strided_slice %267 {offsets = [32, 0], sizes = [8, 32], strides = [1, 1]} : vector<64x32xf32> to vector<8x32xf32>
    %403 = arith.addf %387, %270 : vector<8x32xf32>
    %404 = arith.mulf %394, %403 : vector<8x32xf32>
    %405 = arith.addf %402, %404 : vector<8x32xf32>
    %406 = math.tanh %405 : vector<8x32xf32>
    %cst_125 = arith.constant 1.000000e+00 : f32
    %407 = vector.broadcast %cst_125 : f32 to vector<8x32xf32>
    %408 = arith.subf %407, %401 : vector<8x32xf32>
    %409 = arith.mulf %408, %406 : vector<8x32xf32>
    %410 = arith.mulf %401, %383 : vector<8x32xf32>
    %411 = arith.addf %409, %410 : vector<8x32xf32>
    %412 = arith.truncf %411 : vector<8x32xf32> to vector<8x32xbf16>
    %cst_126 = arith.constant dense<0.000000e+00> : vector<8x32xf32>
    %413 = tpu.matmul %412, %250, %cst_126 {dimension_numbers = #tpu.dot_dimension_numbers<[1], [0], [0], [1], [0, 0, 1, 1], [], []>} : vector<8x32xbf16>, vector<32x32xbf16>, vector<8x32xf32> -> vector<8x32xf32>
    %cst_127 = arith.constant dense<0.000000e+00> : vector<8x32xf32>
    %414 = tpu.matmul %412, %251, %cst_127 {dimension_numbers = #tpu.dot_dimension_numbers<[1], [0], [0], [1], [0, 0, 1, 1], [], []>} : vector<8x32xbf16>, vector<32x32xbf16>, vector<8x32xf32> -> vector<8x32xf32>
    %cst_128 = arith.constant dense<0.000000e+00> : vector<8x32xf32>
    %415 = tpu.matmul %412, %252, %cst_128 {dimension_numbers = #tpu.dot_dimension_numbers<[1], [0], [0], [1], [0, 0, 1, 1], [], []>} : vector<8x32xbf16>, vector<32x32xbf16>, vector<8x32xf32> -> vector<8x32xf32>
    %416 = vector.extract_strided_slice %257 {offsets = [40, 0], sizes = [8, 32], strides = [1, 1]} : vector<64x32xf32> to vector<8x32xf32>
    %417 = arith.addf %416, %413 : vector<8x32xf32>
    %418 = arith.negf %417 : vector<8x32xf32>
    %419 = math.exp %418 : vector<8x32xf32>
    %cst_129 = arith.constant 1.000000e+00 : f32
    %420 = vector.broadcast %cst_129 : f32 to vector<8x32xf32>
    %421 = arith.addf %420, %419 : vector<8x32xf32>
    %422 = arith.divf %420, %421 : vector<8x32xf32>
    %423 = vector.extract_strided_slice %262 {offsets = [40, 0], sizes = [8, 32], strides = [1, 1]} : vector<64x32xf32> to vector<8x32xf32>
    %424 = arith.addf %423, %414 : vector<8x32xf32>
    %425 = arith.negf %424 : vector<8x32xf32>
    %426 = math.exp %425 : vector<8x32xf32>
    %cst_130 = arith.constant 1.000000e+00 : f32
    %427 = vector.broadcast %cst_130 : f32 to vector<8x32xf32>
    %428 = arith.addf %427, %426 : vector<8x32xf32>
    %429 = arith.divf %427, %428 : vector<8x32xf32>
    %430 = vector.extract_strided_slice %267 {offsets = [40, 0], sizes = [8, 32], strides = [1, 1]} : vector<64x32xf32> to vector<8x32xf32>
    %431 = arith.addf %415, %270 : vector<8x32xf32>
    %432 = arith.mulf %422, %431 : vector<8x32xf32>
    %433 = arith.addf %430, %432 : vector<8x32xf32>
    %434 = math.tanh %433 : vector<8x32xf32>
    %cst_131 = arith.constant 1.000000e+00 : f32
    %435 = vector.broadcast %cst_131 : f32 to vector<8x32xf32>
    %436 = arith.subf %435, %429 : vector<8x32xf32>
    %437 = arith.mulf %436, %434 : vector<8x32xf32>
    %438 = arith.mulf %429, %411 : vector<8x32xf32>
    %439 = arith.addf %437, %438 : vector<8x32xf32>
    %440 = arith.truncf %439 : vector<8x32xf32> to vector<8x32xbf16>
    %cst_132 = arith.constant dense<0.000000e+00> : vector<8x32xf32>
    %441 = tpu.matmul %440, %250, %cst_132 {dimension_numbers = #tpu.dot_dimension_numbers<[1], [0], [0], [1], [0, 0, 1, 1], [], []>} : vector<8x32xbf16>, vector<32x32xbf16>, vector<8x32xf32> -> vector<8x32xf32>
    %cst_133 = arith.constant dense<0.000000e+00> : vector<8x32xf32>
    %442 = tpu.matmul %440, %251, %cst_133 {dimension_numbers = #tpu.dot_dimension_numbers<[1], [0], [0], [1], [0, 0, 1, 1], [], []>} : vector<8x32xbf16>, vector<32x32xbf16>, vector<8x32xf32> -> vector<8x32xf32>
    %cst_134 = arith.constant dense<0.000000e+00> : vector<8x32xf32>
    %443 = tpu.matmul %440, %252, %cst_134 {dimension_numbers = #tpu.dot_dimension_numbers<[1], [0], [0], [1], [0, 0, 1, 1], [], []>} : vector<8x32xbf16>, vector<32x32xbf16>, vector<8x32xf32> -> vector<8x32xf32>
    %444 = vector.extract_strided_slice %257 {offsets = [48, 0], sizes = [8, 32], strides = [1, 1]} : vector<64x32xf32> to vector<8x32xf32>
    %445 = arith.addf %444, %441 : vector<8x32xf32>
    %446 = arith.negf %445 : vector<8x32xf32>
    %447 = math.exp %446 : vector<8x32xf32>
    %cst_135 = arith.constant 1.000000e+00 : f32
    %448 = vector.broadcast %cst_135 : f32 to vector<8x32xf32>
    %449 = arith.addf %448, %447 : vector<8x32xf32>
    %450 = arith.divf %448, %449 : vector<8x32xf32>
    %451 = vector.extract_strided_slice %262 {offsets = [48, 0], sizes = [8, 32], strides = [1, 1]} : vector<64x32xf32> to vector<8x32xf32>
    %452 = arith.addf %451, %442 : vector<8x32xf32>
    %453 = arith.negf %452 : vector<8x32xf32>
    %454 = math.exp %453 : vector<8x32xf32>
    %cst_136 = arith.constant 1.000000e+00 : f32
    %455 = vector.broadcast %cst_136 : f32 to vector<8x32xf32>
    %456 = arith.addf %455, %454 : vector<8x32xf32>
    %457 = arith.divf %455, %456 : vector<8x32xf32>
    %458 = vector.extract_strided_slice %267 {offsets = [48, 0], sizes = [8, 32], strides = [1, 1]} : vector<64x32xf32> to vector<8x32xf32>
    %459 = arith.addf %443, %270 : vector<8x32xf32>
    %460 = arith.mulf %450, %459 : vector<8x32xf32>
    %461 = arith.addf %458, %460 : vector<8x32xf32>
    %462 = math.tanh %461 : vector<8x32xf32>
    %cst_137 = arith.constant 1.000000e+00 : f32
    %463 = vector.broadcast %cst_137 : f32 to vector<8x32xf32>
    %464 = arith.subf %463, %457 : vector<8x32xf32>
    %465 = arith.mulf %464, %462 : vector<8x32xf32>
    %466 = arith.mulf %457, %439 : vector<8x32xf32>
    %467 = arith.addf %465, %466 : vector<8x32xf32>
    %468 = arith.truncf %467 : vector<8x32xf32> to vector<8x32xbf16>
    %cst_138 = arith.constant dense<0.000000e+00> : vector<8x32xf32>
    %469 = tpu.matmul %468, %250, %cst_138 {dimension_numbers = #tpu.dot_dimension_numbers<[1], [0], [0], [1], [0, 0, 1, 1], [], []>} : vector<8x32xbf16>, vector<32x32xbf16>, vector<8x32xf32> -> vector<8x32xf32>
    %cst_139 = arith.constant dense<0.000000e+00> : vector<8x32xf32>
    %470 = tpu.matmul %468, %251, %cst_139 {dimension_numbers = #tpu.dot_dimension_numbers<[1], [0], [0], [1], [0, 0, 1, 1], [], []>} : vector<8x32xbf16>, vector<32x32xbf16>, vector<8x32xf32> -> vector<8x32xf32>
    %cst_140 = arith.constant dense<0.000000e+00> : vector<8x32xf32>
    %471 = tpu.matmul %468, %252, %cst_140 {dimension_numbers = #tpu.dot_dimension_numbers<[1], [0], [0], [1], [0, 0, 1, 1], [], []>} : vector<8x32xbf16>, vector<32x32xbf16>, vector<8x32xf32> -> vector<8x32xf32>
    %472 = vector.extract_strided_slice %257 {offsets = [56, 0], sizes = [8, 32], strides = [1, 1]} : vector<64x32xf32> to vector<8x32xf32>
    %473 = arith.addf %472, %469 : vector<8x32xf32>
    %474 = arith.negf %473 : vector<8x32xf32>
    %475 = math.exp %474 : vector<8x32xf32>
    %cst_141 = arith.constant 1.000000e+00 : f32
    %476 = vector.broadcast %cst_141 : f32 to vector<8x32xf32>
    %477 = arith.addf %476, %475 : vector<8x32xf32>
    %478 = arith.divf %476, %477 : vector<8x32xf32>
    %479 = vector.extract_strided_slice %262 {offsets = [56, 0], sizes = [8, 32], strides = [1, 1]} : vector<64x32xf32> to vector<8x32xf32>
    %480 = arith.addf %479, %470 : vector<8x32xf32>
    %481 = arith.negf %480 : vector<8x32xf32>
    %482 = math.exp %481 : vector<8x32xf32>
    %cst_142 = arith.constant 1.000000e+00 : f32
    %483 = vector.broadcast %cst_142 : f32 to vector<8x32xf32>
    %484 = arith.addf %483, %482 : vector<8x32xf32>
    %485 = arith.divf %483, %484 : vector<8x32xf32>
    %486 = vector.extract_strided_slice %267 {offsets = [56, 0], sizes = [8, 32], strides = [1, 1]} : vector<64x32xf32> to vector<8x32xf32>
    %487 = arith.addf %471, %270 : vector<8x32xf32>
    %488 = arith.mulf %478, %487 : vector<8x32xf32>
    %489 = arith.addf %486, %488 : vector<8x32xf32>
    %490 = math.tanh %489 : vector<8x32xf32>
    %cst_143 = arith.constant 1.000000e+00 : f32
    %491 = vector.broadcast %cst_143 : f32 to vector<8x32xf32>
    %492 = arith.subf %491, %485 : vector<8x32xf32>
    %493 = arith.mulf %492, %490 : vector<8x32xf32>
    %494 = arith.mulf %485, %467 : vector<8x32xf32>
    %495 = arith.addf %493, %494 : vector<8x32xf32>
    %496 = tpu.concatenate %299, %327, %355, %383, %411, %439, %467, %495 in 0 : vector<8x32xf32>, vector<8x32xf32>, vector<8x32xf32>, vector<8x32xf32>, vector<8x32xf32>, vector<8x32xf32>, vector<8x32xf32>, vector<8x32xf32> -> vector<64x32xf32>
    %497 = arith.truncf %496 : vector<64x32xf32> to vector<64x32xbf16>
    %c0_144 = arith.constant 0 : index
    %c0_145 = arith.constant 0 : index
    %498 = vector.load %arg22[%c0_144, %c0_145] : memref<32x8xbf16, #tpu.memory_space<vmem>>, vector<32x8xbf16>
    %cst_146 = arith.constant dense<0.000000e+00> : vector<64x8xf32>
    %499 = tpu.matmul %497, %498, %cst_146 {dimension_numbers = #tpu.dot_dimension_numbers<[1], [0], [0], [1], [0, 0, 1, 1], [], []>} : vector<64x32xbf16>, vector<32x8xbf16>, vector<64x8xf32> -> vector<64x8xf32>
    %c0_147 = arith.constant 0 : index
    %c0_148 = arith.constant 0 : index
    %500 = vector.load %arg23[%c0_147, %c0_148] : memref<1x8xf32, #tpu.memory_space<vmem>>, vector<1x8xf32>
    %501 = vector.broadcast %500 : vector<1x8xf32> to vector<64x8xf32>
    %502 = arith.addf %499, %501 : vector<64x8xf32>
    %c0_149 = arith.constant 0 : index
    %c0_150 = arith.constant 0 : index
    %503 = vector.load %arg24[%c0_149, %c0_150] : memref<1x8xf32, #tpu.memory_space<vmem>>, vector<1x8xf32>
    %504 = vector.broadcast %503 : vector<1x8xf32> to vector<64x8xf32>
    %505 = arith.mulf %502, %504 : vector<64x8xf32>
    %cst_151 = arith.constant dense<0.000000e+00> : vector<64xf32>
    %506 = vector.multi_reduction <add>, %505, %cst_151 [1] : vector<64x8xf32> to vector<64xf32>
    %507 = vector.shape_cast %506 : vector<64xf32> to vector<64x1xf32>
    %c0_152 = arith.constant 0 : index
    %c0_153 = arith.constant 0 : index
    %508 = vector.load %arg25[%c0_152, %c0_153] : memref<1x1xf32, #tpu.memory_space<vmem>>, vector<1x1xf32>
    %509 = vector.broadcast %508 : vector<1x1xf32> to vector<64x1xf32>
    %510 = arith.addf %507, %509 : vector<64x1xf32>
    %c0_154 = arith.constant 0 : index
    %c0_155 = arith.constant 0 : index
    %511 = vector.load %arg26[%c0_154, %c0_155] : memref<1x8xf32, #tpu.memory_space<vmem>>, vector<1x8xf32>
    %512 = vector.broadcast %510 : vector<64x1xf32> to vector<64x8xf32>
    %513 = vector.broadcast %511 : vector<1x8xf32> to vector<64x8xf32>
    %514 = arith.mulf %512, %513 : vector<64x8xf32>
    %c0_156 = arith.constant 0 : index
    %c0_157 = arith.constant 0 : index
    %515 = vector.load %arg27[%c0_156, %c0_157] : memref<1x8xf32, #tpu.memory_space<vmem>>, vector<1x8xf32>
    %516 = vector.broadcast %515 : vector<1x8xf32> to vector<64x8xf32>
    %517 = arith.addf %514, %516 : vector<64x8xf32>
    %518 = arith.truncf %517 : vector<64x8xf32> to vector<64x8xbf16>
    %c0_158 = arith.constant 0 : index
    %c0_159 = arith.constant 0 : index
    %519 = vector.load %arg28[%c0_158, %c0_159] : memref<8x32xbf16, #tpu.memory_space<vmem>>, vector<8x32xbf16>
    %cst_160 = arith.constant dense<0.000000e+00> : vector<64x32xf32>
    %520 = tpu.matmul %518, %519, %cst_160 {dimension_numbers = #tpu.dot_dimension_numbers<[1], [0], [0], [1], [0, 0, 1, 1], [], []>} : vector<64x8xbf16>, vector<8x32xbf16>, vector<64x32xf32> -> vector<64x32xf32>
    %c0_161 = arith.constant 0 : index
    %c0_162 = arith.constant 0 : index
    %521 = vector.load %arg29[%c0_161, %c0_162] : memref<1x32xf32, #tpu.memory_space<vmem>>, vector<1x32xf32>
    %522 = vector.broadcast %521 : vector<1x32xf32> to vector<64x32xf32>
    %523 = arith.addf %520, %522 : vector<64x32xf32>
    %c0_163 = arith.constant 0 : index
    %c0_164 = arith.constant 0 : index
    %524 = vector.load %arg32[%c0_163, %c0_164] : memref<64x32xf32, #tpu.memory_space<vmem>>, vector<64x32xf32>
    tpu.vector_store %arg32[%c0_163, %c0_164], %523 {strides = array<i32>} : memref<64x32xf32, #tpu.memory_space<vmem>>, vector<64x32xf32>,
    %525 = arith.subf %523, %0 : vector<64x32xf32>
    %526 = arith.mulf %525, %525 : vector<64x32xf32>
    %cst_165 = arith.constant dense<0.000000e+00> : vector<64xf32>
    %527 = vector.multi_reduction <add>, %526, %cst_165 [1] : vector<64x32xf32> to vector<64xf32>
    %528 = vector.shape_cast %527 : vector<64xf32> to vector<64x1xf32>
    %cst_166 = arith.constant 3.200000e+01 : f32
    %529 = vector.broadcast %cst_166 : f32 to vector<64x1xf32>
    %530 = arith.divf %528, %529 : vector<64x1xf32>
    %c0_167 = arith.constant 0 : index
    %c0_168 = arith.constant 0 : index
    %531 = vector.load %arg31[%c0_167, %c0_168] : memref<64x1xf32, #tpu.memory_space<vmem>>, vector<64x1xf32>
    tpu.vector_store %arg31[%c0_167, %c0_168], %530 {strides = array<i32>} : memref<64x1xf32, #tpu.memory_space<vmem>>, vector<64x1xf32>,
    %c0_169 = arith.constant 0 : index
    %c0_170 = arith.constant 0 : index
    %532 = vector.load %arg1[%c0_169, %c0_170] : memref<64x1xf32, #tpu.memory_space<vmem>>, vector<64x1xf32>
    %533 = arith.mulf %530, %532 : vector<64x1xf32>
    %534 = vector.shape_cast %533 : vector<64x1xf32> to vector<1x64x1xf32>
    %cst_171 = arith.constant dense<0.000000e+00> : vector<1xf32>
    %535 = vector.multi_reduction <add>, %534, %cst_171 [1, 2] : vector<1x64x1xf32> to vector<1xf32>
    %536 = vector.shape_cast %535 : vector<1xf32> to vector<1x1x1xf32>
    %537 = vector.extract %536[0, 0, 0] : f32 from vector<1x1x1xf32>
    %cst_172 = arith.constant 6.250000e-02 : f32
    %538 = arith.mulf %537, %cst_172 : f32
    %c0_173 = arith.constant 0 : index
    %539 = memref.load %arg30[%c0_173] : memref<1xf32, #tpu.memory_space<smem>>
    memref.store %538, %arg30[%c0_173] : memref<1xf32, #tpu.memory_space<smem>>
    return
  }
}

</mosaic_0001>

<llo_original>
// kernel: tile.8
$region0: #{tile.8}
  #allocation0 [shape = 's32[1]{0}', space=sflag, size = 0x4, scoped, tag = 'scoped memory for tile.8']
  %s0 = inlined_call_operand.vmem [shape: f32[8], index: 0, kind: input, shape index: {}]
  %s1 = inlined_call_operand.vmem [shape: f32[8,8], index: 1, kind: output, shape index: {}]
  // Predicated region
  $region2: #{tile.8} parent=0 // pred_check
    _
  $region3: #{tile.8} parent=0 // pred_check_branch
    %3 = sbr.rel (0) target = $region5
  $region4: #{tile.8} parent=0 // pred_region
    _
  $region5: #{tile.8} parent=0 // pred_fallthru
    _
  %v4 = vld [vmem:[%s0] ss:$0 sm:$0xff]
  %5 = vst [vmem:[%s1] sm:$0xff] %v4

// kernel: tile.0
$region0: #{tile.0}
  %s0 = inlined_call_operand.vmem [shape: f32[8,8], index: 0, kind: input, shape index: {}]
  %s1 = inlined_call_operand.vmem [shape: f32[64,1], index: 1, kind: output, shape index: {}]
  %v2 = vld [vmem:[%s0] sm:$0xff]
  %vm3 = vcmask 7168
  %4 = vst.msk [vmem:[%s1] ss:$8 sm:$0xf] %vm3, %v2
  %5 = vst.msk [vmem:[%s1] ss:$8 sm:$0xf0] %vm3, %v2
  %v6 = vld [vmem:[%s0] sm:$0xff]
  %7 = vrot.lane.b32.xlu0 %v6, 127
  %v8 = vpop.permute.xlu0 %7
  %vm9 = vcmask 7168
  %s10 = scalar_lea.vmem %s1, 1
  %11 = vst.msk [vmem:[%s10] ss:$8 sm:$0xf] %vm9, %v8
  %s12 = scalar_lea.vmem %s1, 1
  %13 = vst.msk [vmem:[%s12] ss:$8 sm:$0xf0] %vm9, %v8
  %v14 = vld [vmem:[%s0] sm:$0xff]
  %15 = vrot.lane.b32.xlu0 %v14, 126
  %v16 = vpop.permute.xlu0 %15
  %vm17 = vcmask 7168
  %s18 = scalar_lea.vmem %s1, 2
  %19 = vst.msk [vmem:[%s18] ss:$8 sm:$0xf] %vm17, %v16
  %s20 = scalar_lea.vmem %s1, 2
  %21 = vst.msk [vmem:[%s20] ss:$8 sm:$0xf0] %vm17, %v16
  %v22 = vld [vmem:[%s0] sm:$0xff]
  %23 = vrot.lane.b32.xlu0 %v22, 125
  %v24 = vpop.permute.xlu0 %23
  %vm25 = vcmask 7168
  %s26 = scalar_lea.vmem %s1, 3
  %27 = vst.msk [vmem:[%s26] ss:$8 sm:$0xf] %vm25, %v24
  %s28 = scalar_lea.vmem %s1, 3
  %29 = vst.msk [vmem:[%s28] ss:$8 sm:$0xf0] %vm25, %v24
  %v30 = vld [vmem:[%s0] sm:$0xff]
  %31 = vrot.lane.b32.xlu0 %v30, 124
  %v32 = vpop.permute.xlu0 %31
  %vm33 = vcmask 7168
  %s34 = scalar_lea.vmem %s1, 4
  %35 = vst.msk [vmem:[%s34] ss:$8 sm:$0xf] %vm33, %v32
  %s36 = scalar_lea.vmem %s1, 4
  %37 = vst.msk [vmem:[%s36] ss:$8 sm:$0xf0] %vm33, %v32
  %v38 = vld [vmem:[%s0] sm:$0xff]
  %39 = vrot.lane.b32.xlu0 %v38, 123
  %v40 = vpop.permute.xlu0 %39
  %vm41 = vcmask 7168
  %s42 = scalar_lea.vmem %s1, 5
  %43 = vst.msk [vmem:[%s42] ss:$8 sm:$0xf] %vm41, %v40
  %s44 = scalar_lea.vmem %s1, 5
  %45 = vst.msk [vmem:[%s44] ss:$8 sm:$0xf0] %vm41, %v40
  %v46 = vld [vmem:[%s0] sm:$0xff]
  %47 = vrot.lane.b32.xlu0 %v46, 122
  %v48 = vpop.permute.xlu0 %47
  %vm49 = vcmask 7168
  %s50 = scalar_lea.vmem %s1, 6
  %51 = vst.msk [vmem:[%s50] ss:$8 sm:$0xf] %vm49, %v48
  %s52 = scalar_lea.vmem %s1, 6
  %53 = vst.msk [vmem:[%s52] ss:$8 sm:$0xf0] %vm49, %v48
  %v54 = vld [vmem:[%s0] sm:$0xff]
  %55 = vrot.lane.b32.xlu0 %v54, 121
  %v56 = vpop.permute.xlu0 %55
  %vm57 = vcmask 7168
  %s58 = scalar_lea.vmem %s1, 7
  %59 = vst.msk [vmem:[%s58] ss:$8 sm:$0xf] %vm57, %v56
  %s60 = scalar_lea.vmem %s1, 7
  %61 = vst.msk [vmem:[%s60] ss:$8 sm:$0xf0] %vm57, %v56

// kernel: distillog_forward.1
$region0: #{distillog_forward.1}
  #allocation0 [shape = 'u32[]', space=smem, size = 0x4, offset = 0x4, fixed_abs, tag = 'smem constant byte address 0x4 - core index']
  #allocation1 [shape = 'u32[144,128]{1,0:T(1,128)}', space=vmem, size = 0x12000, scoped, tag = 'internal scratch']
  #allocation2 [shape = 'f32[1,1]{1,0:T(1,128)S(1)}', space=vmem, size = 0x200, scoped, tag = 'scoped memory for distillog_forward.1']
  %s0 = inlined_call_operand.smem [shape: u32[33], index: -1, kind: input, shape index: {}]
  %s1 = sld [smem:[%s0]]
  %s2 = scalar_lea.smem %s0, 1
  %s3 = sld [smem:[%s2]]
  %s4 = scalar_lea.smem %s0, 2
  %s5 = sld [smem:[%s4]]
  %s6 = scalar_lea.smem %s0, 3
  %s7 = sld [smem:[%s6]]
  %s8 = scalar_lea.smem %s0, 4
  %s9 = sld [smem:[%s8]]
  %s10 = scalar_lea.smem %s0, 5
  %s11 = sld [smem:[%s10]]
  %s12 = scalar_lea.smem %s0, 6
  %s13 = sld [smem:[%s12]]
  %s14 = scalar_lea.smem %s0, 7
  %s15 = sld [smem:[%s14]]
  %s16 = scalar_lea.smem %s0, 8
  %s17 = sld [smem:[%s16]]
  %s18 = scalar_lea.smem %s0, 9
  %s19 = sld [smem:[%s18]]
  %s20 = scalar_lea.smem %s0, 10
  %s21 = sld [smem:[%s20]]
  %s22 = scalar_lea.smem %s0, 11
  %s23 = sld [smem:[%s22]]
  %s24 = scalar_lea.smem %s0, 12
  %s25 = sld [smem:[%s24]]
  %s26 = scalar_lea.smem %s0, 13
  %s27 = sld [smem:[%s26]]
  %s28 = scalar_lea.smem %s0, 14
  %s29 = sld [smem:[%s28]]
  %s30 = scalar_lea.smem %s0, 15
  %s31 = sld [smem:[%s30]]
  %s32 = scalar_lea.smem %s0, 16
  %s33 = sld [smem:[%s32]]
  %s34 = scalar_lea.smem %s0, 17
  %s35 = sld [smem:[%s34]]
  %s36 = scalar_lea.smem %s0, 18
  %s37 = sld [smem:[%s36]]
  %s38 = scalar_lea.smem %s0, 19
  %s39 = sld [smem:[%s38]]
  %s40 = scalar_lea.smem %s0, 20
  %s41 = sld [smem:[%s40]]
  %s42 = scalar_lea.smem %s0, 21
  %s43 = sld [smem:[%s42]]
  %s44 = scalar_lea.smem %s0, 22
  %s45 = sld [smem:[%s44]]
  %s46 = scalar_lea.smem %s0, 23
  %s47 = sld [smem:[%s46]]
  %s48 = scalar_lea.smem %s0, 24
  %s49 = sld [smem:[%s48]]
  %s50 = scalar_lea.smem %s0, 25
  %s51 = sld [smem:[%s50]]
  %s52 = scalar_lea.smem %s0, 26
  %s53 = sld [smem:[%s52]]
  %s54 = scalar_lea.smem %s0, 27
  %s55 = sld [smem:[%s54]]
  %s56 = scalar_lea.smem %s0, 28
  %s57 = sld [smem:[%s56]]
  %s58 = scalar_lea.smem %s0, 29
  %s59 = sld [smem:[%s58]]
  %s60 = scalar_lea.smem %s0, 30
  %s61 = sld [smem:[%s60]]
  %s62 = scalar_lea.smem %s0, 31
  %s63 = sld [smem:[%s62]]
  %s64 = scalar_lea.smem %s0, 32
  %s65 = sld [smem:[%s64]]
  %66 = xla_tuple %s61, %s63, %s65
  %s67 = sld [smem:[#allocation0]]
  $region146: #{distillog_forward.1} parent=0
    _
  %s69 = ssub.s32 1, %s67
  %s70 = scalar_select 0, %s69, %s67
  %v71 = vstv %s51
  %72 = vst [vmem:[#allocation2] sm:$0x1] %v71
  $region1: #{distillog_forward.1} parent=0
    #allocation3 [shape = 'u8[512]{0}', space=smem, size = 0x200, scoped, tag = 'output window, operand 0, single buffered']
    #allocation4 [shape = 's32[1]{0}', space=sflag, size = 0x4, scoped, tag = 'scoped memory for distillog_forward.1']
    %73 = vsyncpa [#allocation4], 0
    // Predicated region
    $region2: #{distillog_forward.1} parent=1 // pred_check
      _
    $region3: #{distillog_forward.1} parent=1 // pred_check_branch
      %75 = sbr.rel (0) target = $region5
    $region4: #{distillog_forward.1} parent=1 // pred_region
      _
    $region5: #{distillog_forward.1} parent=1 // pred_fallthru
      _
    // Predicated region
    $region6: #{distillog_forward.1} parent=1 // pred_check
      _
    $region7: #{distillog_forward.1} parent=1 // pred_check_branch
      %77 = sbr.rel (0) target = $region9
    $region8: #{distillog_forward.1} parent=1 // pred_region
      _
    $region9: #{distillog_forward.1} parent=1 // pred_fallthru
      _
    // Predicated region
    $region10: #{distillog_forward.1} parent=1 // pred_check
      _
    $region11: #{distillog_forward.1} parent=1 // pred_check_branch
      %79 = sbr.rel (0) target = $region13
    $region12: #{distillog_forward.1} parent=1 // pred_region
      _
    $region13: #{distillog_forward.1} parent=1 // pred_fallthru
      _
    // Predicated region
    $region14: #{distillog_forward.1} parent=1 // pred_check
      _
    $region15: #{distillog_forward.1} parent=1 // pred_check_branch
      %81 = sbr.rel (0) target = $region17
    $region16: #{distillog_forward.1} parent=1 // pred_region
      _
    $region17: #{distillog_forward.1} parent=1 // pred_fallthru
      _
    // Predicated region
    $region18: #{distillog_forward.1} parent=1 // pred_check
      _
    $region19: #{distillog_forward.1} parent=1 // pred_check_branch
      %83 = sbr.rel (0) target = $region21
    $region20: #{distillog_forward.1} parent=1 // pred_region
      _
    $region21: #{distillog_forward.1} parent=1 // pred_fallthru
      _
    // Predicated region
    $region22: #{distillog_forward.1} parent=1 // pred_check
      _
    $region23: #{distillog_forward.1} parent=1 // pred_check_branch
      %85 = sbr.rel (0) target = $region25
    $region24: #{distillog_forward.1} parent=1 // pred_region
      _
    $region25: #{distillog_forward.1} parent=1 // pred_fallthru
      _
    // Predicated region
    $region26: #{distillog_forward.1} parent=1 // pred_check
      _
    $region27: #{distillog_forward.1} parent=1 // pred_check_branch
      %87 = sbr.rel (0) target = $region29
    $region28: #{distillog_forward.1} parent=1 // pred_region
      _
    $region29: #{distillog_forward.1} parent=1 // pred_fallthru
      _
    // Predicated region
    $region30: #{distillog_forward.1} parent=1 // pred_check
      _
    $region31: #{distillog_forward.1} parent=1 // pred_check_branch
      %89 = sbr.rel (0) target = $region33
    $region32: #{distillog_forward.1} parent=1 // pred_region
      _
    $region33: #{distillog_forward.1} parent=1 // pred_fallthru
      _
    // Predicated region
    $region34: #{distillog_forward.1} parent=1 // pred_check
      _
    $region35: #{distillog_forward.1} parent=1 // pred_check_branch
      %91 = sbr.rel (0) target = $region37
    $region36: #{distillog_forward.1} parent=1 // pred_region
      _
    $region37: #{distillog_forward.1} parent=1 // pred_fallthru
      _
    // Predicated region
    $region38: #{distillog_forward.1} parent=1 // pred_check
      _
    $region39: #{distillog_forward.1} parent=1 // pred_check_branch
      %93 = sbr.rel (0) target = $region41
    $region40: #{distillog_forward.1} parent=1 // pred_region
      _
    $region41: #{distillog_forward.1} parent=1 // pred_fallthru
      _
    // Predicated region
    $region42: #{distillog_forward.1} parent=1 // pred_check
      _
    $region43: #{distillog_forward.1} parent=1 // pred_check_branch
      %95 = sbr.rel (0) target = $region45
    $region44: #{distillog_forward.1} parent=1 // pred_region
      _
    $region45: #{distillog_forward.1} parent=1 // pred_fallthru
      _
    // Predicated region
    $region46: #{distillog_forward.1} parent=1 // pred_check
      _
    $region47: #{distillog_forward.1} parent=1 // pred_check_branch
      %97 = sbr.rel (0) target = $region49
    $region48: #{distillog_forward.1} parent=1 // pred_region
      _
    $region49: #{distillog_forward.1} parent=1 // pred_fallthru
      _
    // Predicated region
    $region50: #{distillog_forward.1} parent=1 // pred_check
      _
    $region51: #{distillog_forward.1} parent=1 // pred_check_branch
      %99 = sbr.rel (0) target = $region53
    $region52: #{distillog_forward.1} parent=1 // pred_region
      _
    $region53: #{distillog_forward.1} parent=1 // pred_fallthru
      _
    // Predicated region
    $region54: #{distillog_forward.1} parent=1 // pred_check
      _
    $region55: #{distillog_forward.1} parent=1 // pred_check_branch
      %101 = sbr.rel (0) target = $region57
    $region56: #{distillog_forward.1} parent=1 // pred_region
      _
    $region57: #{distillog_forward.1} parent=1 // pred_fallthru
      _
    // Predicated region
    $region58: #{distillog_forward.1} parent=1 // pred_check
      _
    $region59: #{distillog_forward.1} parent=1 // pred_check_branch
      %103 = sbr.rel (0) target = $region61
    $region60: #{distillog_forward.1} parent=1 // pred_region
      _
    $region61: #{distillog_forward.1} parent=1 // pred_fallthru
      _
    // Predicated region
    $region62: #{distillog_forward.1} parent=1 // pred_check
      _
    $region63: #{distillog_forward.1} parent=1 // pred_check_branch
      %105 = sbr.rel (0) target = $region65
    $region64: #{distillog_forward.1} parent=1 // pred_region
      _
    $region65: #{distillog_forward.1} parent=1 // pred_fallthru
      _
    // Predicated region
    $region66: #{distillog_forward.1} parent=1 // pred_check
      _
    $region67: #{distillog_forward.1} parent=1 // pred_check_branch
      %107 = sbr.rel (0) target = $region69
    $region68: #{distillog_forward.1} parent=1 // pred_region
      _
    $region69: #{distillog_forward.1} parent=1 // pred_fallthru
      _
    // Predicated region
    $region70: #{distillog_forward.1} parent=1 // pred_check
      _
    $region71: #{distillog_forward.1} parent=1 // pred_check_branch
      %109 = sbr.rel (0) target = $region73
    $region72: #{distillog_forward.1} parent=1 // pred_region
      _
    $region73: #{distillog_forward.1} parent=1 // pred_fallthru
      _
    // Predicated region
    $region74: #{distillog_forward.1} parent=1 // pred_check
      _
    $region75: #{distillog_forward.1} parent=1 // pred_check_branch
      %111 = sbr.rel (0) target = $region77
    $region76: #{distillog_forward.1} parent=1 // pred_region
      _
    $region77: #{distillog_forward.1} parent=1 // pred_fallthru
      _
    // Predicated region
    $region78: #{distillog_forward.1} parent=1 // pred_check
      _
    $region79: #{distillog_forward.1} parent=1 // pred_check_branch
      %113 = sbr.rel (0) target = $region81
    $region80: #{distillog_forward.1} parent=1 // pred_region
      _
    $region81: #{distillog_forward.1} parent=1 // pred_fallthru
      _
    // Predicated region
    $region82: #{distillog_forward.1} parent=1 // pred_check
      _
    $region83: #{distillog_forward.1} parent=1 // pred_check_branch
      %115 = sbr.rel (0) target = $region85
    $region84: #{distillog_forward.1} parent=1 // pred_region
      _
    $region85: #{distillog_forward.1} parent=1 // pred_fallthru
      _
    // Predicated region
    $region86: #{distillog_forward.1} parent=1 // pred_check
      _
    $region87: #{distillog_forward.1} parent=1 // pred_check_branch
      %117 = sbr.rel (0) target = $region89
    $region88: #{distillog_forward.1} parent=1 // pred_region
      _
    $region89: #{distillog_forward.1} parent=1 // pred_fallthru
      _
    // Predicated region
    $region90: #{distillog_forward.1} parent=1 // pred_check
      _
    $region91: #{distillog_forward.1} parent=1 // pred_check_branch
      %119 = sbr.rel (0) target = $region93
    $region92: #{distillog_forward.1} parent=1 // pred_region
      _
    $region93: #{distillog_forward.1} parent=1 // pred_fallthru
      _
    // Predicated region
    $region94: #{distillog_forward.1} parent=1 // pred_check
      _
    $region95: #{distillog_forward.1} parent=1 // pred_check_branch
      %121 = sbr.rel (0) target = $region97
    $region96: #{distillog_forward.1} parent=1 // pred_region
      _
    $region97: #{distillog_forward.1} parent=1 // pred_fallthru
      _
    // Predicated region
    $region98: #{distillog_forward.1} parent=1 // pred_check
      _
    $region99: #{distillog_forward.1} parent=1 // pred_check_branch
      %123 = sbr.rel (0) target = $region101
    $region100: #{distillog_forward.1} parent=1 // pred_region
      _
    $region101: #{distillog_forward.1} parent=1 // pred_fallthru
      _
    // Predicated region
    $region102: #{distillog_forward.1} parent=1 // pred_check
      _
    $region103: #{distillog_forward.1} parent=1 // pred_check_branch
      %125 = sbr.rel (0) target = $region105
    $region104: #{distillog_forward.1} parent=1 // pred_region
      _
    $region105: #{distillog_forward.1} parent=1 // pred_fallthru
      _
    // Predicated region
    $region106: #{distillog_forward.1} parent=1 // pred_check
      _
    $region107: #{distillog_forward.1} parent=1 // pred_check_branch
      %127 = sbr.rel (0) target = $region109
    $region108: #{distillog_forward.1} parent=1 // pred_region
      _
    $region109: #{distillog_forward.1} parent=1 // pred_fallthru
      _
    // Predicated region
    $region110: #{distillog_forward.1} parent=1 // pred_check
      _
    $region111: #{distillog_forward.1} parent=1 // pred_check_branch
      %129 = sbr.rel (0) target = $region113
    $region112: #{distillog_forward.1} parent=1 // pred_region
      _
    $region113: #{distillog_forward.1} parent=1 // pred_fallthru
      _
    // Predicated region
    $region114: #{distillog_forward.1} parent=1 // pred_check
      _
    $region115: #{distillog_forward.1} parent=1 // pred_check_branch
      %131 = sbr.rel (0) target = $region117
    $region116: #{distillog_forward.1} parent=1 // pred_region
      _
    $region117: #{distillog_forward.1} parent=1 // pred_fallthru
      _
    // Predicated region
    $region118: #{distillog_forward.1} parent=1 // pred_check
      _
    $region119: #{distillog_forward.1} parent=1 // pred_check_branch
      %133 = sbr.rel (0) target = $region121
    $region120: #{distillog_forward.1} parent=1 // pred_region
      _
    $region121: #{distillog_forward.1} parent=1 // pred_fallthru
      _
    %v135 = vld [vmem:[%s1] sm:$0xff]
    %v136 = vld [vmem:[%s1 + $0x8] sm:$0xff]
    %v137 = vld [vmem:[%s1 + $0x10] sm:$0xff]
    %v138 = vld [vmem:[%s1 + $0x18] sm:$0xff]
    %v139 = vld [vmem:[%s1 + $0x20] sm:$0xff]
    %v140 = vld [vmem:[%s1 + $0x28] sm:$0xff]
    %v141 = vld [vmem:[%s1 + $0x30] sm:$0xff]
    %v142 = vld [vmem:[%s1 + $0x38] sm:$0xff]
    %v143 = vpack.c.bf16 %v136, %v135
    %v144 = vpack.c.bf16 %v138, %v137
    %v145 = vpack.c.bf16 %v140, %v139
    %v146 = vpack.c.bf16 %v142, %v141
    %v147 = vld [vmem:[%s11] sm:$0xf]
    %v148 = vld [vmem:[%s11 + $0x4] sm:$0xf]
    %v149 = vld [vmem:[%s11 + $0x8] sm:$0xf]
    %v150 = vld [vmem:[%s11 + $0xc] sm:$0xf]
    %v151 = vld [vmem:[%s13] sm:$0xf]
    %v152 = vld [vmem:[%s13 + $0x4] sm:$0xf]
    %v153 = vld [vmem:[%s13 + $0x8] sm:$0xf]
    %v154 = vld [vmem:[%s13 + $0xc] sm:$0xf]
    %v155 = vld [vmem:[%s15] sm:$0xf]
    %v156 = vld [vmem:[%s15 + $0x4] sm:$0xf]
    %v157 = vld [vmem:[%s15 + $0x8] sm:$0xf]
    %v158 = vld [vmem:[%s15 + $0xc] sm:$0xf]
    %v159 = vld [vmem:[%s5] sm:$0xf]
    %v160 = vld [vmem:[%s5 + $0x4] sm:$0xf]
    %v161 = vld [vmem:[%s5 + $0x8] sm:$0xf]
    %v162 = vld [vmem:[%s5 + $0xc] sm:$0xf]
    %v163 = vld [vmem:[%s17] sm:$0x1]
    %v165 = vlaneseq
    %v166 = vshrl.u32 %v165, 7
    %v167 = vsub.s32 0, %v166
    %v168 = vrot.slane %v163, %v167
    %v174 = vunpack.c.l.b16 %v159
    %v175 = vunpack.c.l.b16 %v160
    %v176 = vunpack.c.l.b16 %v161
    %v177 = vunpack.c.l.b16 %v162
    %v178 = vpack.c.b16 %v175, %v174
    %v179 = vpack.c.b16 %v177, %v176
    %vm182 = vcmask 261120
    %v184 = vsel %vm182, %v143, 0
    %v187 = vsel %vm182, %v144, 0
    %v190 = vsel %vm182, %v145, 0
    %v193 = vsel %vm182, %v146, 0
    %195 = vmatprep.subr.bf16.mxu0 0
    %196 = vmatpush1.bf16.msra.mxu0 0
    %197 = vmatprep.subr.bf16.mxu0 0
    %198 = vmatpush1.bf16.msra.mxu0 0
    %199 = vmatprep.subr.bf16.mxu0 0
    %200 = vmatpush1.bf16.msra.mxu0 0
    %201 = vmatprep.subr.bf16.mxu0 0
    %202 = vmatpush1.bf16.msra.mxu0 0
    %203 = vmatprep.subr.bf16.mxu0 0
    %204 = vmatpush1.bf16.msra.mxu0 0
    %205 = vmatprep.subr.bf16.mxu0 0
    %206 = vmatpush1.bf16.msra.mxu0 0
    %207 = vmatprep.subr.bf16.mxu0 0
    %208 = vmatpush1.bf16.msra.mxu0 %v179
    %209 = vmatprep.subr.bf16.mxu0 0
    %210 = vmatpush1.bf16.msra.mxu0 %v178
    %211 = vmatprep.subr.bf16.mxu0 0
    %212 = vmatpush2.bf16.msra.mxu0 0
    %213 = vmatprep.subr.bf16.mxu0 0
    %214 = vmatpush2.bf16.msra.mxu0 0
    %215 = vmatprep.subr.bf16.mxu0 0
    %216 = vmatpush2.bf16.msra.mxu0 0
    %217 = vmatprep.subr.bf16.mxu0 0
    %218 = vmatpush2.bf16.msra.mxu0 0
    %219 = vmatprep.subr.bf16.mxu0 0
    %220 = vmatpush2.bf16.msra.mxu0 0
    %221 = vmatprep.subr.bf16.mxu0 0
    %222 = vmatpush2.bf16.msra.mxu0 0
    %223 = vmatprep.subr.bf16.mxu0 0
    %224 = vmatpush2.bf16.msra.mxu0 0
    %225 = vmatprep.subr.bf16.mxu0 0
    %226 = vmatpush2.bf16.msra.mxu0 0
    %227 = vmatprep.mubr.bf16.mxu0 0
    %228 = vmatmul.mubr.bf16.gmra.mxu0 %v184
    %v229 = vpop.f32.mrf.mxu0
    %v230 = vadd.f32 %v168, %v229
    %v231 = vpop.f32.mrf.mxu0
    %v232 = vpop.f32.mrf.mxu0
    %v233 = vadd.f32 %v168, %v232
    %v234 = vpop.f32.mrf.mxu0
    %235 = vmatprep.mubr.bf16.mxu0 0
    %236 = vmatmul.mubr.bf16.gmra.mxu0 %v187
    %v237 = vpop.f32.mrf.mxu0
    %v238 = vadd.f32 %v168, %v237
    %v239 = vpop.f32.mrf.mxu0
    %v240 = vpop.f32.mrf.mxu0
    %v241 = vadd.f32 %v168, %v240
    %v242 = vpop.f32.mrf.mxu0
    %243 = vmatprep.mubr.bf16.mxu0 0
    %244 = vmatmul.mubr.bf16.gmra.mxu0 %v190
    %v245 = vpop.f32.mrf.mxu0
    %v246 = vadd.f32 %v168, %v245
    %v247 = vpop.f32.mrf.mxu0
    %v248 = vpop.f32.mrf.mxu0
    %v249 = vadd.f32 %v168, %v248
    %v250 = vpop.f32.mrf.mxu0
    %251 = vmatprep.mubr.bf16.mxu0 0
    %252 = vmatmul.mubr.bf16.gmra.mxu0 %v193
    %v253 = vpop.f32.mrf.mxu0
    %v254 = vadd.f32 %v168, %v253
    %v255 = vpop.f32.mrf.mxu0
    %v256 = vpop.f32.mrf.mxu0
    %v257 = vadd.f32 %v168, %v256
    %v258 = vpop.f32.mrf.mxu0
    %259 = vdwg.mxu0
    %v260 = vld [vmem:[%s7] sm:$0xf]
    %v261 = vld [vmem:[%s7 + $0x4] sm:$0xf]
    %v262 = vld [vmem:[%s7 + $0x8] sm:$0xf]
    %v263 = vld [vmem:[%s7 + $0xc] sm:$0xf]
    %v264 = vld [vmem:[%s19] sm:$0x1]
    %v266 = vlaneseq
    %v267 = vshrl.u32 %v266, 7
    %v268 = vsub.s32 0, %v267
    %v269 = vrot.slane %v264, %v268
    %v275 = vunpack.c.l.b16 %v260
    %v276 = vunpack.c.l.b16 %v261
    %v277 = vunpack.c.l.b16 %v262
    %v278 = vunpack.c.l.b16 %v263
    %v279 = vpack.c.b16 %v276, %v275
    %v280 = vpack.c.b16 %v278, %v277
    %283 = vmatprep.subr.bf16.mxu0 0
    %284 = vmatpush1.bf16.msra.mxu0 0
    %285 = vmatprep.subr.bf16.mxu0 0
    %286 = vmatpush1.bf16.msra.mxu0 0
    %287 = vmatprep.subr.bf16.mxu0 0
    %288 = vmatpush1.bf16.msra.mxu0 0
    %289 = vmatprep.subr.bf16.mxu0 0
    %290 = vmatpush1.bf16.msra.mxu0 0
    %291 = vmatprep.subr.bf16.mxu0 0
    %292 = vmatpush1.bf16.msra.mxu0 0
    %293 = vmatprep.subr.bf16.mxu0 0
    %294 = vmatpush1.bf16.msra.mxu0 0
    %295 = vmatprep.subr.bf16.mxu0 0
    %296 = vmatpush1.bf16.msra.mxu0 %v280
    %297 = vmatprep.subr.bf16.mxu0 0
    %298 = vmatpush1.bf16.msra.mxu0 %v279
    %299 = vmatprep.subr.bf16.mxu0 0
    %300 = vmatpush2.bf16.msra.mxu0 0
    %301 = vmatprep.subr.bf16.mxu0 0
    %302 = vmatpush2.bf16.msra.mxu0 0
    %303 = vmatprep.subr.bf16.mxu0 0
    %304 = vmatpush2.bf16.msra.mxu0 0
    %305 = vmatprep.subr.bf16.mxu0 0
    %306 = vmatpush2.bf16.msra.mxu0 0
    %307 = vmatprep.subr.bf16.mxu0 0
    %308 = vmatpush2.bf16.msra.mxu0 0
    %309 = vmatprep.subr.bf16.mxu0 0
    %310 = vmatpush2.bf16.msra.mxu0 0
    %311 = vmatprep.subr.bf16.mxu0 0
    %312 = vmatpush2.bf16.msra.mxu0 0
    %313 = vmatprep.subr.bf16.mxu0 0
    %314 = vmatpush2.bf16.msra.mxu0 0
    %315 = vmatprep.mubr.bf16.mxu0 0
    %316 = vmatmul.mubr.bf16.gmra.mxu0 %v184
    %v317 = vpop.f32.mrf.mxu0
    %v318 = vadd.f32 %v269, %v317
    %v319 = vpop.f32.mrf.mxu0
    %v320 = vpop.f32.mrf.mxu0
    %v321 = vadd.f32 %v269, %v320
    %v322 = vpop.f32.mrf.mxu0
    %323 = vmatprep.mubr.bf16.mxu0 0
    %324 = vmatmul.mubr.bf16.gmra.mxu0 %v187
    %v325 = vpop.f32.mrf.mxu0
    %v326 = vadd.f32 %v269, %v325
    %v327 = vpop.f32.mrf.mxu0
    %v328 = vpop.f32.mrf.mxu0
    %v329 = vadd.f32 %v269, %v328
    %v330 = vpop.f32.mrf.mxu0
    %331 = vmatprep.mubr.bf16.mxu0 0
    %332 = vmatmul.mubr.bf16.gmra.mxu0 %v190
    %v333 = vpop.f32.mrf.mxu0
    %v334 = vadd.f32 %v269, %v333
    %v335 = vpop.f32.mrf.mxu0
    %v336 = vpop.f32.mrf.mxu0
    %v337 = vadd.f32 %v269, %v336
    %v338 = vpop.f32.mrf.mxu0
    %339 = vmatprep.mubr.bf16.mxu0 0
    %340 = vmatmul.mubr.bf16.gmra.mxu0 %v193
    %v341 = vpop.f32.mrf.mxu0
    %v342 = vadd.f32 %v269, %v341
    %v343 = vpop.f32.mrf.mxu0
    %v344 = vpop.f32.mrf.mxu0
    %v345 = vadd.f32 %v269, %v344
    %v346 = vpop.f32.mrf.mxu0
    %347 = vdwg.mxu0
    %v348 = vld [vmem:[%s9] sm:$0xf]
    %v349 = vld [vmem:[%s9 + $0x4] sm:$0xf]
    %v350 = vld [vmem:[%s9 + $0x8] sm:$0xf]
    %v351 = vld [vmem:[%s9 + $0xc] sm:$0xf]
    %v352 = vld [vmem:[%s21] sm:$0x1]
    %v354 = vlaneseq
    %v355 = vshrl.u32 %v354, 7
    %v356 = vsub.s32 0, %v355
    %v357 = vrot.slane %v352, %v356
    %v363 = vunpack.c.l.b16 %v348
    %v364 = vunpack.c.l.b16 %v349
    %v365 = vunpack.c.l.b16 %v350
    %v366 = vunpack.c.l.b16 %v351
    %v367 = vpack.c.b16 %v364, %v363
    %v368 = vpack.c.b16 %v366, %v365
    %371 = vmatprep.subr.bf16.mxu0 0
    %372 = vmatpush1.bf16.msra.mxu0 0
    %373 = vmatprep.subr.bf16.mxu0 0
    %374 = vmatpush1.bf16.msra.mxu0 0
    %375 = vmatprep.subr.bf16.mxu0 0
    %376 = vmatpush1.bf16.msra.mxu0 0
    %377 = vmatprep.subr.bf16.mxu0 0
    %378 = vmatpush1.bf16.msra.mxu0 0
    %379 = vmatprep.subr.bf16.mxu0 0
    %380 = vmatpush1.bf16.msra.mxu0 0
    %381 = vmatprep.subr.bf16.mxu0 0
    %382 = vmatpush1.bf16.msra.mxu0 0
    %383 = vmatprep.subr.bf16.mxu0 0
    %384 = vmatpush1.bf16.msra.mxu0 %v368
    %385 = vmatprep.subr.bf16.mxu0 0
    %386 = vmatpush1.bf16.msra.mxu0 %v367
    %387 = vmatprep.subr.bf16.mxu0 0
    %388 = vmatpush2.bf16.msra.mxu0 0
    %389 = vmatprep.subr.bf16.mxu0 0
    %390 = vmatpush2.bf16.msra.mxu0 0
    %391 = vmatprep.subr.bf16.mxu0 0
    %392 = vmatpush2.bf16.msra.mxu0 0
    %393 = vmatprep.subr.bf16.mxu0 0
    %394 = vmatpush2.bf16.msra.mxu0 0
    %395 = vmatprep.subr.bf16.mxu0 0
    %396 = vmatpush2.bf16.msra.mxu0 0
    %397 = vmatprep.subr.bf16.mxu0 0
    %398 = vmatpush2.bf16.msra.mxu0 0
    %399 = vmatprep.subr.bf16.mxu0 0
    %400 = vmatpush2.bf16.msra.mxu0 0
    %401 = vmatprep.subr.bf16.mxu0 0
    %402 = vmatpush2.bf16.msra.mxu0 0
    %403 = vmatprep.mubr.bf16.mxu0 0
    %404 = vmatmul.mubr.bf16.gmra.mxu0 %v184
    %v405 = vpop.f32.mrf.mxu0
    %v406 = vadd.f32 %v357, %v405
    %v407 = vpop.f32.mrf.mxu0
    %v408 = vpop.f32.mrf.mxu0
    %v409 = vadd.f32 %v357, %v408
    %v410 = vpop.f32.mrf.mxu0
    %411 = vmatprep.mubr.bf16.mxu0 0
    %412 = vmatmul.mubr.bf16.gmra.mxu0 %v187
    %v413 = vpop.f32.mrf.mxu0
    %v414 = vadd.f32 %v357, %v413
    %v415 = vpop.f32.mrf.mxu0
    %v416 = vpop.f32.mrf.mxu0
    %v417 = vadd.f32 %v357, %v416
    %v418 = vpop.f32.mrf.mxu0
    %419 = vmatprep.mubr.bf16.mxu0 0
    %420 = vmatmul.mubr.bf16.gmra.mxu0 %v190
    %v421 = vpop.f32.mrf.mxu0
    %v422 = vadd.f32 %v357, %v421
    %v423 = vpop.f32.mrf.mxu0
    %v424 = vpop.f32.mrf.mxu0
    %v425 = vadd.f32 %v357, %v424
    %v426 = vpop.f32.mrf.mxu0
    %427 = vmatprep.mubr.bf16.mxu0 0
    %428 = vmatmul.mubr.bf16.gmra.mxu0 %v193
    %v429 = vpop.f32.mrf.mxu0
    %v430 = vadd.f32 %v357, %v429
    %v431 = vpop.f32.mrf.mxu0
    %v432 = vpop.f32.mrf.mxu0
    %v433 = vadd.f32 %v357, %v432
    %v434 = vpop.f32.mrf.mxu0
    %435 = vdwg.mxu0
    %v436 = vld [vmem:[%s23] sm:$0x1]
    %v438 = vlaneseq
    %v439 = vshrl.u32 %v438, 7
    %v440 = vsub.s32 0, %v439
    %v441 = vrot.slane %v436, %v440
    %v447 = vunpack.c.l.b16 %v147
    %v448 = vunpack.c.l.b16 %v148
    %v449 = vunpack.c.l.b16 %v149
    %v450 = vunpack.c.l.b16 %v150
    %v451 = vpack.c.b16 %v448, %v447
    %v452 = vpack.c.b16 %v450, %v449
    %v456 = vsel %vm182, 0, 0
    %458 = vmatprep.subr.bf16.mxu0 0
    %459 = vmatpush1.bf16.msra.mxu0 0
    %460 = vmatprep.subr.bf16.mxu0 0
    %461 = vmatpush1.bf16.msra.mxu0 0
    %462 = vmatprep.subr.bf16.mxu0 0
    %463 = vmatpush1.bf16.msra.mxu0 0
    %464 = vmatprep.subr.bf16.mxu0 0
    %465 = vmatpush1.bf16.msra.mxu0 0
    %466 = vmatprep.subr.bf16.mxu0 0
    %467 = vmatpush1.bf16.msra.mxu0 0
    %468 = vmatprep.subr.bf16.mxu0 0
    %469 = vmatpush1.bf16.msra.mxu0 0
    %470 = vmatprep.subr.bf16.mxu0 0
    %471 = vmatpush1.bf16.msra.mxu0 %v452
    %472 = vmatprep.subr.bf16.mxu0 0
    %473 = vmatpush1.bf16.msra.mxu0 %v451
    %474 = vmatprep.subr.bf16.mxu0 0
    %475 = vmatpush2.bf16.msra.mxu0 0
    %476 = vmatprep.subr.bf16.mxu0 0
    %477 = vmatpush2.bf16.msra.mxu0 0
    %478 = vmatprep.subr.bf16.mxu0 0
    %479 = vmatpush2.bf16.msra.mxu0 0
    %480 = vmatprep.subr.bf16.mxu0 0
    %481 = vmatpush2.bf16.msra.mxu0 0
    %482 = vmatprep.subr.bf16.mxu0 0
    %483 = vmatpush2.bf16.msra.mxu0 0
    %484 = vmatprep.subr.bf16.mxu0 0
    %485 = vmatpush2.bf16.msra.mxu0 0
    %486 = vmatprep.subr.bf16.mxu0 0
    %487 = vmatpush2.bf16.msra.mxu0 0
    %488 = vmatprep.subr.bf16.mxu0 0
    %489 = vmatpush2.bf16.msra.mxu0 0
    %490 = vmatprep.mubr.bf16.mxu0 0
    %491 = vmatmul.mubr.bf16.gmra.mxu0 %v456
    %v492 = vpop.f32.mrf.mxu0
    %v493 = vadd.f32 0.0, %v492
    %v494 = vpop.f32.mrf.mxu0
    %v495 = vpop.f32.mrf.mxu0
    %v496 = vpop.f32.mrf.mxu0
    %497 = vdwg.mxu0
    %v502 = vunpack.c.l.b16 %v151
    %v503 = vunpack.c.l.b16 %v152
    %v504 = vunpack.c.l.b16 %v153
    %v505 = vunpack.c.l.b16 %v154
    %v506 = vpack.c.b16 %v503, %v502
    %v507 = vpack.c.b16 %v505, %v504
    %510 = vmatprep.subr.bf16.mxu0 0
    %511 = vmatpush1.bf16.msra.mxu0 0
    %512 = vmatprep.subr.bf16.mxu0 0
    %513 = vmatpush1.bf16.msra.mxu0 0
    %514 = vmatprep.subr.bf16.mxu0 0
    %515 = vmatpush1.bf16.msra.mxu0 0
    %516 = vmatprep.subr.bf16.mxu0 0
    %517 = vmatpush1.bf16.msra.mxu0 0
    %518 = vmatprep.subr.bf16.mxu0 0
    %519 = vmatpush1.bf16.msra.mxu0 0
    %520 = vmatprep.subr.bf16.mxu0 0
    %521 = vmatpush1.bf16.msra.mxu0 0
    %522 = vmatprep.subr.bf16.mxu0 0
    %523 = vmatpush1.bf16.msra.mxu0 %v507
    %524 = vmatprep.subr.bf16.mxu0 0
    %525 = vmatpush1.bf16.msra.mxu0 %v506
    %526 = vmatprep.subr.bf16.mxu0 0
    %527 = vmatpush2.bf16.msra.mxu0 0
    %528 = vmatprep.subr.bf16.mxu0 0
    %529 = vmatpush2.bf16.msra.mxu0 0
    %530 = vmatprep.subr.bf16.mxu0 0
    %531 = vmatpush2.bf16.msra.mxu0 0
    %532 = vmatprep.subr.bf16.mxu0 0
    %533 = vmatpush2.bf16.msra.mxu0 0
    %534 = vmatprep.subr.bf16.mxu0 0
    %535 = vmatpush2.bf16.msra.mxu0 0
    %536 = vmatprep.subr.bf16.mxu0 0
    %537 = vmatpush2.bf16.msra.mxu0 0
    %538 = vmatprep.subr.bf16.mxu0 0
    %539 = vmatpush2.bf16.msra.mxu0 0
    %540 = vmatprep.subr.bf16.mxu0 0
    %541 = vmatpush2.bf16.msra.mxu0 0
    %542 = vmatprep.mubr.bf16.mxu0 0
    %543 = vmatmul.mubr.bf16.gmra.mxu0 %v456
    %v544 = vpop.f32.mrf.mxu0
    %v545 = vadd.f32 0.0, %v544
    %v546 = vpop.f32.mrf.mxu0
    %v547 = vpop.f32.mrf.mxu0
    %v548 = vpop.f32.mrf.mxu0
    %549 = vdwg.mxu0
    %v550 = vadd.f32 %v230, %v493
    %v551 = vxor.u32 %v550, 2147483648
    %v552 = vmul.f32 %v551, 1.442695
    %v553 = vpow.pop %v552
    %v554 = vadd.f32 %v553, 1.0
    %v555 = vrcp.pop %v554
    %v556 = vmul.f32 1.0, %v555
    %v557 = vadd.f32 %v318, %v545
    %v558 = vxor.u32 %v557, 2147483648
    %v559 = vmul.f32 %v558, 1.442695
    %v560 = vpow.pop %v559
    %v561 = vadd.f32 %v560, 1.0
    %v562 = vrcp.pop %v561
    %v563 = vmul.f32 1.0, %v562
    %v568 = vunpack.c.l.b16 %v155
    %v569 = vunpack.c.l.b16 %v156
    %v570 = vunpack.c.l.b16 %v157
    %v571 = vunpack.c.l.b16 %v158
    %v572 = vpack.c.b16 %v569, %v568
    %v573 = vpack.c.b16 %v571, %v570
    %576 = vmatprep.subr.bf16.mxu0 0
    %577 = vmatpush1.bf16.msra.mxu0 0
    %578 = vmatprep.subr.bf16.mxu0 0
    %579 = vmatpush1.bf16.msra.mxu0 0
    %580 = vmatprep.subr.bf16.mxu0 0
    %581 = vmatpush1.bf16.msra.mxu0 0
    %582 = vmatprep.subr.bf16.mxu0 0
    %583 = vmatpush1.bf16.msra.mxu0 0
    %584 = vmatprep.subr.bf16.mxu0 0
    %585 = vmatpush1.bf16.msra.mxu0 0
    %586 = vmatprep.subr.bf16.mxu0 0
    %587 = vmatpush1.bf16.msra.mxu0 0
    %588 = vmatprep.subr.bf16.mxu0 0
    %589 = vmatpush1.bf16.msra.mxu0 %v573
    %590 = vmatprep.subr.bf16.mxu0 0
    %591 = vmatpush1.bf16.msra.mxu0 %v572
    %592 = vmatprep.subr.bf16.mxu0 0
    %593 = vmatpush2.bf16.msra.mxu0 0
    %594 = vmatprep.subr.bf16.mxu0 0
    %595 = vmatpush2.bf16.msra.mxu0 0
    %596 = vmatprep.subr.bf16.mxu0 0
    %597 = vmatpush2.bf16.msra.mxu0 0
    %598 = vmatprep.subr.bf16.mxu0 0
    %599 = vmatpush2.bf16.msra.mxu0 0
    %600 = vmatprep.subr.bf16.mxu0 0
    %601 = vmatpush2.bf16.msra.mxu0 0
    %602 = vmatprep.subr.bf16.mxu0 0
    %603 = vmatpush2.bf16.msra.mxu0 0
    %604 = vmatprep.subr.bf16.mxu0 0
    %605 = vmatpush2.bf16.msra.mxu0 0
    %606 = vmatprep.subr.bf16.mxu0 0
    %607 = vmatpush2.bf16.msra.mxu0 0
    %608 = vmatprep.mubr.bf16.mxu0 0
    %609 = vmatmul.mubr.bf16.gmra.mxu0 %v456
    %v610 = vpop.f32.mrf.mxu0
    %v611 = vadd.f32 %v441, %v610
    %v612 = vpop.f32.mrf.mxu0
    %v613 = vpop.f32.mrf.mxu0
    %v614 = vpop.f32.mrf.mxu0
    %615 = vdwg.mxu0
    %v616 = vmul.f32 %v556, %v611
    %v617 = vadd.f32 %v406, %v616
    %v618 = vtanh.pop %v617
    %v619 = vsub.f32 1.0, %v563
    %v620 = vmul.f32 %v619, %v618
    %v621 = vmul.f32 %v563, 0.0
    %v622 = vadd.f32 %v620, %v621
    %v623 = vpack.c.bf16 %v622, %v622
    %v625 = vsel %vm182, %v623, 0
    %627 = vmatprep.subr.bf16.mxu0 0
    %628 = vmatpush1.bf16.msra.mxu0 0
    %629 = vmatprep.subr.bf16.mxu0 0
    %630 = vmatpush1.bf16.msra.mxu0 0
    %631 = vmatprep.subr.bf16.mxu0 0
    %632 = vmatpush1.bf16.msra.mxu0 0
    %633 = vmatprep.subr.bf16.mxu0 0
    %634 = vmatpush1.bf16.msra.mxu0 0
    %635 = vmatprep.subr.bf16.mxu0 0
    %636 = vmatpush1.bf16.msra.mxu0 0
    %637 = vmatprep.subr.bf16.mxu0 0
    %638 = vmatpush1.bf16.msra.mxu0 0
    %639 = vmatprep.subr.bf16.mxu0 0
    %640 = vmatpush1.bf16.msra.mxu0 %v452
    %641 = vmatprep.subr.bf16.mxu0 0
    %642 = vmatpush1.bf16.msra.mxu0 %v451
    %643 = vmatprep.subr.bf16.mxu0 0
    %644 = vmatpush2.bf16.msra.mxu0 0
    %645 = vmatprep.subr.bf16.mxu0 0
    %646 = vmatpush2.bf16.msra.mxu0 0
    %647 = vmatprep.subr.bf16.mxu0 0
    %648 = vmatpush2.bf16.msra.mxu0 0
    %649 = vmatprep.subr.bf16.mxu0 0
    %650 = vmatpush2.bf16.msra.mxu0 0
    %651 = vmatprep.subr.bf16.mxu0 0
    %652 = vmatpush2.bf16.msra.mxu0 0
    %653 = vmatprep.subr.bf16.mxu0 0
    %654 = vmatpush2.bf16.msra.mxu0 0
    %655 = vmatprep.subr.bf16.mxu0 0
    %656 = vmatpush2.bf16.msra.mxu0 0
    %657 = vmatprep.subr.bf16.mxu0 0
    %658 = vmatpush2.bf16.msra.mxu0 0
    %659 = vmatprep.mubr.bf16.mxu0 0
    %660 = vmatmul.mubr.bf16.gmra.mxu0 %v625
    %v661 = vpop.f32.mrf.mxu0
    %v662 = vadd.f32 0.0, %v661
    %v663 = vpop.f32.mrf.mxu0
    %v664 = vpop.f32.mrf.mxu0
    %v665 = vpop.f32.mrf.mxu0
    %666 = vdwg.mxu0
    %667 = vmatprep.subr.bf16.mxu0 0
    %668 = vmatpush1.bf16.msra.mxu0 0
    %669 = vmatprep.subr.bf16.mxu0 0
    %670 = vmatpush1.bf16.msra.mxu0 0
    %671 = vmatprep.subr.bf16.mxu0 0
    %672 = vmatpush1.bf16.msra.mxu0 0
    %673 = vmatprep.subr.bf16.mxu0 0
    %674 = vmatpush1.bf16.msra.mxu0 0
    %675 = vmatprep.subr.bf16.mxu0 0
    %676 = vmatpush1.bf16.msra.mxu0 0
    %677 = vmatprep.subr.bf16.mxu0 0
    %678 = vmatpush1.bf16.msra.mxu0 0
    %679 = vmatprep.subr.bf16.mxu0 0
    %680 = vmatpush1.bf16.msra.mxu0 %v507
    %681 = vmatprep.subr.bf16.mxu0 0
    %682 = vmatpush1.bf16.msra.mxu0 %v506
    %683 = vmatprep.subr.bf16.mxu0 0
    %684 = vmatpush2.bf16.msra.mxu0 0
    %685 = vmatprep.subr.bf16.mxu0 0
    %686 = vmatpush2.bf16.msra.mxu0 0
    %687 = vmatprep.subr.bf16.mxu0 0
    %688 = vmatpush2.bf16.msra.mxu0 0
    %689 = vmatprep.subr.bf16.mxu0 0
    %690 = vmatpush2.bf16.msra.mxu0 0
    %691 = vmatprep.subr.bf16.mxu0 0
    %692 = vmatpush2.bf16.msra.mxu0 0
    %693 = vmatprep.subr.bf16.mxu0 0
    %694 = vmatpush2.bf16.msra.mxu0 0
    %695 = vmatprep.subr.bf16.mxu0 0
    %696 = vmatpush2.bf16.msra.mxu0 0
    %697 = vmatprep.subr.bf16.mxu0 0
    %698 = vmatpush2.bf16.msra.mxu0 0
    %699 = vmatprep.mubr.bf16.mxu0 0
    %700 = vmatmul.mubr.bf16.gmra.mxu0 %v625
    %v701 = vpop.f32.mrf.mxu0
    %v702 = vadd.f32 0.0, %v701
    %v703 = vpop.f32.mrf.mxu0
    %v704 = vpop.f32.mrf.mxu0
    %v705 = vpop.f32.mrf.mxu0
    %706 = vdwg.mxu0
    %v707 = vadd.f32 %v233, %v662
    %v708 = vxor.u32 %v707, 2147483648
    %v709 = vmul.f32 %v708, 1.442695
    %v710 = vpow.pop %v709
    %v711 = vadd.f32 %v710, 1.0
    %v712 = vrcp.pop %v711
    %v713 = vmul.f32 1.0, %v712
    %v714 = vadd.f32 %v321, %v702
    %v715 = vxor.u32 %v714, 2147483648
    %v716 = vmul.f32 %v715, 1.442695
    %v717 = vpow.pop %v716
    %v718 = vadd.f32 %v717, 1.0
    %v719 = vrcp.pop %v718
    %v720 = vmul.f32 1.0, %v719
    %721 = vmatprep.subr.bf16.mxu0 0
    %722 = vmatpush1.bf16.msra.mxu0 0
    %723 = vmatprep.subr.bf16.mxu0 0
    %724 = vmatpush1.bf16.msra.mxu0 0
    %725 = vmatprep.subr.bf16.mxu0 0
    %726 = vmatpush1.bf16.msra.mxu0 0
    %727 = vmatprep.subr.bf16.mxu0 0
    %728 = vmatpush1.bf16.msra.mxu0 0
    %729 = vmatprep.subr.bf16.mxu0 0
    %730 = vmatpush1.bf16.msra.mxu0 0
    %731 = vmatprep.subr.bf16.mxu0 0
    %732 = vmatpush1.bf16.msra.mxu0 0
    %733 = vmatprep.subr.bf16.mxu0 0
    %734 = vmatpush1.bf16.msra.mxu0 %v573
    %735 = vmatprep.subr.bf16.mxu0 0
    %736 = vmatpush1.bf16.msra.mxu0 %v572
    %737 = vmatprep.subr.bf16.mxu0 0
    %738 = vmatpush2.bf16.msra.mxu0 0
    %739 = vmatprep.subr.bf16.mxu0 0
    %740 = vmatpush2.bf16.msra.mxu0 0
    %741 = vmatprep.subr.bf16.mxu0 0
    %742 = vmatpush2.bf16.msra.mxu0 0
    %743 = vmatprep.subr.bf16.mxu0 0
    %744 = vmatpush2.bf16.msra.mxu0 0
    %745 = vmatprep.subr.bf16.mxu0 0
    %746 = vmatpush2.bf16.msra.mxu0 0
    %747 = vmatprep.subr.bf16.mxu0 0
    %748 = vmatpush2.bf16.msra.mxu0 0
    %749 = vmatprep.subr.bf16.mxu0 0
    %750 = vmatpush2.bf16.msra.mxu0 0
    %751 = vmatprep.subr.bf16.mxu0 0
    %752 = vmatpush2.bf16.msra.mxu0 0
    %753 = vmatprep.mubr.bf16.mxu0 0
    %754 = vmatmul.mubr.bf16.gmra.mxu0 %v625
    %v755 = vpop.f32.mrf.mxu0
    %v756 = vadd.f32 %v441, %v755
    %v757 = vpop.f32.mrf.mxu0
    %v758 = vpop.f32.mrf.mxu0
    %v759 = vpop.f32.mrf.mxu0
    %760 = vdwg.mxu0
    %v761 = vmul.f32 %v713, %v756
    %v762 = vadd.f32 %v409, %v761
    %v763 = vtanh.pop %v762
    %v764 = vsub.f32 1.0, %v720
    %v765 = vmul.f32 %v764, %v763
    %v766 = vmul.f32 %v720, %v622
    %v767 = vadd.f32 %v765, %v766
    %v768 = vpack.c.bf16 %v767, %v767
    %v770 = vsel %vm182, %v768, 0
    %772 = vmatprep.subr.bf16.mxu0 0
    %773 = vmatpush1.bf16.msra.mxu0 0
    %774 = vmatprep.subr.bf16.mxu0 0
    %775 = vmatpush1.bf16.msra.mxu0 0
    %776 = vmatprep.subr.bf16.mxu0 0
    %777 = vmatpush1.bf16.msra.mxu0 0
    %778 = vmatprep.subr.bf16.mxu0 0
    %779 = vmatpush1.bf16.msra.mxu0 0
    %780 = vmatprep.subr.bf16.mxu0 0
    %781 = vmatpush1.bf16.msra.mxu0 0
    %782 = vmatprep.subr.bf16.mxu0 0
    %783 = vmatpush1.bf16.msra.mxu0 0
    %784 = vmatprep.subr.bf16.mxu0 0
    %785 = vmatpush1.bf16.msra.mxu0 %v452
    %786 = vmatprep.subr.bf16.mxu0 0
    %787 = vmatpush1.bf16.msra.mxu0 %v451
    %788 = vmatprep.subr.bf16.mxu0 0
    %789 = vmatpush2.bf16.msra.mxu0 0
    %790 = vmatprep.subr.bf16.mxu0 0
    %791 = vmatpush2.bf16.msra.mxu0 0
    %792 = vmatprep.subr.bf16.mxu0 0
    %793 = vmatpush2.bf16.msra.mxu0 0
    %794 = vmatprep.subr.bf16.mxu0 0
    %795 = vmatpush2.bf16.msra.mxu0 0
    %796 = vmatprep.subr.bf16.mxu0 0
    %797 = vmatpush2.bf16.msra.mxu0 0
    %798 = vmatprep.subr.bf16.mxu0 0
    %799 = vmatpush2.bf16.msra.mxu0 0
    %800 = vmatprep.subr.bf16.mxu0 0
    %801 = vmatpush2.bf16.msra.mxu0 0
    %802 = vmatprep.subr.bf16.mxu0 0
    %803 = vmatpush2.bf16.msra.mxu0 0
    %804 = vmatprep.mubr.bf16.mxu0 0
    %805 = vmatmul.mubr.bf16.gmra.mxu0 %v770
    %v806 = vpop.f32.mrf.mxu0
    %v807 = vadd.f32 0.0, %v806
    %v808 = vpop.f32.mrf.mxu0
    %v809 = vpop.f32.mrf.mxu0
    %v810 = vpop.f32.mrf.mxu0
    %811 = vdwg.mxu0
    %812 = vmatprep.subr.bf16.mxu0 0
    %813 = vmatpush1.bf16.msra.mxu0 0
    %814 = vmatprep.subr.bf16.mxu0 0
    %815 = vmatpush1.bf16.msra.mxu0 0
    %816 = vmatprep.subr.bf16.mxu0 0
    %817 = vmatpush1.bf16.msra.mxu0 0
    %818 = vmatprep.subr.bf16.mxu0 0
    %819 = vmatpush1.bf16.msra.mxu0 0
    %820 = vmatprep.subr.bf16.mxu0 0
    %821 = vmatpush1.bf16.msra.mxu0 0
    %822 = vmatprep.subr.bf16.mxu0 0
    %823 = vmatpush1.bf16.msra.mxu0 0
    %824 = vmatprep.subr.bf16.mxu0 0
    %825 = vmatpush1.bf16.msra.mxu0 %v507
    %826 = vmatprep.subr.bf16.mxu0 0
    %827 = vmatpush1.bf16.msra.mxu0 %v506
    %828 = vmatprep.subr.bf16.mxu0 0
    %829 = vmatpush2.bf16.msra.mxu0 0
    %830 = vmatprep.subr.bf16.mxu0 0
    %831 = vmatpush2.bf16.msra.mxu0 0
    %832 = vmatprep.subr.bf16.mxu0 0
    %833 = vmatpush2.bf16.msra.mxu0 0
    %834 = vmatprep.subr.bf16.mxu0 0
    %835 = vmatpush2.bf16.msra.mxu0 0
    %836 = vmatprep.subr.bf16.mxu0 0
    %837 = vmatpush2.bf16.msra.mxu0 0
    %838 = vmatprep.subr.bf16.mxu0 0
    %839 = vmatpush2.bf16.msra.mxu0 0
    %840 = vmatprep.subr.bf16.mxu0 0
    %841 = vmatpush2.bf16.msra.mxu0 0
    %842 = vmatprep.subr.bf16.mxu0 0
    %843 = vmatpush2.bf16.msra.mxu0 0
    %844 = vmatprep.mubr.bf16.mxu0 0
    %845 = vmatmul.mubr.bf16.gmra.mxu0 %v770
    %v846 = vpop.f32.mrf.mxu0
    %v847 = vadd.f32 0.0, %v846
    %v848 = vpop.f32.mrf.mxu0
    %v849 = vpop.f32.mrf.mxu0
    %v850 = vpop.f32.mrf.mxu0
    %851 = vdwg.mxu0
    %v852 = vadd.f32 %v238, %v807
    %v853 = vxor.u32 %v852, 2147483648
    %v854 = vmul.f32 %v853, 1.442695
    %v855 = vpow.pop %v854
    %v856 = vadd.f32 %v855, 1.0
    %v857 = vrcp.pop %v856
    %v858 = vmul.f32 1.0, %v857
    %v859 = vadd.f32 %v326, %v847
    %v860 = vxor.u32 %v859, 2147483648
    %v861 = vmul.f32 %v860, 1.442695
    %v862 = vpow.pop %v861
    %v863 = vadd.f32 %v862, 1.0
    %v864 = vrcp.pop %v863
    %v865 = vmul.f32 1.0, %v864
    %866 = vmatprep.subr.bf16.mxu0 0
    %867 = vmatpush1.bf16.msra.mxu0 0
    %868 = vmatprep.subr.bf16.mxu0 0
    %869 = vmatpush1.bf16.msra.mxu0 0
    %870 = vmatprep.subr.bf16.mxu0 0
    %871 = vmatpush1.bf16.msra.mxu0 0
    %872 = vmatprep.subr.bf16.mxu0 0
    %873 = vmatpush1.bf16.msra.mxu0 0
    %874 = vmatprep.subr.bf16.mxu0 0
    %875 = vmatpush1.bf16.msra.mxu0 0
    %876 = vmatprep.subr.bf16.mxu0 0
    %877 = vmatpush1.bf16.msra.mxu0 0
    %878 = vmatprep.subr.bf16.mxu0 0
    %879 = vmatpush1.bf16.msra.mxu0 %v573
    %880 = vmatprep.subr.bf16.mxu0 0
    %881 = vmatpush1.bf16.msra.mxu0 %v572
    %882 = vmatprep.subr.bf16.mxu0 0
    %883 = vmatpush2.bf16.msra.mxu0 0
    %884 = vmatprep.subr.bf16.mxu0 0
    %885 = vmatpush2.bf16.msra.mxu0 0
    %886 = vmatprep.subr.bf16.mxu0 0
    %887 = vmatpush2.bf16.msra.mxu0 0
    %888 = vmatprep.subr.bf16.mxu0 0
    %889 = vmatpush2.bf16.msra.mxu0 0
    %890 = vmatprep.subr.bf16.mxu0 0
    %891 = vmatpush2.bf16.msra.mxu0 0
    %892 = vmatprep.subr.bf16.mxu0 0
    %893 = vmatpush2.bf16.msra.mxu0 0
    %894 = vmatprep.subr.bf16.mxu0 0
    %895 = vmatpush2.bf16.msra.mxu0 0
    %896 = vmatprep.subr.bf16.mxu0 0
    %897 = vmatpush2.bf16.msra.mxu0 0
    %898 = vmatprep.mubr.bf16.mxu0 0
    %899 = vmatmul.mubr.bf16.gmra.mxu0 %v770
    %v900 = vpop.f32.mrf.mxu0
    %v901 = vadd.f32 %v441, %v900
    %v902 = vpop.f32.mrf.mxu0
    %v903 = vpop.f32.mrf.mxu0
    %v904 = vpop.f32.mrf.mxu0
    %905 = vdwg.mxu0
    %v906 = vmul.f32 %v858, %v901
    %v907 = vadd.f32 %v414, %v906
    %v908 = vtanh.pop %v907
    %v909 = vsub.f32 1.0, %v865
    %v910 = vmul.f32 %v909, %v908
    %v911 = vmul.f32 %v865, %v767
    %v912 = vadd.f32 %v910, %v911
    %v913 = vpack.c.bf16 %v912, %v912
    %v915 = vsel %vm182, %v913, 0
    %917 = vmatprep.subr.bf16.mxu0 0
    %918 = vmatpush1.bf16.msra.mxu0 0
    %919 = vmatprep.subr.bf16.mxu0 0
    %920 = vmatpush1.bf16.msra.mxu0 0
    %921 = vmatprep.subr.bf16.mxu0 0
    %922 = vmatpush1.bf16.msra.mxu0 0
    %923 = vmatprep.subr.bf16.mxu0 0
    %924 = vmatpush1.bf16.msra.mxu0 0
    %925 = vmatprep.subr.bf16.mxu0 0
    %926 = vmatpush1.bf16.msra.mxu0 0
    %927 = vmatprep.subr.bf16.mxu0 0
    %928 = vmatpush1.bf16.msra.mxu0 0
    %929 = vmatprep.subr.bf16.mxu0 0
    %930 = vmatpush1.bf16.msra.mxu0 %v452
    %931 = vmatprep.subr.bf16.mxu0 0
    %932 = vmatpush1.bf16.msra.mxu0 %v451
    %933 = vmatprep.subr.bf16.mxu0 0
    %934 = vmatpush2.bf16.msra.mxu0 0
    %935 = vmatprep.subr.bf16.mxu0 0
    %936 = vmatpush2.bf16.msra.mxu0 0
    %937 = vmatprep.subr.bf16.mxu0 0
    %938 = vmatpush2.bf16.msra.mxu0 0
    %939 = vmatprep.subr.bf16.mxu0 0
    %940 = vmatpush2.bf16.msra.mxu0 0
    %941 = vmatprep.subr.bf16.mxu0 0
    %942 = vmatpush2.bf16.msra.mxu0 0
    %943 = vmatprep.subr.bf16.mxu0 0
    %944 = vmatpush2.bf16.msra.mxu0 0
    %945 = vmatprep.subr.bf16.mxu0 0
    %946 = vmatpush2.bf16.msra.mxu0 0
    %947 = vmatprep.subr.bf16.mxu0 0
    %948 = vmatpush2.bf16.msra.mxu0 0
    %949 = vmatprep.mubr.bf16.mxu0 0
    %950 = vmatmul.mubr.bf16.gmra.mxu0 %v915
    %v951 = vpop.f32.mrf.mxu0
    %v952 = vadd.f32 0.0, %v951
    %v953 = vpop.f32.mrf.mxu0
    %v954 = vpop.f32.mrf.mxu0
    %v955 = vpop.f32.mrf.mxu0
    %956 = vdwg.mxu0
    %957 = vmatprep.subr.bf16.mxu0 0
    %958 = vmatpush1.bf16.msra.mxu0 0
    %959 = vmatprep.subr.bf16.mxu0 0
    %960 = vmatpush1.bf16.msra.mxu0 0
    %961 = vmatprep.subr.bf16.mxu0 0
    %962 = vmatpush1.bf16.msra.mxu0 0
    %963 = vmatprep.subr.bf16.mxu0 0
    %964 = vmatpush1.bf16.msra.mxu0 0
    %965 = vmatprep.subr.bf16.mxu0 0
    %966 = vmatpush1.bf16.msra.mxu0 0
    %967 = vmatprep.subr.bf16.mxu0 0
    %968 = vmatpush1.bf16.msra.mxu0 0
    %969 = vmatprep.subr.bf16.mxu0 0
    %970 = vmatpush1.bf16.msra.mxu0 %v507
    %971 = vmatprep.subr.bf16.mxu0 0
    %972 = vmatpush1.bf16.msra.mxu0 %v506
    %973 = vmatprep.subr.bf16.mxu0 0
    %974 = vmatpush2.bf16.msra.mxu0 0
    %975 = vmatprep.subr.bf16.mxu0 0
    %976 = vmatpush2.bf16.msra.mxu0 0
    %977 = vmatprep.subr.bf16.mxu0 0
    %978 = vmatpush2.bf16.msra.mxu0 0
    %979 = vmatprep.subr.bf16.mxu0 0
    %980 = vmatpush2.bf16.msra.mxu0 0
    %981 = vmatprep.subr.bf16.mxu0 0
    %982 = vmatpush2.bf16.msra.mxu0 0
    %983 = vmatprep.subr.bf16.mxu0 0
    %984 = vmatpush2.bf16.msra.mxu0 0
    %985 = vmatprep.subr.bf16.mxu0 0
    %986 = vmatpush2.bf16.msra.mxu0 0
    %987 = vmatprep.subr.bf16.mxu0 0
    %988 = vmatpush2.bf16.msra.mxu0 0
    %989 = vmatprep.mubr.bf16.mxu0 0
    %990 = vmatmul.mubr.bf16.gmra.mxu0 %v915
    %v991 = vpop.f32.mrf.mxu0
    %v992 = vadd.f32 0.0, %v991
    %v993 = vpop.f32.mrf.mxu0
    %v994 = vpop.f32.mrf.mxu0
    %v995 = vpop.f32.mrf.mxu0
    %996 = vdwg.mxu0
    %v997 = vadd.f32 %v241, %v952
    %v998 = vxor.u32 %v997, 2147483648
    %v999 = vmul.f32 %v998, 1.442695
    %v1000 = vpow.pop %v999
    %v1001 = vadd.f32 %v1000, 1.0
    %v1002 = vrcp.pop %v1001
    %v1003 = vmul.f32 1.0, %v1002
    %v1004 = vadd.f32 %v329, %v992
    %v1005 = vxor.u32 %v1004, 2147483648
    %v1006 = vmul.f32 %v1005, 1.442695
    %v1007 = vpow.pop %v1006
    %v1008 = vadd.f32 %v1007, 1.0
    %v1009 = vrcp.pop %v1008
    %v1010 = vmul.f32 1.0, %v1009
    %1011 = vmatprep.subr.bf16.mxu0 0
    %1012 = vmatpush1.bf16.msra.mxu0 0
    %1013 = vmatprep.subr.bf16.mxu0 0
    %1014 = vmatpush1.bf16.msra.mxu0 0
    %1015 = vmatprep.subr.bf16.mxu0 0
    %1016 = vmatpush1.bf16.msra.mxu0 0
    %1017 = vmatprep.subr.bf16.mxu0 0
    %1018 = vmatpush1.bf16.msra.mxu0 0
    %1019 = vmatprep.subr.bf16.mxu0 0
    %1020 = vmatpush1.bf16.msra.mxu0 0
    %1021 = vmatprep.subr.bf16.mxu0 0
    %1022 = vmatpush1.bf16.msra.mxu0 0
    %1023 = vmatprep.subr.bf16.mxu0 0
    %1024 = vmatpush1.bf16.msra.mxu0 %v573
    %1025 = vmatprep.subr.bf16.mxu0 0
    %1026 = vmatpush1.bf16.msra.mxu0 %v572
    %1027 = vmatprep.subr.bf16.mxu0 0
    %1028 = vmatpush2.bf16.msra.mxu0 0
    %1029 = vmatprep.subr.bf16.mxu0 0
    %1030 = vmatpush2.bf16.msra.mxu0 0
    %1031 = vmatprep.subr.bf16.mxu0 0
    %1032 = vmatpush2.bf16.msra.mxu0 0
    %1033 = vmatprep.subr.bf16.mxu0 0
    %1034 = vmatpush2.bf16.msra.mxu0 0
    %1035 = vmatprep.subr.bf16.mxu0 0
    %1036 = vmatpush2.bf16.msra.mxu0 0
    %1037 = vmatprep.subr.bf16.mxu0 0
    %1038 = vmatpush2.bf16.msra.mxu0 0
    %1039 = vmatprep.subr.bf16.mxu0 0
    %1040 = vmatpush2.bf16.msra.mxu0 0
    %1041 = vmatprep.subr.bf16.mxu0 0
    %1042 = vmatpush2.bf16.msra.mxu0 0
    %1043 = vmatprep.mubr.bf16.mxu0 0
    %1044 = vmatmul.mubr.bf16.gmra.mxu0 %v915
    %v1045 = vpop.f32.mrf.mxu0
    %v1046 = vadd.f32 %v441, %v1045
    %v1047 = vpop.f32.mrf.mxu0
    %v1048 = vpop.f32.mrf.mxu0
    %v1049 = vpop.f32.mrf.mxu0
    %1050 = vdwg.mxu0
    %v1051 = vmul.f32 %v1003, %v1046
    %v1052 = vadd.f32 %v417, %v1051
    %v1053 = vtanh.pop %v1052
    %v1054 = vsub.f32 1.0, %v1010
    %v1055 = vmul.f32 %v1054, %v1053
    %v1056 = vmul.f32 %v1010, %v912
    %v1057 = vadd.f32 %v1055, %v1056
    %v1058 = vpack.c.bf16 %v1057, %v1057
    %v1060 = vsel %vm182, %v1058, 0
    %1062 = vmatprep.subr.bf16.mxu0 0
    %1063 = vmatpush1.bf16.msra.mxu0 0
    %1064 = vmatprep.subr.bf16.mxu0 0
    %1065 = vmatpush1.bf16.msra.mxu0 0
    %1066 = vmatprep.subr.bf16.mxu0 0
    %1067 = vmatpush1.bf16.msra.mxu0 0
    %1068 = vmatprep.subr.bf16.mxu0 0
    %1069 = vmatpush1.bf16.msra.mxu0 0
    %1070 = vmatprep.subr.bf16.mxu0 0
    %1071 = vmatpush1.bf16.msra.mxu0 0
    %1072 = vmatprep.subr.bf16.mxu0 0
    %1073 = vmatpush1.bf16.msra.mxu0 0
    %1074 = vmatprep.subr.bf16.mxu0 0
    %1075 = vmatpush1.bf16.msra.mxu0 %v452
    %1076 = vmatprep.subr.bf16.mxu0 0
    %1077 = vmatpush1.bf16.msra.mxu0 %v451
    %1078 = vmatprep.subr.bf16.mxu0 0
    %1079 = vmatpush2.bf16.msra.mxu0 0
    %1080 = vmatprep.subr.bf16.mxu0 0
    %1081 = vmatpush2.bf16.msra.mxu0 0
    %1082 = vmatprep.subr.bf16.mxu0 0
    %1083 = vmatpush2.bf16.msra.mxu0 0
    %1084 = vmatprep.subr.bf16.mxu0 0
    %1085 = vmatpush2.bf16.msra.mxu0 0
    %1086 = vmatprep.subr.bf16.mxu0 0
    %1087 = vmatpush2.bf16.msra.mxu0 0
    %1088 = vmatprep.subr.bf16.mxu0 0
    %1089 = vmatpush2.bf16.msra.mxu0 0
    %1090 = vmatprep.subr.bf16.mxu0 0
    %1091 = vmatpush2.bf16.msra.mxu0 0
    %1092 = vmatprep.subr.bf16.mxu0 0
    %1093 = vmatpush2.bf16.msra.mxu0 0
    %1094 = vmatprep.mubr.bf16.mxu0 0
    %1095 = vmatmul.mubr.bf16.gmra.mxu0 %v1060
    %v1096 = vpop.f32.mrf.mxu0
    %v1097 = vadd.f32 0.0, %v1096
    %v1098 = vpop.f32.mrf.mxu0
    %v1099 = vpop.f32.mrf.mxu0
    %v1100 = vpop.f32.mrf.mxu0
    %1101 = vdwg.mxu0
    %1102 = vmatprep.subr.bf16.mxu0 0
    %1103 = vmatpush1.bf16.msra.mxu0 0
    %1104 = vmatprep.subr.bf16.mxu0 0
    %1105 = vmatpush1.bf16.msra.mxu0 0
    %1106 = vmatprep.subr.bf16.mxu0 0
    %1107 = vmatpush1.bf16.msra.mxu0 0
    %1108 = vmatprep.subr.bf16.mxu0 0
    %1109 = vmatpush1.bf16.msra.mxu0 0
    %1110 = vmatprep.subr.bf16.mxu0 0
    %1111 = vmatpush1.bf16.msra.mxu0 0
    %1112 = vmatprep.subr.bf16.mxu0 0
    %1113 = vmatpush1.bf16.msra.mxu0 0
    %1114 = vmatprep.subr.bf16.mxu0 0
    %1115 = vmatpush1.bf16.msra.mxu0 %v507
    %1116 = vmatprep.subr.bf16.mxu0 0
    %1117 = vmatpush1.bf16.msra.mxu0 %v506
    %1118 = vmatprep.subr.bf16.mxu0 0
    %1119 = vmatpush2.bf16.msra.mxu0 0
    %1120 = vmatprep.subr.bf16.mxu0 0
    %1121 = vmatpush2.bf16.msra.mxu0 0
    %1122 = vmatprep.subr.bf16.mxu0 0
    %1123 = vmatpush2.bf16.msra.mxu0 0
    %1124 = vmatprep.subr.bf16.mxu0 0
    %1125 = vmatpush2.bf16.msra.mxu0 0
    %1126 = vmatprep.subr.bf16.mxu0 0
    %1127 = vmatpush2.bf16.msra.mxu0 0
    %1128 = vmatprep.subr.bf16.mxu0 0
    %1129 = vmatpush2.bf16.msra.mxu0 0
    %1130 = vmatprep.subr.bf16.mxu0 0
    %1131 = vmatpush2.bf16.msra.mxu0 0
    %1132 = vmatprep.subr.bf16.mxu0 0
    %1133 = vmatpush2.bf16.msra.mxu0 0
    %1134 = vmatprep.mubr.bf16.mxu0 0
    %1135 = vmatmul.mubr.bf16.gmra.mxu0 %v1060
    %v1136 = vpop.f32.mrf.mxu0
    %v1137 = vadd.f32 0.0, %v1136
    %v1138 = vpop.f32.mrf.mxu0
    %v1139 = vpop.f32.mrf.mxu0
    %v1140 = vpop.f32.mrf.mxu0
    %1141 = vdwg.mxu0
    %v1142 = vadd.f32 %v246, %v1097
    %v1143 = vxor.u32 %v1142, 2147483648
    %v1144 = vmul.f32 %v1143, 1.442695
    %v1145 = vpow.pop %v1144
    %v1146 = vadd.f32 %v1145, 1.0
    %v1147 = vrcp.pop %v1146
    %v1148 = vmul.f32 1.0, %v1147
    %v1149 = vadd.f32 %v334, %v1137
    %v1150 = vxor.u32 %v1149, 2147483648
    %v1151 = vmul.f32 %v1150, 1.442695
    %v1152 = vpow.pop %v1151
    %v1153 = vadd.f32 %v1152, 1.0
    %v1154 = vrcp.pop %v1153
    %v1155 = vmul.f32 1.0, %v1154
    %1156 = vmatprep.subr.bf16.mxu0 0
    %1157 = vmatpush1.bf16.msra.mxu0 0
    %1158 = vmatprep.subr.bf16.mxu0 0
    %1159 = vmatpush1.bf16.msra.mxu0 0
    %1160 = vmatprep.subr.bf16.mxu0 0
    %1161 = vmatpush1.bf16.msra.mxu0 0
    %1162 = vmatprep.subr.bf16.mxu0 0
    %1163 = vmatpush1.bf16.msra.mxu0 0
    %1164 = vmatprep.subr.bf16.mxu0 0
    %1165 = vmatpush1.bf16.msra.mxu0 0
    %1166 = vmatprep.subr.bf16.mxu0 0
    %1167 = vmatpush1.bf16.msra.mxu0 0
    %1168 = vmatprep.subr.bf16.mxu0 0
    %1169 = vmatpush1.bf16.msra.mxu0 %v573
    %1170 = vmatprep.subr.bf16.mxu0 0
    %1171 = vmatpush1.bf16.msra.mxu0 %v572
    %1172 = vmatprep.subr.bf16.mxu0 0
    %1173 = vmatpush2.bf16.msra.mxu0 0
    %1174 = vmatprep.subr.bf16.mxu0 0
    %1175 = vmatpush2.bf16.msra.mxu0 0
    %1176 = vmatprep.subr.bf16.mxu0 0
    %1177 = vmatpush2.bf16.msra.mxu0 0
    %1178 = vmatprep.subr.bf16.mxu0 0
    %1179 = vmatpush2.bf16.msra.mxu0 0
    %1180 = vmatprep.subr.bf16.mxu0 0
    %1181 = vmatpush2.bf16.msra.mxu0 0
    %1182 = vmatprep.subr.bf16.mxu0 0
    %1183 = vmatpush2.bf16.msra.mxu0 0
    %1184 = vmatprep.subr.bf16.mxu0 0
    %1185 = vmatpush2.bf16.msra.mxu0 0
    %1186 = vmatprep.subr.bf16.mxu0 0
    %1187 = vmatpush2.bf16.msra.mxu0 0
    %1188 = vmatprep.mubr.bf16.mxu0 0
    %1189 = vmatmul.mubr.bf16.gmra.mxu0 %v1060
    %v1190 = vpop.f32.mrf.mxu0
    %v1191 = vadd.f32 %v441, %v1190
    %v1192 = vpop.f32.mrf.mxu0
    %v1193 = vpop.f32.mrf.mxu0
    %v1194 = vpop.f32.mrf.mxu0
    %1195 = vdwg.mxu0
    %v1196 = vmul.f32 %v1148, %v1191
    %v1197 = vadd.f32 %v422, %v1196
    %v1198 = vtanh.pop %v1197
    %v1199 = vsub.f32 1.0, %v1155
    %v1200 = vmul.f32 %v1199, %v1198
    %v1201 = vmul.f32 %v1155, %v1057
    %v1202 = vadd.f32 %v1200, %v1201
    %v1203 = vpack.c.bf16 %v1202, %v1202
    %v1205 = vsel %vm182, %v1203, 0
    %1207 = vmatprep.subr.bf16.mxu0 0
    %1208 = vmatpush1.bf16.msra.mxu0 0
    %1209 = vmatprep.subr.bf16.mxu0 0
    %1210 = vmatpush1.bf16.msra.mxu0 0
    %1211 = vmatprep.subr.bf16.mxu0 0
    %1212 = vmatpush1.bf16.msra.mxu0 0
    %1213 = vmatprep.subr.bf16.mxu0 0
    %1214 = vmatpush1.bf16.msra.mxu0 0
    %1215 = vmatprep.subr.bf16.mxu0 0
    %1216 = vmatpush1.bf16.msra.mxu0 0
    %1217 = vmatprep.subr.bf16.mxu0 0
    %1218 = vmatpush1.bf16.msra.mxu0 0
    %1219 = vmatprep.subr.bf16.mxu0 0
    %1220 = vmatpush1.bf16.msra.mxu0 %v452
    %1221 = vmatprep.subr.bf16.mxu0 0
    %1222 = vmatpush1.bf16.msra.mxu0 %v451
    %1223 = vmatprep.subr.bf16.mxu0 0
    %1224 = vmatpush2.bf16.msra.mxu0 0
    %1225 = vmatprep.subr.bf16.mxu0 0
    %1226 = vmatpush2.bf16.msra.mxu0 0
    %1227 = vmatprep.subr.bf16.mxu0 0
    %1228 = vmatpush2.bf16.msra.mxu0 0
    %1229 = vmatprep.subr.bf16.mxu0 0
    %1230 = vmatpush2.bf16.msra.mxu0 0
    %1231 = vmatprep.subr.bf16.mxu0 0
    %1232 = vmatpush2.bf16.msra.mxu0 0
    %1233 = vmatprep.subr.bf16.mxu0 0
    %1234 = vmatpush2.bf16.msra.mxu0 0
    %1235 = vmatprep.subr.bf16.mxu0 0
    %1236 = vmatpush2.bf16.msra.mxu0 0
    %1237 = vmatprep.subr.bf16.mxu0 0
    %1238 = vmatpush2.bf16.msra.mxu0 0
    %1239 = vmatprep.mubr.bf16.mxu0 0
    %1240 = vmatmul.mubr.bf16.gmra.mxu0 %v1205
    %v1241 = vpop.f32.mrf.mxu0
    %v1242 = vadd.f32 0.0, %v1241
    %v1243 = vpop.f32.mrf.mxu0
    %v1244 = vpop.f32.mrf.mxu0
    %v1245 = vpop.f32.mrf.mxu0
    %1246 = vdwg.mxu0
    %1247 = vmatprep.subr.bf16.mxu0 0
    %1248 = vmatpush1.bf16.msra.mxu0 0
    %1249 = vmatprep.subr.bf16.mxu0 0
    %1250 = vmatpush1.bf16.msra.mxu0 0
    %1251 = vmatprep.subr.bf16.mxu0 0
    %1252 = vmatpush1.bf16.msra.mxu0 0
    %1253 = vmatprep.subr.bf16.mxu0 0
    %1254 = vmatpush1.bf16.msra.mxu0 0
    %1255 = vmatprep.subr.bf16.mxu0 0
    %1256 = vmatpush1.bf16.msra.mxu0 0
    %1257 = vmatprep.subr.bf16.mxu0 0
    %1258 = vmatpush1.bf16.msra.mxu0 0
    %1259 = vmatprep.subr.bf16.mxu0 0
    %1260 = vmatpush1.bf16.msra.mxu0 %v507
    %1261 = vmatprep.subr.bf16.mxu0 0
    %1262 = vmatpush1.bf16.msra.mxu0 %v506
    %1263 = vmatprep.subr.bf16.mxu0 0
    %1264 = vmatpush2.bf16.msra.mxu0 0
    %1265 = vmatprep.subr.bf16.mxu0 0
    %1266 = vmatpush2.bf16.msra.mxu0 0
    %1267 = vmatprep.subr.bf16.mxu0 0
    %1268 = vmatpush2.bf16.msra.mxu0 0
    %1269 = vmatprep.subr.bf16.mxu0 0
    %1270 = vmatpush2.bf16.msra.mxu0 0
    %1271 = vmatprep.subr.bf16.mxu0 0
    %1272 = vmatpush2.bf16.msra.mxu0 0
    %1273 = vmatprep.subr.bf16.mxu0 0
    %1274 = vmatpush2.bf16.msra.mxu0 0
    %1275 = vmatprep.subr.bf16.mxu0 0
    %1276 = vmatpush2.bf16.msra.mxu0 0
    %1277 = vmatprep.subr.bf16.mxu0 0
    %1278 = vmatpush2.bf16.msra.mxu0 0
    %1279 = vmatprep.mubr.bf16.mxu0 0
    %1280 = vmatmul.mubr.bf16.gmra.mxu0 %v1205
    %v1281 = vpop.f32.mrf.mxu0
    %v1282 = vadd.f32 0.0, %v1281
    %v1283 = vpop.f32.mrf.mxu0
    %v1284 = vpop.f32.mrf.mxu0
    %v1285 = vpop.f32.mrf.mxu0
    %1286 = vdwg.mxu0
    %v1287 = vadd.f32 %v249, %v1242
    %v1288 = vxor.u32 %v1287, 2147483648
    %v1289 = vmul.f32 %v1288, 1.442695
    %v1290 = vpow.pop %v1289
    %v1291 = vadd.f32 %v1290, 1.0
    %v1292 = vrcp.pop %v1291
    %v1293 = vmul.f32 1.0, %v1292
    %v1294 = vadd.f32 %v337, %v1282
    %v1295 = vxor.u32 %v1294, 2147483648
    %v1296 = vmul.f32 %v1295, 1.442695
    %v1297 = vpow.pop %v1296
    %v1298 = vadd.f32 %v1297, 1.0
    %v1299 = vrcp.pop %v1298
    %v1300 = vmul.f32 1.0, %v1299
    %1301 = vmatprep.subr.bf16.mxu0 0
    %1302 = vmatpush1.bf16.msra.mxu0 0
    %1303 = vmatprep.subr.bf16.mxu0 0
    %1304 = vmatpush1.bf16.msra.mxu0 0
    %1305 = vmatprep.subr.bf16.mxu0 0
    %1306 = vmatpush1.bf16.msra.mxu0 0
    %1307 = vmatprep.subr.bf16.mxu0 0
    %1308 = vmatpush1.bf16.msra.mxu0 0
    %1309 = vmatprep.subr.bf16.mxu0 0
    %1310 = vmatpush1.bf16.msra.mxu0 0
    %1311 = vmatprep.subr.bf16.mxu0 0
    %1312 = vmatpush1.bf16.msra.mxu0 0
    %1313 = vmatprep.subr.bf16.mxu0 0
    %1314 = vmatpush1.bf16.msra.mxu0 %v573
    %1315 = vmatprep.subr.bf16.mxu0 0
    %1316 = vmatpush1.bf16.msra.mxu0 %v572
    %1317 = vmatprep.subr.bf16.mxu0 0
    %1318 = vmatpush2.bf16.msra.mxu0 0
    %1319 = vmatprep.subr.bf16.mxu0 0
    %1320 = vmatpush2.bf16.msra.mxu0 0
    %1321 = vmatprep.subr.bf16.mxu0 0
    %1322 = vmatpush2.bf16.msra.mxu0 0
    %1323 = vmatprep.subr.bf16.mxu0 0
    %1324 = vmatpush2.bf16.msra.mxu0 0
    %1325 = vmatprep.subr.bf16.mxu0 0
    %1326 = vmatpush2.bf16.msra.mxu0 0
    %1327 = vmatprep.subr.bf16.mxu0 0
    %1328 = vmatpush2.bf16.msra.mxu0 0
    %1329 = vmatprep.subr.bf16.mxu0 0
    %1330 = vmatpush2.bf16.msra.mxu0 0
    %1331 = vmatprep.subr.bf16.mxu0 0
    %1332 = vmatpush2.bf16.msra.mxu0 0
    %1333 = vmatprep.mubr.bf16.mxu0 0
    %1334 = vmatmul.mubr.bf16.gmra.mxu0 %v1205
    %v1335 = vpop.f32.mrf.mxu0
    %v1336 = vadd.f32 %v441, %v1335
    %v1337 = vpop.f32.mrf.mxu0
    %v1338 = vpop.f32.mrf.mxu0
    %v1339 = vpop.f32.mrf.mxu0
    %1340 = vdwg.mxu0
    %v1341 = vmul.f32 %v1293, %v1336
    %v1342 = vadd.f32 %v425, %v1341
    %v1343 = vtanh.pop %v1342
    %v1344 = vsub.f32 1.0, %v1300
    %v1345 = vmul.f32 %v1344, %v1343
    %v1346 = vmul.f32 %v1300, %v1202
    %v1347 = vadd.f32 %v1345, %v1346
    %v1348 = vpack.c.bf16 %v1347, %v1347
    %v1350 = vsel %vm182, %v1348, 0
    %1352 = vmatprep.subr.bf16.mxu0 0
    %1353 = vmatpush1.bf16.msra.mxu0 0
    %1354 = vmatprep.subr.bf16.mxu0 0
    %1355 = vmatpush1.bf16.msra.mxu0 0
    %1356 = vmatprep.subr.bf16.mxu0 0
    %1357 = vmatpush1.bf16.msra.mxu0 0
    %1358 = vmatprep.subr.bf16.mxu0 0
    %1359 = vmatpush1.bf16.msra.mxu0 0
    %1360 = vmatprep.subr.bf16.mxu0 0
    %1361 = vmatpush1.bf16.msra.mxu0 0
    %1362 = vmatprep.subr.bf16.mxu0 0
    %1363 = vmatpush1.bf16.msra.mxu0 0
    %1364 = vmatprep.subr.bf16.mxu0 0
    %1365 = vmatpush1.bf16.msra.mxu0 %v452
    %1366 = vmatprep.subr.bf16.mxu0 0
    %1367 = vmatpush1.bf16.msra.mxu0 %v451
    %1368 = vmatprep.subr.bf16.mxu0 0
    %1369 = vmatpush2.bf16.msra.mxu0 0
    %1370 = vmatprep.subr.bf16.mxu0 0
    %1371 = vmatpush2.bf16.msra.mxu0 0
    %1372 = vmatprep.subr.bf16.mxu0 0
    %1373 = vmatpush2.bf16.msra.mxu0 0
    %1374 = vmatprep.subr.bf16.mxu0 0
    %1375 = vmatpush2.bf16.msra.mxu0 0
    %1376 = vmatprep.subr.bf16.mxu0 0
    %1377 = vmatpush2.bf16.msra.mxu0 0
    %1378 = vmatprep.subr.bf16.mxu0 0
    %1379 = vmatpush2.bf16.msra.mxu0 0
    %1380 = vmatprep.subr.bf16.mxu0 0
    %1381 = vmatpush2.bf16.msra.mxu0 0
    %1382 = vmatprep.subr.bf16.mxu0 0
    %1383 = vmatpush2.bf16.msra.mxu0 0
    %1384 = vmatprep.mubr.bf16.mxu0 0
    %1385 = vmatmul.mubr.bf16.gmra.mxu0 %v1350
    %v1386 = vpop.f32.mrf.mxu0
    %v1387 = vadd.f32 0.0, %v1386
    %v1388 = vpop.f32.mrf.mxu0
    %v1389 = vpop.f32.mrf.mxu0
    %v1390 = vpop.f32.mrf.mxu0
    %1391 = vdwg.mxu0
    %1392 = vmatprep.subr.bf16.mxu0 0
    %1393 = vmatpush1.bf16.msra.mxu0 0
    %1394 = vmatprep.subr.bf16.mxu0 0
    %1395 = vmatpush1.bf16.msra.mxu0 0
    %1396 = vmatprep.subr.bf16.mxu0 0
    %1397 = vmatpush1.bf16.msra.mxu0 0
    %1398 = vmatprep.subr.bf16.mxu0 0
    %1399 = vmatpush1.bf16.msra.mxu0 0
    %1400 = vmatprep.subr.bf16.mxu0 0
    %1401 = vmatpush1.bf16.msra.mxu0 0
    %1402 = vmatprep.subr.bf16.mxu0 0
    %1403 = vmatpush1.bf16.msra.mxu0 0
    %1404 = vmatprep.subr.bf16.mxu0 0
    %1405 = vmatpush1.bf16.msra.mxu0 %v507
    %1406 = vmatprep.subr.bf16.mxu0 0
    %1407 = vmatpush1.bf16.msra.mxu0 %v506
    %1408 = vmatprep.subr.bf16.mxu0 0
    %1409 = vmatpush2.bf16.msra.mxu0 0
    %1410 = vmatprep.subr.bf16.mxu0 0
    %1411 = vmatpush2.bf16.msra.mxu0 0
    %1412 = vmatprep.subr.bf16.mxu0 0
    %1413 = vmatpush2.bf16.msra.mxu0 0
    %1414 = vmatprep.subr.bf16.mxu0 0
    %1415 = vmatpush2.bf16.msra.mxu0 0
    %1416 = vmatprep.subr.bf16.mxu0 0
    %1417 = vmatpush2.bf16.msra.mxu0 0
    %1418 = vmatprep.subr.bf16.mxu0 0
    %1419 = vmatpush2.bf16.msra.mxu0 0
    %1420 = vmatprep.subr.bf16.mxu0 0
    %1421 = vmatpush2.bf16.msra.mxu0 0
    %1422 = vmatprep.subr.bf16.mxu0 0
    %1423 = vmatpush2.bf16.msra.mxu0 0
    %1424 = vmatprep.mubr.bf16.mxu0 0
    %1425 = vmatmul.mubr.bf16.gmra.mxu0 %v1350
    %v1426 = vpop.f32.mrf.mxu0
    %v1427 = vadd.f32 0.0, %v1426
    %v1428 = vpop.f32.mrf.mxu0
    %v1429 = vpop.f32.mrf.mxu0
    %v1430 = vpop.f32.mrf.mxu0
    %1431 = vdwg.mxu0
    %v1432 = vadd.f32 %v254, %v1387
    %v1433 = vxor.u32 %v1432, 2147483648
    %v1434 = vmul.f32 %v1433, 1.442695
    %v1435 = vpow.pop %v1434
    %v1436 = vadd.f32 %v1435, 1.0
    %v1437 = vrcp.pop %v1436
    %v1438 = vmul.f32 1.0, %v1437
    %v1439 = vadd.f32 %v342, %v1427
    %v1440 = vxor.u32 %v1439, 2147483648
    %v1441 = vmul.f32 %v1440, 1.442695
    %v1442 = vpow.pop %v1441
    %v1443 = vadd.f32 %v1442, 1.0
    %v1444 = vrcp.pop %v1443
    %v1445 = vmul.f32 1.0, %v1444
    %1446 = vmatprep.subr.bf16.mxu0 0
    %1447 = vmatpush1.bf16.msra.mxu0 0
    %1448 = vmatprep.subr.bf16.mxu0 0
    %1449 = vmatpush1.bf16.msra.mxu0 0
    %1450 = vmatprep.subr.bf16.mxu0 0
    %1451 = vmatpush1.bf16.msra.mxu0 0
    %1452 = vmatprep.subr.bf16.mxu0 0
    %1453 = vmatpush1.bf16.msra.mxu0 0
    %1454 = vmatprep.subr.bf16.mxu0 0
    %1455 = vmatpush1.bf16.msra.mxu0 0
    %1456 = vmatprep.subr.bf16.mxu0 0
    %1457 = vmatpush1.bf16.msra.mxu0 0
    %1458 = vmatprep.subr.bf16.mxu0 0
    %1459 = vmatpush1.bf16.msra.mxu0 %v573
    %1460 = vmatprep.subr.bf16.mxu0 0
    %1461 = vmatpush1.bf16.msra.mxu0 %v572
    %1462 = vmatprep.subr.bf16.mxu0 0
    %1463 = vmatpush2.bf16.msra.mxu0 0
    %1464 = vmatprep.subr.bf16.mxu0 0
    %1465 = vmatpush2.bf16.msra.mxu0 0
    %1466 = vmatprep.subr.bf16.mxu0 0
    %1467 = vmatpush2.bf16.msra.mxu0 0
    %1468 = vmatprep.subr.bf16.mxu0 0
    %1469 = vmatpush2.bf16.msra.mxu0 0
    %1470 = vmatprep.subr.bf16.mxu0 0
    %1471 = vmatpush2.bf16.msra.mxu0 0
    %1472 = vmatprep.subr.bf16.mxu0 0
    %1473 = vmatpush2.bf16.msra.mxu0 0
    %1474 = vmatprep.subr.bf16.mxu0 0
    %1475 = vmatpush2.bf16.msra.mxu0 0
    %1476 = vmatprep.subr.bf16.mxu0 0
    %1477 = vmatpush2.bf16.msra.mxu0 0
    %1478 = vmatprep.mubr.bf16.mxu0 0
    %1479 = vmatmul.mubr.bf16.gmra.mxu0 %v1350
    %v1480 = vpop.f32.mrf.mxu0
    %v1481 = vadd.f32 %v441, %v1480
    %v1482 = vpop.f32.mrf.mxu0
    %v1483 = vpop.f32.mrf.mxu0
    %v1484 = vpop.f32.mrf.mxu0
    %1485 = vdwg.mxu0
    %v1486 = vmul.f32 %v1438, %v1481
    %v1487 = vadd.f32 %v430, %v1486
    %v1488 = vtanh.pop %v1487
    %v1489 = vsub.f32 1.0, %v1445
    %v1490 = vmul.f32 %v1489, %v1488
    %v1491 = vmul.f32 %v1445, %v1347
    %v1492 = vadd.f32 %v1490, %v1491
    %v1493 = vpack.c.bf16 %v1492, %v1492
    %v1495 = vsel %vm182, %v1493, 0
    %1497 = vmatprep.subr.bf16.mxu0 0
    %1498 = vmatpush1.bf16.msra.mxu0 0
    %1499 = vmatprep.subr.bf16.mxu0 0
    %1500 = vmatpush1.bf16.msra.mxu0 0
    %1501 = vmatprep.subr.bf16.mxu0 0
    %1502 = vmatpush1.bf16.msra.mxu0 0
    %1503 = vmatprep.subr.bf16.mxu0 0
    %1504 = vmatpush1.bf16.msra.mxu0 0
    %1505 = vmatprep.subr.bf16.mxu0 0
    %1506 = vmatpush1.bf16.msra.mxu0 0
    %1507 = vmatprep.subr.bf16.mxu0 0
    %1508 = vmatpush1.bf16.msra.mxu0 0
    %1509 = vmatprep.subr.bf16.mxu0 0
    %1510 = vmatpush1.bf16.msra.mxu0 %v452
    %1511 = vmatprep.subr.bf16.mxu0 0
    %1512 = vmatpush1.bf16.msra.mxu0 %v451
    %1513 = vmatprep.subr.bf16.mxu0 0
    %1514 = vmatpush2.bf16.msra.mxu0 0
    %1515 = vmatprep.subr.bf16.mxu0 0
    %1516 = vmatpush2.bf16.msra.mxu0 0
    %1517 = vmatprep.subr.bf16.mxu0 0
    %1518 = vmatpush2.bf16.msra.mxu0 0
    %1519 = vmatprep.subr.bf16.mxu0 0
    %1520 = vmatpush2.bf16.msra.mxu0 0
    %1521 = vmatprep.subr.bf16.mxu0 0
    %1522 = vmatpush2.bf16.msra.mxu0 0
    %1523 = vmatprep.subr.bf16.mxu0 0
    %1524 = vmatpush2.bf16.msra.mxu0 0
    %1525 = vmatprep.subr.bf16.mxu0 0
    %1526 = vmatpush2.bf16.msra.mxu0 0
    %1527 = vmatprep.subr.bf16.mxu0 0
    %1528 = vmatpush2.bf16.msra.mxu0 0
    %1529 = vmatprep.mubr.bf16.mxu0 0
    %1530 = vmatmul.mubr.bf16.gmra.mxu0 %v1495
    %v1531 = vpop.f32.mrf.mxu0
    %v1532 = vadd.f32 0.0, %v1531
    %v1533 = vpop.f32.mrf.mxu0
    %v1534 = vpop.f32.mrf.mxu0
    %v1535 = vpop.f32.mrf.mxu0
    %1536 = vdwg.mxu0
    %1537 = vmatprep.subr.bf16.mxu0 0
    %1538 = vmatpush1.bf16.msra.mxu0 0
    %1539 = vmatprep.subr.bf16.mxu0 0
    %1540 = vmatpush1.bf16.msra.mxu0 0
    %1541 = vmatprep.subr.bf16.mxu0 0
    %1542 = vmatpush1.bf16.msra.mxu0 0
    %1543 = vmatprep.subr.bf16.mxu0 0
    %1544 = vmatpush1.bf16.msra.mxu0 0
    %1545 = vmatprep.subr.bf16.mxu0 0
    %1546 = vmatpush1.bf16.msra.mxu0 0
    %1547 = vmatprep.subr.bf16.mxu0 0
    %1548 = vmatpush1.bf16.msra.mxu0 0
    %1549 = vmatprep.subr.bf16.mxu0 0
    %1550 = vmatpush1.bf16.msra.mxu0 %v507
    %1551 = vmatprep.subr.bf16.mxu0 0
    %1552 = vmatpush1.bf16.msra.mxu0 %v506
    %1553 = vmatprep.subr.bf16.mxu0 0
    %1554 = vmatpush2.bf16.msra.mxu0 0
    %1555 = vmatprep.subr.bf16.mxu0 0
    %1556 = vmatpush2.bf16.msra.mxu0 0
    %1557 = vmatprep.subr.bf16.mxu0 0
    %1558 = vmatpush2.bf16.msra.mxu0 0
    %1559 = vmatprep.subr.bf16.mxu0 0
    %1560 = vmatpush2.bf16.msra.mxu0 0
    %1561 = vmatprep.subr.bf16.mxu0 0
    %1562 = vmatpush2.bf16.msra.mxu0 0
    %1563 = vmatprep.subr.bf16.mxu0 0
    %1564 = vmatpush2.bf16.msra.mxu0 0
    %1565 = vmatprep.subr.bf16.mxu0 0
    %1566 = vmatpush2.bf16.msra.mxu0 0
    %1567 = vmatprep.subr.bf16.mxu0 0
    %1568 = vmatpush2.bf16.msra.mxu0 0
    %1569 = vmatprep.mubr.bf16.mxu0 0
    %1570 = vmatmul.mubr.bf16.gmra.mxu0 %v1495
    %v1571 = vpop.f32.mrf.mxu0
    %v1572 = vadd.f32 0.0, %v1571
    %v1573 = vpop.f32.mrf.mxu0
    %v1574 = vpop.f32.mrf.mxu0
    %v1575 = vpop.f32.mrf.mxu0
    %1576 = vdwg.mxu0
    %v1577 = vadd.f32 %v257, %v1532
    %v1578 = vxor.u32 %v1577, 2147483648
    %v1579 = vmul.f32 %v1578, 1.442695
    %v1580 = vpow.pop %v1579
    %v1581 = vadd.f32 %v1580, 1.0
    %v1582 = vrcp.pop %v1581
    %v1583 = vmul.f32 1.0, %v1582
    %v1584 = vadd.f32 %v345, %v1572
    %v1585 = vxor.u32 %v1584, 2147483648
    %v1586 = vmul.f32 %v1585, 1.442695
    %v1587 = vpow.pop %v1586
    %v1588 = vadd.f32 %v1587, 1.0
    %v1589 = vrcp.pop %v1588
    %v1590 = vmul.f32 1.0, %v1589
    %1591 = vmatprep.subr.bf16.mxu0 0
    %1592 = vmatpush1.bf16.msra.mxu0 0
    %1593 = vmatprep.subr.bf16.mxu0 0
    %1594 = vmatpush1.bf16.msra.mxu0 0
    %1595 = vmatprep.subr.bf16.mxu0 0
    %1596 = vmatpush1.bf16.msra.mxu0 0
    %1597 = vmatprep.subr.bf16.mxu0 0
    %1598 = vmatpush1.bf16.msra.mxu0 0
    %1599 = vmatprep.subr.bf16.mxu0 0
    %1600 = vmatpush1.bf16.msra.mxu0 0
    %1601 = vmatprep.subr.bf16.mxu0 0
    %1602 = vmatpush1.bf16.msra.mxu0 0
    %1603 = vmatprep.subr.bf16.mxu0 0
    %1604 = vmatpush1.bf16.msra.mxu0 %v573
    %1605 = vmatprep.subr.bf16.mxu0 0
    %1606 = vmatpush1.bf16.msra.mxu0 %v572
    %1607 = vmatprep.subr.bf16.mxu0 0
    %1608 = vmatpush2.bf16.msra.mxu0 0
    %1609 = vmatprep.subr.bf16.mxu0 0
    %1610 = vmatpush2.bf16.msra.mxu0 0
    %1611 = vmatprep.subr.bf16.mxu0 0
    %1612 = vmatpush2.bf16.msra.mxu0 0
    %1613 = vmatprep.subr.bf16.mxu0 0
    %1614 = vmatpush2.bf16.msra.mxu0 0
    %1615 = vmatprep.subr.bf16.mxu0 0
    %1616 = vmatpush2.bf16.msra.mxu0 0
    %1617 = vmatprep.subr.bf16.mxu0 0
    %1618 = vmatpush2.bf16.msra.mxu0 0
    %1619 = vmatprep.subr.bf16.mxu0 0
    %1620 = vmatpush2.bf16.msra.mxu0 0
    %1621 = vmatprep.subr.bf16.mxu0 0
    %1622 = vmatpush2.bf16.msra.mxu0 0
    %1623 = vmatprep.mubr.bf16.mxu0 0
    %1624 = vmatmul.mubr.bf16.gmra.mxu0 %v1495
    %v1625 = vpop.f32.mrf.mxu0
    %v1626 = vadd.f32 %v441, %v1625
    %v1627 = vpop.f32.mrf.mxu0
    %v1628 = vpop.f32.mrf.mxu0
    %v1629 = vpop.f32.mrf.mxu0
    %1630 = vdwg.mxu0
    %v1631 = vmul.f32 %v1583, %v1626
    %v1632 = vadd.f32 %v433, %v1631
    %v1633 = vtanh.pop %v1632
    %v1634 = vsub.f32 1.0, %v1590
    %v1635 = vmul.f32 %v1634, %v1633
    %v1636 = vmul.f32 %v1590, %v1492
    %v1637 = vadd.f32 %v1635, %v1636
    %v1638 = vpack.c.bf16 %v767, %v622
    %v1639 = vpack.c.bf16 %v1057, %v912
    %v1640 = vpack.c.bf16 %v1347, %v1202
    %v1641 = vpack.c.bf16 %v1637, %v1492
    %v1642 = vld [vmem:[%s31] sm:$0xf]
    %v1643 = vld [vmem:[%s31 + $0x4] sm:$0xf]
    %v1644 = vld [vmem:[%s31 + $0x8] sm:$0xf]
    %v1645 = vld [vmem:[%s31 + $0xc] sm:$0xf]
    %v1646 = vld [vmem:[%s33] sm:$0xf]
    %v1647 = vld [vmem:[%s33 + $0x4] sm:$0xf]
    %v1648 = vld [vmem:[%s33 + $0x8] sm:$0xf]
    %v1649 = vld [vmem:[%s33 + $0xc] sm:$0xf]
    %v1650 = vld [vmem:[%s35] sm:$0xf]
    %v1651 = vld [vmem:[%s35 + $0x4] sm:$0xf]
    %v1652 = vld [vmem:[%s35 + $0x8] sm:$0xf]
    %v1653 = vld [vmem:[%s35 + $0xc] sm:$0xf]
    %v1654 = vld [vmem:[%s25] sm:$0xf]
    %v1655 = vld [vmem:[%s25 + $0x4] sm:$0xf]
    %v1656 = vld [vmem:[%s25 + $0x8] sm:$0xf]
    %v1657 = vld [vmem:[%s25 + $0xc] sm:$0xf]
    %v1658 = vld [vmem:[%s37] sm:$0x1]
    %v1660 = vlaneseq
    %v1661 = vshrl.u32 %v1660, 7
    %v1662 = vsub.s32 0, %v1661
    %v1663 = vrot.slane %v1658, %v1662
    %v1669 = vunpack.c.l.b16 %v1654
    %v1670 = vunpack.c.l.b16 %v1655
    %v1671 = vunpack.c.l.b16 %v1656
    %v1672 = vunpack.c.l.b16 %v1657
    %v1673 = vpack.c.b16 %v1670, %v1669
    %v1674 = vpack.c.b16 %v1672, %v1671
    %v1678 = vsel %vm182, %v1638, 0
    %v1681 = vsel %vm182, %v1639, 0
    %v1684 = vsel %vm182, %v1640, 0
    %v1687 = vsel %vm182, %v1641, 0
    %1689 = vmatprep.subr.bf16.mxu0 0
    %1690 = vmatpush1.bf16.msra.mxu0 0
    %1691 = vmatprep.subr.bf16.mxu0 0
    %1692 = vmatpush1.bf16.msra.mxu0 0
    %1693 = vmatprep.subr.bf16.mxu0 0
    %1694 = vmatpush1.bf16.msra.mxu0 0
    %1695 = vmatprep.subr.bf16.mxu0 0
    %1696 = vmatpush1.bf16.msra.mxu0 0
    %1697 = vmatprep.subr.bf16.mxu0 0
    %1698 = vmatpush1.bf16.msra.mxu0 0
    %1699 = vmatprep.subr.bf16.mxu0 0
    %1700 = vmatpush1.bf16.msra.mxu0 0
    %1701 = vmatprep.subr.bf16.mxu0 0
    %1702 = vmatpush1.bf16.msra.mxu0 %v1674
    %1703 = vmatprep.subr.bf16.mxu0 0
    %1704 = vmatpush1.bf16.msra.mxu0 %v1673
    %1705 = vmatprep.subr.bf16.mxu0 0
    %1706 = vmatpush2.bf16.msra.mxu0 0
    %1707 = vmatprep.subr.bf16.mxu0 0
    %1708 = vmatpush2.bf16.msra.mxu0 0
    %1709 = vmatprep.subr.bf16.mxu0 0
    %1710 = vmatpush2.bf16.msra.mxu0 0
    %1711 = vmatprep.subr.bf16.mxu0 0
    %1712 = vmatpush2.bf16.msra.mxu0 0
    %1713 = vmatprep.subr.bf16.mxu0 0
    %1714 = vmatpush2.bf16.msra.mxu0 0
    %1715 = vmatprep.subr.bf16.mxu0 0
    %1716 = vmatpush2.bf16.msra.mxu0 0
    %1717 = vmatprep.subr.bf16.mxu0 0
    %1718 = vmatpush2.bf16.msra.mxu0 0
    %1719 = vmatprep.subr.bf16.mxu0 0
    %1720 = vmatpush2.bf16.msra.mxu0 0
    %1721 = vmatprep.mubr.bf16.mxu0 0
    %1722 = vmatmul.mubr.bf16.gmra.mxu0 %v1678
    %v1723 = vpop.f32.mrf.mxu0
    %v1724 = vadd.f32 %v1663, %v1723
    %v1725 = vpop.f32.mrf.mxu0
    %v1726 = vpop.f32.mrf.mxu0
    %v1727 = vadd.f32 %v1663, %v1726
    %v1728 = vpop.f32.mrf.mxu0
    %1729 = vmatprep.mubr.bf16.mxu0 0
    %1730 = vmatmul.mubr.bf16.gmra.mxu0 %v1681
    %v1731 = vpop.f32.mrf.mxu0
    %v1732 = vadd.f32 %v1663, %v1731
    %v1733 = vpop.f32.mrf.mxu0
    %v1734 = vpop.f32.mrf.mxu0
    %v1735 = vadd.f32 %v1663, %v1734
    %v1736 = vpop.f32.mrf.mxu0
    %1737 = vmatprep.mubr.bf16.mxu0 0
    %1738 = vmatmul.mubr.bf16.gmra.mxu0 %v1684
    %v1739 = vpop.f32.mrf.mxu0
    %v1740 = vadd.f32 %v1663, %v1739
    %v1741 = vpop.f32.mrf.mxu0
    %v1742 = vpop.f32.mrf.mxu0
    %v1743 = vadd.f32 %v1663, %v1742
    %v1744 = vpop.f32.mrf.mxu0
    %1745 = vmatprep.mubr.bf16.mxu0 0
    %1746 = vmatmul.mubr.bf16.gmra.mxu0 %v1687
    %v1747 = vpop.f32.mrf.mxu0
    %v1748 = vadd.f32 %v1663, %v1747
    %v1749 = vpop.f32.mrf.mxu0
    %v1750 = vpop.f32.mrf.mxu0
    %v1751 = vadd.f32 %v1663, %v1750
    %v1752 = vpop.f32.mrf.mxu0
    %1753 = vdwg.mxu0
    %v1754 = vld [vmem:[%s27] sm:$0xf]
    %v1755 = vld [vmem:[%s27 + $0x4] sm:$0xf]
    %v1756 = vld [vmem:[%s27 + $0x8] sm:$0xf]
    %v1757 = vld [vmem:[%s27 + $0xc] sm:$0xf]
    %v1758 = vld [vmem:[%s39] sm:$0x1]
    %v1760 = vlaneseq
    %v1761 = vshrl.u32 %v1760, 7
    %v1762 = vsub.s32 0, %v1761
    %v1763 = vrot.slane %v1758, %v1762
    %v1769 = vunpack.c.l.b16 %v1754
    %v1770 = vunpack.c.l.b16 %v1755
    %v1771 = vunpack.c.l.b16 %v1756
    %v1772 = vunpack.c.l.b16 %v1757
    %v1773 = vpack.c.b16 %v1770, %v1769
    %v1774 = vpack.c.b16 %v1772, %v1771
    %1777 = vmatprep.subr.bf16.mxu0 0
    %1778 = vmatpush1.bf16.msra.mxu0 0
    %1779 = vmatprep.subr.bf16.mxu0 0
    %1780 = vmatpush1.bf16.msra.mxu0 0
    %1781 = vmatprep.subr.bf16.mxu0 0
    %1782 = vmatpush1.bf16.msra.mxu0 0
    %1783 = vmatprep.subr.bf16.mxu0 0
    %1784 = vmatpush1.bf16.msra.mxu0 0
    %1785 = vmatprep.subr.bf16.mxu0 0
    %1786 = vmatpush1.bf16.msra.mxu0 0
    %1787 = vmatprep.subr.bf16.mxu0 0
    %1788 = vmatpush1.bf16.msra.mxu0 0
    %1789 = vmatprep.subr.bf16.mxu0 0
    %1790 = vmatpush1.bf16.msra.mxu0 %v1774
    %1791 = vmatprep.subr.bf16.mxu0 0
    %1792 = vmatpush1.bf16.msra.mxu0 %v1773
    %1793 = vmatprep.subr.bf16.mxu0 0
    %1794 = vmatpush2.bf16.msra.mxu0 0
    %1795 = vmatprep.subr.bf16.mxu0 0
    %1796 = vmatpush2.bf16.msra.mxu0 0
    %1797 = vmatprep.subr.bf16.mxu0 0
    %1798 = vmatpush2.bf16.msra.mxu0 0
    %1799 = vmatprep.subr.bf16.mxu0 0
    %1800 = vmatpush2.bf16.msra.mxu0 0
    %1801 = vmatprep.subr.bf16.mxu0 0
    %1802 = vmatpush2.bf16.msra.mxu0 0
    %1803 = vmatprep.subr.bf16.mxu0 0
    %1804 = vmatpush2.bf16.msra.mxu0 0
    %1805 = vmatprep.subr.bf16.mxu0 0
    %1806 = vmatpush2.bf16.msra.mxu0 0
    %1807 = vmatprep.subr.bf16.mxu0 0
    %1808 = vmatpush2.bf16.msra.mxu0 0
    %1809 = vmatprep.mubr.bf16.mxu0 0
    %1810 = vmatmul.mubr.bf16.gmra.mxu0 %v1678
    %v1811 = vpop.f32.mrf.mxu0
    %v1812 = vadd.f32 %v1763, %v1811
    %v1813 = vpop.f32.mrf.mxu0
    %v1814 = vpop.f32.mrf.mxu0
    %v1815 = vadd.f32 %v1763, %v1814
    %v1816 = vpop.f32.mrf.mxu0
    %1817 = vmatprep.mubr.bf16.mxu0 0
    %1818 = vmatmul.mubr.bf16.gmra.mxu0 %v1681
    %v1819 = vpop.f32.mrf.mxu0
    %v1820 = vadd.f32 %v1763, %v1819
    %v1821 = vpop.f32.mrf.mxu0
    %v1822 = vpop.f32.mrf.mxu0
    %v1823 = vadd.f32 %v1763, %v1822
    %v1824 = vpop.f32.mrf.mxu0
    %1825 = vmatprep.mubr.bf16.mxu0 0
    %1826 = vmatmul.mubr.bf16.gmra.mxu0 %v1684
    %v1827 = vpop.f32.mrf.mxu0
    %v1828 = vadd.f32 %v1763, %v1827
    %v1829 = vpop.f32.mrf.mxu0
    %v1830 = vpop.f32.mrf.mxu0
    %v1831 = vadd.f32 %v1763, %v1830
    %v1832 = vpop.f32.mrf.mxu0
    %1833 = vmatprep.mubr.bf16.mxu0 0
    %1834 = vmatmul.mubr.bf16.gmra.mxu0 %v1687
    %v1835 = vpop.f32.mrf.mxu0
    %v1836 = vadd.f32 %v1763, %v1835
    %v1837 = vpop.f32.mrf.mxu0
    %v1838 = vpop.f32.mrf.mxu0
    %v1839 = vadd.f32 %v1763, %v1838
    %v1840 = vpop.f32.mrf.mxu0
    %1841 = vdwg.mxu0
    %v1842 = vld [vmem:[%s29] sm:$0xf]
    %v1843 = vld [vmem:[%s29 + $0x4] sm:$0xf]
    %v1844 = vld [vmem:[%s29 + $0x8] sm:$0xf]
    %v1845 = vld [vmem:[%s29 + $0xc] sm:$0xf]
    %v1846 = vld [vmem:[%s41] sm:$0x1]
    %v1848 = vlaneseq
    %v1849 = vshrl.u32 %v1848, 7
    %v1850 = vsub.s32 0, %v1849
    %v1851 = vrot.slane %v1846, %v1850
    %v1857 = vunpack.c.l.b16 %v1842
    %v1858 = vunpack.c.l.b16 %v1843
    %v1859 = vunpack.c.l.b16 %v1844
    %v1860 = vunpack.c.l.b16 %v1845
    %v1861 = vpack.c.b16 %v1858, %v1857
    %v1862 = vpack.c.b16 %v1860, %v1859
    %1865 = vmatprep.subr.bf16.mxu0 0
    %1866 = vmatpush1.bf16.msra.mxu0 0
    %1867 = vmatprep.subr.bf16.mxu0 0
    %1868 = vmatpush1.bf16.msra.mxu0 0
    %1869 = vmatprep.subr.bf16.mxu0 0
    %1870 = vmatpush1.bf16.msra.mxu0 0
    %1871 = vmatprep.subr.bf16.mxu0 0
    %1872 = vmatpush1.bf16.msra.mxu0 0
    %1873 = vmatprep.subr.bf16.mxu0 0
    %1874 = vmatpush1.bf16.msra.mxu0 0
    %1875 = vmatprep.subr.bf16.mxu0 0
    %1876 = vmatpush1.bf16.msra.mxu0 0
    %1877 = vmatprep.subr.bf16.mxu0 0
    %1878 = vmatpush1.bf16.msra.mxu0 %v1862
    %1879 = vmatprep.subr.bf16.mxu0 0
    %1880 = vmatpush1.bf16.msra.mxu0 %v1861
    %1881 = vmatprep.subr.bf16.mxu0 0
    %1882 = vmatpush2.bf16.msra.mxu0 0
    %1883 = vmatprep.subr.bf16.mxu0 0
    %1884 = vmatpush2.bf16.msra.mxu0 0
    %1885 = vmatprep.subr.bf16.mxu0 0
    %1886 = vmatpush2.bf16.msra.mxu0 0
    %1887 = vmatprep.subr.bf16.mxu0 0
    %1888 = vmatpush2.bf16.msra.mxu0 0
    %1889 = vmatprep.subr.bf16.mxu0 0
    %1890 = vmatpush2.bf16.msra.mxu0 0
    %1891 = vmatprep.subr.bf16.mxu0 0
    %1892 = vmatpush2.bf16.msra.mxu0 0
    %1893 = vmatprep.subr.bf16.mxu0 0
    %1894 = vmatpush2.bf16.msra.mxu0 0
    %1895 = vmatprep.subr.bf16.mxu0 0
    %1896 = vmatpush2.bf16.msra.mxu0 0
    %1897 = vmatprep.mubr.bf16.mxu0 0
    %1898 = vmatmul.mubr.bf16.gmra.mxu0 %v1678
    %v1899 = vpop.f32.mrf.mxu0
    %v1900 = vadd.f32 %v1851, %v1899
    %v1901 = vpop.f32.mrf.mxu0
    %v1902 = vpop.f32.mrf.mxu0
    %v1903 = vadd.f32 %v1851, %v1902
    %v1904 = vpop.f32.mrf.mxu0
    %1905 = vmatprep.mubr.bf16.mxu0 0
    %1906 = vmatmul.mubr.bf16.gmra.mxu0 %v1681
    %v1907 = vpop.f32.mrf.mxu0
    %v1908 = vadd.f32 %v1851, %v1907
    %v1909 = vpop.f32.mrf.mxu0
    %v1910 = vpop.f32.mrf.mxu0
    %v1911 = vadd.f32 %v1851, %v1910
    %v1912 = vpop.f32.mrf.mxu0
    %1913 = vmatprep.mubr.bf16.mxu0 0
    %1914 = vmatmul.mubr.bf16.gmra.mxu0 %v1684
    %v1915 = vpop.f32.mrf.mxu0
    %v1916 = vadd.f32 %v1851, %v1915
    %v1917 = vpop.f32.mrf.mxu0
    %v1918 = vpop.f32.mrf.mxu0
    %v1919 = vadd.f32 %v1851, %v1918
    %v1920 = vpop.f32.mrf.mxu0
    %1921 = vmatprep.mubr.bf16.mxu0 0
    %1922 = vmatmul.mubr.bf16.gmra.mxu0 %v1687
    %v1923 = vpop.f32.mrf.mxu0
    %v1924 = vadd.f32 %v1851, %v1923
    %v1925 = vpop.f32.mrf.mxu0
    %v1926 = vpop.f32.mrf.mxu0
    %v1927 = vadd.f32 %v1851, %v1926
    %v1928 = vpop.f32.mrf.mxu0
    %1929 = vdwg.mxu0
    %v1930 = vld [vmem:[%s43] sm:$0x1]
    %v1932 = vlaneseq
    %v1933 = vshrl.u32 %v1932, 7
    %v1934 = vsub.s32 0, %v1933
    %v1935 = vrot.slane %v1930, %v1934
    %v1941 = vunpack.c.l.b16 %v1642
    %v1942 = vunpack.c.l.b16 %v1643
    %v1943 = vunpack.c.l.b16 %v1644
    %v1944 = vunpack.c.l.b16 %v1645
    %v1945 = vpack.c.b16 %v1942, %v1941
    %v1946 = vpack.c.b16 %v1944, %v1943
    %1949 = vmatprep.subr.bf16.mxu0 0
    %1950 = vmatpush1.bf16.msra.mxu0 0
    %1951 = vmatprep.subr.bf16.mxu0 0
    %1952 = vmatpush1.bf16.msra.mxu0 0
    %1953 = vmatprep.subr.bf16.mxu0 0
    %1954 = vmatpush1.bf16.msra.mxu0 0
    %1955 = vmatprep.subr.bf16.mxu0 0
    %1956 = vmatpush1.bf16.msra.mxu0 0
    %1957 = vmatprep.subr.bf16.mxu0 0
    %1958 = vmatpush1.bf16.msra.mxu0 0
    %1959 = vmatprep.subr.bf16.mxu0 0
    %1960 = vmatpush1.bf16.msra.mxu0 0
    %1961 = vmatprep.subr.bf16.mxu0 0
    %1962 = vmatpush1.bf16.msra.mxu0 %v1946
    %1963 = vmatprep.subr.bf16.mxu0 0
    %1964 = vmatpush1.bf16.msra.mxu0 %v1945
    %1965 = vmatprep.subr.bf16.mxu0 0
    %1966 = vmatpush2.bf16.msra.mxu0 0
    %1967 = vmatprep.subr.bf16.mxu0 0
    %1968 = vmatpush2.bf16.msra.mxu0 0
    %1969 = vmatprep.subr.bf16.mxu0 0
    %1970 = vmatpush2.bf16.msra.mxu0 0
    %1971 = vmatprep.subr.bf16.mxu0 0
    %1972 = vmatpush2.bf16.msra.mxu0 0
    %1973 = vmatprep.subr.bf16.mxu0 0
    %1974 = vmatpush2.bf16.msra.mxu0 0
    %1975 = vmatprep.subr.bf16.mxu0 0
    %1976 = vmatpush2.bf16.msra.mxu0 0
    %1977 = vmatprep.subr.bf16.mxu0 0
    %1978 = vmatpush2.bf16.msra.mxu0 0
    %1979 = vmatprep.subr.bf16.mxu0 0
    %1980 = vmatpush2.bf16.msra.mxu0 0
    %1981 = vmatprep.mubr.bf16.mxu0 0
    %1982 = vmatmul.mubr.bf16.gmra.mxu0 %v456
    %v1983 = vpop.f32.mrf.mxu0
    %v1984 = vadd.f32 0.0, %v1983
    %v1985 = vpop.f32.mrf.mxu0
    %v1986 = vpop.f32.mrf.mxu0
    %v1987 = vpop.f32.mrf.mxu0
    %1988 = vdwg.mxu0
    %v1993 = vunpack.c.l.b16 %v1646
    %v1994 = vunpack.c.l.b16 %v1647
    %v1995 = vunpack.c.l.b16 %v1648
    %v1996 = vunpack.c.l.b16 %v1649
    %v1997 = vpack.c.b16 %v1994, %v1993
    %v1998 = vpack.c.b16 %v1996, %v1995
    %2001 = vmatprep.subr.bf16.mxu0 0
    %2002 = vmatpush1.bf16.msra.mxu0 0
    %2003 = vmatprep.subr.bf16.mxu0 0
    %2004 = vmatpush1.bf16.msra.mxu0 0
    %2005 = vmatprep.subr.bf16.mxu0 0
    %2006 = vmatpush1.bf16.msra.mxu0 0
    %2007 = vmatprep.subr.bf16.mxu0 0
    %2008 = vmatpush1.bf16.msra.mxu0 0
    %2009 = vmatprep.subr.bf16.mxu0 0
    %2010 = vmatpush1.bf16.msra.mxu0 0
    %2011 = vmatprep.subr.bf16.mxu0 0
    %2012 = vmatpush1.bf16.msra.mxu0 0
    %2013 = vmatprep.subr.bf16.mxu0 0
    %2014 = vmatpush1.bf16.msra.mxu0 %v1998
    %2015 = vmatprep.subr.bf16.mxu0 0
    %2016 = vmatpush1.bf16.msra.mxu0 %v1997
    %2017 = vmatprep.subr.bf16.mxu0 0
    %2018 = vmatpush2.bf16.msra.mxu0 0
    %2019 = vmatprep.subr.bf16.mxu0 0
    %2020 = vmatpush2.bf16.msra.mxu0 0
    %2021 = vmatprep.subr.bf16.mxu0 0
    %2022 = vmatpush2.bf16.msra.mxu0 0
    %2023 = vmatprep.subr.bf16.mxu0 0
    %2024 = vmatpush2.bf16.msra.mxu0 0
    %2025 = vmatprep.subr.bf16.mxu0 0
    %2026 = vmatpush2.bf16.msra.mxu0 0
    %2027 = vmatprep.subr.bf16.mxu0 0
    %2028 = vmatpush2.bf16.msra.mxu0 0
    %2029 = vmatprep.subr.bf16.mxu0 0
    %2030 = vmatpush2.bf16.msra.mxu0 0
    %2031 = vmatprep.subr.bf16.mxu0 0
    %2032 = vmatpush2.bf16.msra.mxu0 0
    %2033 = vmatprep.mubr.bf16.mxu0 0
    %2034 = vmatmul.mubr.bf16.gmra.mxu0 %v456
    %v2035 = vpop.f32.mrf.mxu0
    %v2036 = vadd.f32 0.0, %v2035
    %v2037 = vpop.f32.mrf.mxu0
    %v2038 = vpop.f32.mrf.mxu0
    %v2039 = vpop.f32.mrf.mxu0
    %2040 = vdwg.mxu0
    %v2041 = vadd.f32 %v1724, %v1984
    %v2042 = vxor.u32 %v2041, 2147483648
    %v2043 = vmul.f32 %v2042, 1.442695
    %v2044 = vpow.pop %v2043
    %v2045 = vadd.f32 %v2044, 1.0
    %v2046 = vrcp.pop %v2045
    %v2047 = vmul.f32 1.0, %v2046
    %v2048 = vadd.f32 %v1812, %v2036
    %v2049 = vxor.u32 %v2048, 2147483648
    %v2050 = vmul.f32 %v2049, 1.442695
    %v2051 = vpow.pop %v2050
    %v2052 = vadd.f32 %v2051, 1.0
    %v2053 = vrcp.pop %v2052
    %v2054 = vmul.f32 1.0, %v2053
    %v2059 = vunpack.c.l.b16 %v1650
    %v2060 = vunpack.c.l.b16 %v1651
    %v2061 = vunpack.c.l.b16 %v1652
    %v2062 = vunpack.c.l.b16 %v1653
    %v2063 = vpack.c.b16 %v2060, %v2059
    %v2064 = vpack.c.b16 %v2062, %v2061
    %2067 = vmatprep.subr.bf16.mxu0 0
    %2068 = vmatpush1.bf16.msra.mxu0 0
    %2069 = vmatprep.subr.bf16.mxu0 0
    %2070 = vmatpush1.bf16.msra.mxu0 0
    %2071 = vmatprep.subr.bf16.mxu0 0
    %2072 = vmatpush1.bf16.msra.mxu0 0
    %2073 = vmatprep.subr.bf16.mxu0 0
    %2074 = vmatpush1.bf16.msra.mxu0 0
    %2075 = vmatprep.subr.bf16.mxu0 0
    %2076 = vmatpush1.bf16.msra.mxu0 0
    %2077 = vmatprep.subr.bf16.mxu0 0
    %2078 = vmatpush1.bf16.msra.mxu0 0
    %2079 = vmatprep.subr.bf16.mxu0 0
    %2080 = vmatpush1.bf16.msra.mxu0 %v2064
    %2081 = vmatprep.subr.bf16.mxu0 0
    %2082 = vmatpush1.bf16.msra.mxu0 %v2063
    %2083 = vmatprep.subr.bf16.mxu0 0
    %2084 = vmatpush2.bf16.msra.mxu0 0
    %2085 = vmatprep.subr.bf16.mxu0 0
    %2086 = vmatpush2.bf16.msra.mxu0 0
    %2087 = vmatprep.subr.bf16.mxu0 0
    %2088 = vmatpush2.bf16.msra.mxu0 0
    %2089 = vmatprep.subr.bf16.mxu0 0
    %2090 = vmatpush2.bf16.msra.mxu0 0
    %2091 = vmatprep.subr.bf16.mxu0 0
    %2092 = vmatpush2.bf16.msra.mxu0 0
    %2093 = vmatprep.subr.bf16.mxu0 0
    %2094 = vmatpush2.bf16.msra.mxu0 0
    %2095 = vmatprep.subr.bf16.mxu0 0
    %2096 = vmatpush2.bf16.msra.mxu0 0
    %2097 = vmatprep.subr.bf16.mxu0 0
    %2098 = vmatpush2.bf16.msra.mxu0 0
    %2099 = vmatprep.mubr.bf16.mxu0 0
    %2100 = vmatmul.mubr.bf16.gmra.mxu0 %v456
    %v2101 = vpop.f32.mrf.mxu0
    %v2102 = vadd.f32 %v1935, %v2101
    %v2103 = vpop.f32.mrf.mxu0
    %v2104 = vpop.f32.mrf.mxu0
    %v2105 = vpop.f32.mrf.mxu0
    %2106 = vdwg.mxu0
    %v2107 = vmul.f32 %v2047, %v2102
    %v2108 = vadd.f32 %v1900, %v2107
    %v2109 = vtanh.pop %v2108
    %v2110 = vsub.f32 1.0, %v2054
    %v2111 = vmul.f32 %v2110, %v2109
    %v2112 = vmul.f32 %v2054, 0.0
    %v2113 = vadd.f32 %v2111, %v2112
    %v2114 = vpack.c.bf16 %v2113, %v2113
    %v2116 = vsel %vm182, %v2114, 0
    %2118 = vmatprep.subr.bf16.mxu0 0
    %2119 = vmatpush1.bf16.msra.mxu0 0
    %2120 = vmatprep.subr.bf16.mxu0 0
    %2121 = vmatpush1.bf16.msra.mxu0 0
    %2122 = vmatprep.subr.bf16.mxu0 0
    %2123 = vmatpush1.bf16.msra.mxu0 0
    %2124 = vmatprep.subr.bf16.mxu0 0
    %2125 = vmatpush1.bf16.msra.mxu0 0
    %2126 = vmatprep.subr.bf16.mxu0 0
    %2127 = vmatpush1.bf16.msra.mxu0 0
    %2128 = vmatprep.subr.bf16.mxu0 0
    %2129 = vmatpush1.bf16.msra.mxu0 0
    %2130 = vmatprep.subr.bf16.mxu0 0
    %2131 = vmatpush1.bf16.msra.mxu0 %v1946
    %2132 = vmatprep.subr.bf16.mxu0 0
    %2133 = vmatpush1.bf16.msra.mxu0 %v1945
    %2134 = vmatprep.subr.bf16.mxu0 0
    %2135 = vmatpush2.bf16.msra.mxu0 0
    %2136 = vmatprep.subr.bf16.mxu0 0
    %2137 = vmatpush2.bf16.msra.mxu0 0
    %2138 = vmatprep.subr.bf16.mxu0 0
    %2139 = vmatpush2.bf16.msra.mxu0 0
    %2140 = vmatprep.subr.bf16.mxu0 0
    %2141 = vmatpush2.bf16.msra.mxu0 0
    %2142 = vmatprep.subr.bf16.mxu0 0
    %2143 = vmatpush2.bf16.msra.mxu0 0
    %2144 = vmatprep.subr.bf16.mxu0 0
    %2145 = vmatpush2.bf16.msra.mxu0 0
    %2146 = vmatprep.subr.bf16.mxu0 0
    %2147 = vmatpush2.bf16.msra.mxu0 0
    %2148 = vmatprep.subr.bf16.mxu0 0
    %2149 = vmatpush2.bf16.msra.mxu0 0
    %2150 = vmatprep.mubr.bf16.mxu0 0
    %2151 = vmatmul.mubr.bf16.gmra.mxu0 %v2116
    %v2152 = vpop.f32.mrf.mxu0
    %v2153 = vadd.f32 0.0, %v2152
    %v2154 = vpop.f32.mrf.mxu0
    %v2155 = vpop.f32.mrf.mxu0
    %v2156 = vpop.f32.mrf.mxu0
    %2157 = vdwg.mxu0
    %2158 = vmatprep.subr.bf16.mxu0 0
    %2159 = vmatpush1.bf16.msra.mxu0 0
    %2160 = vmatprep.subr.bf16.mxu0 0
    %2161 = vmatpush1.bf16.msra.mxu0 0
    %2162 = vmatprep.subr.bf16.mxu0 0
    %2163 = vmatpush1.bf16.msra.mxu0 0
    %2164 = vmatprep.subr.bf16.mxu0 0
    %2165 = vmatpush1.bf16.msra.mxu0 0
    %2166 = vmatprep.subr.bf16.mxu0 0
    %2167 = vmatpush1.bf16.msra.mxu0 0
    %2168 = vmatprep.subr.bf16.mxu0 0
    %2169 = vmatpush1.bf16.msra.mxu0 0
    %2170 = vmatprep.subr.bf16.mxu0 0
    %2171 = vmatpush1.bf16.msra.mxu0 %v1998
    %2172 = vmatprep.subr.bf16.mxu0 0
    %2173 = vmatpush1.bf16.msra.mxu0 %v1997
    %2174 = vmatprep.subr.bf16.mxu0 0
    %2175 = vmatpush2.bf16.msra.mxu0 0
    %2176 = vmatprep.subr.bf16.mxu0 0
    %2177 = vmatpush2.bf16.msra.mxu0 0
    %2178 = vmatprep.subr.bf16.mxu0 0
    %2179 = vmatpush2.bf16.msra.mxu0 0
    %2180 = vmatprep.subr.bf16.mxu0 0
    %2181 = vmatpush2.bf16.msra.mxu0 0
    %2182 = vmatprep.subr.bf16.mxu0 0
    %2183 = vmatpush2.bf16.msra.mxu0 0
    %2184 = vmatprep.subr.bf16.mxu0 0
    %2185 = vmatpush2.bf16.msra.mxu0 0
    %2186 = vmatprep.subr.bf16.mxu0 0
    %2187 = vmatpush2.bf16.msra.mxu0 0
    %2188 = vmatprep.subr.bf16.mxu0 0
    %2189 = vmatpush2.bf16.msra.mxu0 0
    %2190 = vmatprep.mubr.bf16.mxu0 0
    %2191 = vmatmul.mubr.bf16.gmra.mxu0 %v2116
    %v2192 = vpop.f32.mrf.mxu0
    %v2193 = vadd.f32 0.0, %v2192
    %v2194 = vpop.f32.mrf.mxu0
    %v2195 = vpop.f32.mrf.mxu0
    %v2196 = vpop.f32.mrf.mxu0
    %2197 = vdwg.mxu0
    %v2198 = vadd.f32 %v1727, %v2153
    %v2199 = vxor.u32 %v2198, 2147483648
    %v2200 = vmul.f32 %v2199, 1.442695
    %v2201 = vpow.pop %v2200
    %v2202 = vadd.f32 %v2201, 1.0
    %v2203 = vrcp.pop %v2202
    %v2204 = vmul.f32 1.0, %v2203
    %v2205 = vadd.f32 %v1815, %v2193
    %v2206 = vxor.u32 %v2205, 2147483648
    %v2207 = vmul.f32 %v2206, 1.442695
    %v2208 = vpow.pop %v2207
    %v2209 = vadd.f32 %v2208, 1.0
    %v2210 = vrcp.pop %v2209
    %v2211 = vmul.f32 1.0, %v2210
    %2212 = vmatprep.subr.bf16.mxu0 0
    %2213 = vmatpush1.bf16.msra.mxu0 0
    %2214 = vmatprep.subr.bf16.mxu0 0
    %2215 = vmatpush1.bf16.msra.mxu0 0
    %2216 = vmatprep.subr.bf16.mxu0 0
    %2217 = vmatpush1.bf16.msra.mxu0 0
    %2218 = vmatprep.subr.bf16.mxu0 0
    %2219 = vmatpush1.bf16.msra.mxu0 0
    %2220 = vmatprep.subr.bf16.mxu0 0
    %2221 = vmatpush1.bf16.msra.mxu0 0
    %2222 = vmatprep.subr.bf16.mxu0 0
    %2223 = vmatpush1.bf16.msra.mxu0 0
    %2224 = vmatprep.subr.bf16.mxu0 0
    %2225 = vmatpush1.bf16.msra.mxu0 %v2064
    %2226 = vmatprep.subr.bf16.mxu0 0
    %2227 = vmatpush1.bf16.msra.mxu0 %v2063
    %2228 = vmatprep.subr.bf16.mxu0 0
    %2229 = vmatpush2.bf16.msra.mxu0 0
    %2230 = vmatprep.subr.bf16.mxu0 0
    %2231 = vmatpush2.bf16.msra.mxu0 0
    %2232 = vmatprep.subr.bf16.mxu0 0
    %2233 = vmatpush2.bf16.msra.mxu0 0
    %2234 = vmatprep.subr.bf16.mxu0 0
    %2235 = vmatpush2.bf16.msra.mxu0 0
    %2236 = vmatprep.subr.bf16.mxu0 0
    %2237 = vmatpush2.bf16.msra.mxu0 0
    %2238 = vmatprep.subr.bf16.mxu0 0
    %2239 = vmatpush2.bf16.msra.mxu0 0
    %2240 = vmatprep.subr.bf16.mxu0 0
    %2241 = vmatpush2.bf16.msra.mxu0 0
    %2242 = vmatprep.subr.bf16.mxu0 0
    %2243 = vmatpush2.bf16.msra.mxu0 0
    %2244 = vmatprep.mubr.bf16.mxu0 0
    %2245 = vmatmul.mubr.bf16.gmra.mxu0 %v2116
    %v2246 = vpop.f32.mrf.mxu0
    %v2247 = vadd.f32 %v1935, %v2246
    %v2248 = vpop.f32.mrf.mxu0
    %v2249 = vpop.f32.mrf.mxu0
    %v2250 = vpop.f32.mrf.mxu0
    %2251 = vdwg.mxu0
    %v2252 = vmul.f32 %v2204, %v2247
    %v2253 = vadd.f32 %v1903, %v2252
    %v2254 = vtanh.pop %v2253
    %v2255 = vsub.f32 1.0, %v2211
    %v2256 = vmul.f32 %v2255, %v2254
    %v2257 = vmul.f32 %v2211, %v2113
    %v2258 = vadd.f32 %v2256, %v2257
    %v2259 = vpack.c.bf16 %v2258, %v2258
    %v2261 = vsel %vm182, %v2259, 0
    %2263 = vmatprep.subr.bf16.mxu0 0
    %2264 = vmatpush1.bf16.msra.mxu0 0
    %2265 = vmatprep.subr.bf16.mxu0 0
    %2266 = vmatpush1.bf16.msra.mxu0 0
    %2267 = vmatprep.subr.bf16.mxu0 0
    %2268 = vmatpush1.bf16.msra.mxu0 0
    %2269 = vmatprep.subr.bf16.mxu0 0
    %2270 = vmatpush1.bf16.msra.mxu0 0
    %2271 = vmatprep.subr.bf16.mxu0 0
    %2272 = vmatpush1.bf16.msra.mxu0 0
    %2273 = vmatprep.subr.bf16.mxu0 0
    %2274 = vmatpush1.bf16.msra.mxu0 0
    %2275 = vmatprep.subr.bf16.mxu0 0
    %2276 = vmatpush1.bf16.msra.mxu0 %v1946
    %2277 = vmatprep.subr.bf16.mxu0 0
    %2278 = vmatpush1.bf16.msra.mxu0 %v1945
    %2279 = vmatprep.subr.bf16.mxu0 0
    %2280 = vmatpush2.bf16.msra.mxu0 0
    %2281 = vmatprep.subr.bf16.mxu0 0
    %2282 = vmatpush2.bf16.msra.mxu0 0
    %2283 = vmatprep.subr.bf16.mxu0 0
    %2284 = vmatpush2.bf16.msra.mxu0 0
    %2285 = vmatprep.subr.bf16.mxu0 0
    %2286 = vmatpush2.bf16.msra.mxu0 0
    %2287 = vmatprep.subr.bf16.mxu0 0
    %2288 = vmatpush2.bf16.msra.mxu0 0
    %2289 = vmatprep.subr.bf16.mxu0 0
    %2290 = vmatpush2.bf16.msra.mxu0 0
    %2291 = vmatprep.subr.bf16.mxu0 0
    %2292 = vmatpush2.bf16.msra.mxu0 0
    %2293 = vmatprep.subr.bf16.mxu0 0
    %2294 = vmatpush2.bf16.msra.mxu0 0
    %2295 = vmatprep.mubr.bf16.mxu0 0
    %2296 = vmatmul.mubr.bf16.gmra.mxu0 %v2261
    %v2297 = vpop.f32.mrf.mxu0
    %v2298 = vadd.f32 0.0, %v2297
    %v2299 = vpop.f32.mrf.mxu0
    %v2300 = vpop.f32.mrf.mxu0
    %v2301 = vpop.f32.mrf.mxu0
    %2302 = vdwg.mxu0
    %2303 = vmatprep.subr.bf16.mxu0 0
    %2304 = vmatpush1.bf16.msra.mxu0 0
    %2305 = vmatprep.subr.bf16.mxu0 0
    %2306 = vmatpush1.bf16.msra.mxu0 0
    %2307 = vmatprep.subr.bf16.mxu0 0
    %2308 = vmatpush1.bf16.msra.mxu0 0
    %2309 = vmatprep.subr.bf16.mxu0 0
    %2310 = vmatpush1.bf16.msra.mxu0 0
    %2311 = vmatprep.subr.bf16.mxu0 0
    %2312 = vmatpush1.bf16.msra.mxu0 0
    %2313 = vmatprep.subr.bf16.mxu0 0
    %2314 = vmatpush1.bf16.msra.mxu0 0
    %2315 = vmatprep.subr.bf16.mxu0 0
    %2316 = vmatpush1.bf16.msra.mxu0 %v1998
    %2317 = vmatprep.subr.bf16.mxu0 0
    %2318 = vmatpush1.bf16.msra.mxu0 %v1997
    %2319 = vmatprep.subr.bf16.mxu0 0
    %2320 = vmatpush2.bf16.msra.mxu0 0
    %2321 = vmatprep.subr.bf16.mxu0 0
    %2322 = vmatpush2.bf16.msra.mxu0 0
    %2323 = vmatprep.subr.bf16.mxu0 0
    %2324 = vmatpush2.bf16.msra.mxu0 0
    %2325 = vmatprep.subr.bf16.mxu0 0
    %2326 = vmatpush2.bf16.msra.mxu0 0
    %2327 = vmatprep.subr.bf16.mxu0 0
    %2328 = vmatpush2.bf16.msra.mxu0 0
    %2329 = vmatprep.subr.bf16.mxu0 0
    %2330 = vmatpush2.bf16.msra.mxu0 0
    %2331 = vmatprep.subr.bf16.mxu0 0
    %2332 = vmatpush2.bf16.msra.mxu0 0
    %2333 = vmatprep.subr.bf16.mxu0 0
    %2334 = vmatpush2.bf16.msra.mxu0 0
    %2335 = vmatprep.mubr.bf16.mxu0 0
    %2336 = vmatmul.mubr.bf16.gmra.mxu0 %v2261
    %v2337 = vpop.f32.mrf.mxu0
    %v2338 = vadd.f32 0.0, %v2337
    %v2339 = vpop.f32.mrf.mxu0
    %v2340 = vpop.f32.mrf.mxu0
    %v2341 = vpop.f32.mrf.mxu0
    %2342 = vdwg.mxu0
    %v2343 = vadd.f32 %v1732, %v2298
    %v2344 = vxor.u32 %v2343, 2147483648
    %v2345 = vmul.f32 %v2344, 1.442695
    %v2346 = vpow.pop %v2345
    %v2347 = vadd.f32 %v2346, 1.0
    %v2348 = vrcp.pop %v2347
    %v2349 = vmul.f32 1.0, %v2348
    %v2350 = vadd.f32 %v1820, %v2338
    %v2351 = vxor.u32 %v2350, 2147483648
    %v2352 = vmul.f32 %v2351, 1.442695
    %v2353 = vpow.pop %v2352
    %v2354 = vadd.f32 %v2353, 1.0
    %v2355 = vrcp.pop %v2354
    %v2356 = vmul.f32 1.0, %v2355
    %2357 = vmatprep.subr.bf16.mxu0 0
    %2358 = vmatpush1.bf16.msra.mxu0 0
    %2359 = vmatprep.subr.bf16.mxu0 0
    %2360 = vmatpush1.bf16.msra.mxu0 0
    %2361 = vmatprep.subr.bf16.mxu0 0
    %2362 = vmatpush1.bf16.msra.mxu0 0
    %2363 = vmatprep.subr.bf16.mxu0 0
    %2364 = vmatpush1.bf16.msra.mxu0 0
    %2365 = vmatprep.subr.bf16.mxu0 0
    %2366 = vmatpush1.bf16.msra.mxu0 0
    %2367 = vmatprep.subr.bf16.mxu0 0
    %2368 = vmatpush1.bf16.msra.mxu0 0
    %2369 = vmatprep.subr.bf16.mxu0 0
    %2370 = vmatpush1.bf16.msra.mxu0 %v2064
    %2371 = vmatprep.subr.bf16.mxu0 0
    %2372 = vmatpush1.bf16.msra.mxu0 %v2063
    %2373 = vmatprep.subr.bf16.mxu0 0
    %2374 = vmatpush2.bf16.msra.mxu0 0
    %2375 = vmatprep.subr.bf16.mxu0 0
    %2376 = vmatpush2.bf16.msra.mxu0 0
    %2377 = vmatprep.subr.bf16.mxu0 0
    %2378 = vmatpush2.bf16.msra.mxu0 0
    %2379 = vmatprep.subr.bf16.mxu0 0
    %2380 = vmatpush2.bf16.msra.mxu0 0
    %2381 = vmatprep.subr.bf16.mxu0 0
    %2382 = vmatpush2.bf16.msra.mxu0 0
    %2383 = vmatprep.subr.bf16.mxu0 0
    %2384 = vmatpush2.bf16.msra.mxu0 0
    %2385 = vmatprep.subr.bf16.mxu0 0
    %2386 = vmatpush2.bf16.msra.mxu0 0
    %2387 = vmatprep.subr.bf16.mxu0 0
    %2388 = vmatpush2.bf16.msra.mxu0 0
    %2389 = vmatprep.mubr.bf16.mxu0 0
    %2390 = vmatmul.mubr.bf16.gmra.mxu0 %v2261
    %v2391 = vpop.f32.mrf.mxu0
    %v2392 = vadd.f32 %v1935, %v2391
    %v2393 = vpop.f32.mrf.mxu0
    %v2394 = vpop.f32.mrf.mxu0
    %v2395 = vpop.f32.mrf.mxu0
    %2396 = vdwg.mxu0
    %v2397 = vmul.f32 %v2349, %v2392
    %v2398 = vadd.f32 %v1908, %v2397
    %v2399 = vtanh.pop %v2398
    %v2400 = vsub.f32 1.0, %v2356
    %v2401 = vmul.f32 %v2400, %v2399
    %v2402 = vmul.f32 %v2356, %v2258
    %v2403 = vadd.f32 %v2401, %v2402
    %v2404 = vpack.c.bf16 %v2403, %v2403
    %v2406 = vsel %vm182, %v2404, 0
    %2408 = vmatprep.subr.bf16.mxu0 0
    %2409 = vmatpush1.bf16.msra.mxu0 0
    %2410 = vmatprep.subr.bf16.mxu0 0
    %2411 = vmatpush1.bf16.msra.mxu0 0
    %2412 = vmatprep.subr.bf16.mxu0 0
    %2413 = vmatpush1.bf16.msra.mxu0 0
    %2414 = vmatprep.subr.bf16.mxu0 0
    %2415 = vmatpush1.bf16.msra.mxu0 0
    %2416 = vmatprep.subr.bf16.mxu0 0
    %2417 = vmatpush1.bf16.msra.mxu0 0
    %2418 = vmatprep.subr.bf16.mxu0 0
    %2419 = vmatpush1.bf16.msra.mxu0 0
    %2420 = vmatprep.subr.bf16.mxu0 0
    %2421 = vmatpush1.bf16.msra.mxu0 %v1946
    %2422 = vmatprep.subr.bf16.mxu0 0
    %2423 = vmatpush1.bf16.msra.mxu0 %v1945
    %2424 = vmatprep.subr.bf16.mxu0 0
    %2425 = vmatpush2.bf16.msra.mxu0 0
    %2426 = vmatprep.subr.bf16.mxu0 0
    %2427 = vmatpush2.bf16.msra.mxu0 0
    %2428 = vmatprep.subr.bf16.mxu0 0
    %2429 = vmatpush2.bf16.msra.mxu0 0
    %2430 = vmatprep.subr.bf16.mxu0 0
    %2431 = vmatpush2.bf16.msra.mxu0 0
    %2432 = vmatprep.subr.bf16.mxu0 0
    %2433 = vmatpush2.bf16.msra.mxu0 0
    %2434 = vmatprep.subr.bf16.mxu0 0
    %2435 = vmatpush2.bf16.msra.mxu0 0
    %2436 = vmatprep.subr.bf16.mxu0 0
    %2437 = vmatpush2.bf16.msra.mxu0 0
    %2438 = vmatprep.subr.bf16.mxu0 0
    %2439 = vmatpush2.bf16.msra.mxu0 0
    %2440 = vmatprep.mubr.bf16.mxu0 0
    %2441 = vmatmul.mubr.bf16.gmra.mxu0 %v2406
    %v2442 = vpop.f32.mrf.mxu0
    %v2443 = vadd.f32 0.0, %v2442
    %v2444 = vpop.f32.mrf.mxu0
    %v2445 = vpop.f32.mrf.mxu0
    %v2446 = vpop.f32.mrf.mxu0
    %2447 = vdwg.mxu0
    %2448 = vmatprep.subr.bf16.mxu0 0
    %2449 = vmatpush1.bf16.msra.mxu0 0
    %2450 = vmatprep.subr.bf16.mxu0 0
    %2451 = vmatpush1.bf16.msra.mxu0 0
    %2452 = vmatprep.subr.bf16.mxu0 0
    %2453 = vmatpush1.bf16.msra.mxu0 0
    %2454 = vmatprep.subr.bf16.mxu0 0
    %2455 = vmatpush1.bf16.msra.mxu0 0
    %2456 = vmatprep.subr.bf16.mxu0 0
    %2457 = vmatpush1.bf16.msra.mxu0 0
    %2458 = vmatprep.subr.bf16.mxu0 0
    %2459 = vmatpush1.bf16.msra.mxu0 0
    %2460 = vmatprep.subr.bf16.mxu0 0
    %2461 = vmatpush1.bf16.msra.mxu0 %v1998
    %2462 = vmatprep.subr.bf16.mxu0 0
    %2463 = vmatpush1.bf16.msra.mxu0 %v1997
    %2464 = vmatprep.subr.bf16.mxu0 0
    %2465 = vmatpush2.bf16.msra.mxu0 0
    %2466 = vmatprep.subr.bf16.mxu0 0
    %2467 = vmatpush2.bf16.msra.mxu0 0
    %2468 = vmatprep.subr.bf16.mxu0 0
    %2469 = vmatpush2.bf16.msra.mxu0 0
    %2470 = vmatprep.subr.bf16.mxu0 0
    %2471 = vmatpush2.bf16.msra.mxu0 0
    %2472 = vmatprep.subr.bf16.mxu0 0
    %2473 = vmatpush2.bf16.msra.mxu0 0
    %2474 = vmatprep.subr.bf16.mxu0 0
    %2475 = vmatpush2.bf16.msra.mxu0 0
    %2476 = vmatprep.subr.bf16.mxu0 0
    %2477 = vmatpush2.bf16.msra.mxu0 0
    %2478 = vmatprep.subr.bf16.mxu0 0
    %2479 = vmatpush2.bf16.msra.mxu0 0
    %2480 = vmatprep.mubr.bf16.mxu0 0
    %2481 = vmatmul.mubr.bf16.gmra.mxu0 %v2406
    %v2482 = vpop.f32.mrf.mxu0
    %v2483 = vadd.f32 0.0, %v2482
    %v2484 = vpop.f32.mrf.mxu0
    %v2485 = vpop.f32.mrf.mxu0
    %v2486 = vpop.f32.mrf.mxu0
    %2487 = vdwg.mxu0
    %v2488 = vadd.f32 %v1735, %v2443
    %v2489 = vxor.u32 %v2488, 2147483648
    %v2490 = vmul.f32 %v2489, 1.442695
    %v2491 = vpow.pop %v2490
    %v2492 = vadd.f32 %v2491, 1.0
    %v2493 = vrcp.pop %v2492
    %v2494 = vmul.f32 1.0, %v2493
    %v2495 = vadd.f32 %v1823, %v2483
    %v2496 = vxor.u32 %v2495, 2147483648
    %v2497 = vmul.f32 %v2496, 1.442695
    %v2498 = vpow.pop %v2497
    %v2499 = vadd.f32 %v2498, 1.0
    %v2500 = vrcp.pop %v2499
    %v2501 = vmul.f32 1.0, %v2500
    %2502 = vmatprep.subr.bf16.mxu0 0
    %2503 = vmatpush1.bf16.msra.mxu0 0
    %2504 = vmatprep.subr.bf16.mxu0 0
    %2505 = vmatpush1.bf16.msra.mxu0 0
    %2506 = vmatprep.subr.bf16.mxu0 0
    %2507 = vmatpush1.bf16.msra.mxu0 0
    %2508 = vmatprep.subr.bf16.mxu0 0
    %2509 = vmatpush1.bf16.msra.mxu0 0
    %2510 = vmatprep.subr.bf16.mxu0 0
    %2511 = vmatpush1.bf16.msra.mxu0 0
    %2512 = vmatprep.subr.bf16.mxu0 0
    %2513 = vmatpush1.bf16.msra.mxu0 0
    %2514 = vmatprep.subr.bf16.mxu0 0
    %2515 = vmatpush1.bf16.msra.mxu0 %v2064
    %2516 = vmatprep.subr.bf16.mxu0 0
    %2517 = vmatpush1.bf16.msra.mxu0 %v2063
    %2518 = vmatprep.subr.bf16.mxu0 0
    %2519 = vmatpush2.bf16.msra.mxu0 0
    %2520 = vmatprep.subr.bf16.mxu0 0
    %2521 = vmatpush2.bf16.msra.mxu0 0
    %2522 = vmatprep.subr.bf16.mxu0 0
    %2523 = vmatpush2.bf16.msra.mxu0 0
    %2524 = vmatprep.subr.bf16.mxu0 0
    %2525 = vmatpush2.bf16.msra.mxu0 0
    %2526 = vmatprep.subr.bf16.mxu0 0
    %2527 = vmatpush2.bf16.msra.mxu0 0
    %2528 = vmatprep.subr.bf16.mxu0 0
    %2529 = vmatpush2.bf16.msra.mxu0 0
    %2530 = vmatprep.subr.bf16.mxu0 0
    %2531 = vmatpush2.bf16.msra.mxu0 0
    %2532 = vmatprep.subr.bf16.mxu0 0
    %2533 = vmatpush2.bf16.msra.mxu0 0
    %2534 = vmatprep.mubr.bf16.mxu0 0
    %2535 = vmatmul.mubr.bf16.gmra.mxu0 %v2406
    %v2536 = vpop.f32.mrf.mxu0
    %v2537 = vadd.f32 %v1935, %v2536
    %v2538 = vpop.f32.mrf.mxu0
    %v2539 = vpop.f32.mrf.mxu0
    %v2540 = vpop.f32.mrf.mxu0
    %2541 = vdwg.mxu0
    %v2542 = vmul.f32 %v2494, %v2537
    %v2543 = vadd.f32 %v1911, %v2542
    %v2544 = vtanh.pop %v2543
    %v2545 = vsub.f32 1.0, %v2501
    %v2546 = vmul.f32 %v2545, %v2544
    %v2547 = vmul.f32 %v2501, %v2403
    %v2548 = vadd.f32 %v2546, %v2547
    %v2549 = vpack.c.bf16 %v2548, %v2548
    %v2551 = vsel %vm182, %v2549, 0
    %2553 = vmatprep.subr.bf16.mxu0 0
    %2554 = vmatpush1.bf16.msra.mxu0 0
    %2555 = vmatprep.subr.bf16.mxu0 0
    %2556 = vmatpush1.bf16.msra.mxu0 0
    %2557 = vmatprep.subr.bf16.mxu0 0
    %2558 = vmatpush1.bf16.msra.mxu0 0
    %2559 = vmatprep.subr.bf16.mxu0 0
    %2560 = vmatpush1.bf16.msra.mxu0 0
    %2561 = vmatprep.subr.bf16.mxu0 0
    %2562 = vmatpush1.bf16.msra.mxu0 0
    %2563 = vmatprep.subr.bf16.mxu0 0
    %2564 = vmatpush1.bf16.msra.mxu0 0
    %2565 = vmatprep.subr.bf16.mxu0 0
    %2566 = vmatpush1.bf16.msra.mxu0 %v1946
    %2567 = vmatprep.subr.bf16.mxu0 0
    %2568 = vmatpush1.bf16.msra.mxu0 %v1945
    %2569 = vmatprep.subr.bf16.mxu0 0
    %2570 = vmatpush2.bf16.msra.mxu0 0
    %2571 = vmatprep.subr.bf16.mxu0 0
    %2572 = vmatpush2.bf16.msra.mxu0 0
    %2573 = vmatprep.subr.bf16.mxu0 0
    %2574 = vmatpush2.bf16.msra.mxu0 0
    %2575 = vmatprep.subr.bf16.mxu0 0
    %2576 = vmatpush2.bf16.msra.mxu0 0
    %2577 = vmatprep.subr.bf16.mxu0 0
    %2578 = vmatpush2.bf16.msra.mxu0 0
    %2579 = vmatprep.subr.bf16.mxu0 0
    %2580 = vmatpush2.bf16.msra.mxu0 0
    %2581 = vmatprep.subr.bf16.mxu0 0
    %2582 = vmatpush2.bf16.msra.mxu0 0
    %2583 = vmatprep.subr.bf16.mxu0 0
    %2584 = vmatpush2.bf16.msra.mxu0 0
    %2585 = vmatprep.mubr.bf16.mxu0 0
    %2586 = vmatmul.mubr.bf16.gmra.mxu0 %v2551
    %v2587 = vpop.f32.mrf.mxu0
    %v2588 = vadd.f32 0.0, %v2587
    %v2589 = vpop.f32.mrf.mxu0
    %v2590 = vpop.f32.mrf.mxu0
    %v2591 = vpop.f32.mrf.mxu0
    %2592 = vdwg.mxu0
    %2593 = vmatprep.subr.bf16.mxu0 0
    %2594 = vmatpush1.bf16.msra.mxu0 0
    %2595 = vmatprep.subr.bf16.mxu0 0
    %2596 = vmatpush1.bf16.msra.mxu0 0
    %2597 = vmatprep.subr.bf16.mxu0 0
    %2598 = vmatpush1.bf16.msra.mxu0 0
    %2599 = vmatprep.subr.bf16.mxu0 0
    %2600 = vmatpush1.bf16.msra.mxu0 0
    %2601 = vmatprep.subr.bf16.mxu0 0
    %2602 = vmatpush1.bf16.msra.mxu0 0
    %2603 = vmatprep.subr.bf16.mxu0 0
    %2604 = vmatpush1.bf16.msra.mxu0 0
    %2605 = vmatprep.subr.bf16.mxu0 0
    %2606 = vmatpush1.bf16.msra.mxu0 %v1998
    %2607 = vmatprep.subr.bf16.mxu0 0
    %2608 = vmatpush1.bf16.msra.mxu0 %v1997
    %2609 = vmatprep.subr.bf16.mxu0 0
    %2610 = vmatpush2.bf16.msra.mxu0 0
    %2611 = vmatprep.subr.bf16.mxu0 0
    %2612 = vmatpush2.bf16.msra.mxu0 0
    %2613 = vmatprep.subr.bf16.mxu0 0
    %2614 = vmatpush2.bf16.msra.mxu0 0
    %2615 = vmatprep.subr.bf16.mxu0 0
    %2616 = vmatpush2.bf16.msra.mxu0 0
    %2617 = vmatprep.subr.bf16.mxu0 0
    %2618 = vmatpush2.bf16.msra.mxu0 0
    %2619 = vmatprep.subr.bf16.mxu0 0
    %2620 = vmatpush2.bf16.msra.mxu0 0
    %2621 = vmatprep.subr.bf16.mxu0 0
    %2622 = vmatpush2.bf16.msra.mxu0 0
    %2623 = vmatprep.subr.bf16.mxu0 0
    %2624 = vmatpush2.bf16.msra.mxu0 0
    %2625 = vmatprep.mubr.bf16.mxu0 0
    %2626 = vmatmul.mubr.bf16.gmra.mxu0 %v2551
    %v2627 = vpop.f32.mrf.mxu0
    %v2628 = vadd.f32 0.0, %v2627
    %v2629 = vpop.f32.mrf.mxu0
    %v2630 = vpop.f32.mrf.mxu0
    %v2631 = vpop.f32.mrf.mxu0
    %2632 = vdwg.mxu0
    %v2633 = vadd.f32 %v1740, %v2588
    %v2634 = vxor.u32 %v2633, 2147483648
    %v2635 = vmul.f32 %v2634, 1.442695
    %v2636 = vpow.pop %v2635
    %v2637 = vadd.f32 %v2636, 1.0
    %v2638 = vrcp.pop %v2637
    %v2639 = vmul.f32 1.0, %v2638
    %v2640 = vadd.f32 %v1828, %v2628
    %v2641 = vxor.u32 %v2640, 2147483648
    %v2642 = vmul.f32 %v2641, 1.442695
    %v2643 = vpow.pop %v2642
    %v2644 = vadd.f32 %v2643, 1.0
    %v2645 = vrcp.pop %v2644
    %v2646 = vmul.f32 1.0, %v2645
    %2647 = vmatprep.subr.bf16.mxu0 0
    %2648 = vmatpush1.bf16.msra.mxu0 0
    %2649 = vmatprep.subr.bf16.mxu0 0
    %2650 = vmatpush1.bf16.msra.mxu0 0
    %2651 = vmatprep.subr.bf16.mxu0 0
    %2652 = vmatpush1.bf16.msra.mxu0 0
    %2653 = vmatprep.subr.bf16.mxu0 0
    %2654 = vmatpush1.bf16.msra.mxu0 0
    %2655 = vmatprep.subr.bf16.mxu0 0
    %2656 = vmatpush1.bf16.msra.mxu0 0
    %2657 = vmatprep.subr.bf16.mxu0 0
    %2658 = vmatpush1.bf16.msra.mxu0 0
    %2659 = vmatprep.subr.bf16.mxu0 0
    %2660 = vmatpush1.bf16.msra.mxu0 %v2064
    %2661 = vmatprep.subr.bf16.mxu0 0
    %2662 = vmatpush1.bf16.msra.mxu0 %v2063
    %2663 = vmatprep.subr.bf16.mxu0 0
    %2664 = vmatpush2.bf16.msra.mxu0 0
    %2665 = vmatprep.subr.bf16.mxu0 0
    %2666 = vmatpush2.bf16.msra.mxu0 0
    %2667 = vmatprep.subr.bf16.mxu0 0
    %2668 = vmatpush2.bf16.msra.mxu0 0
    %2669 = vmatprep.subr.bf16.mxu0 0
    %2670 = vmatpush2.bf16.msra.mxu0 0
    %2671 = vmatprep.subr.bf16.mxu0 0
    %2672 = vmatpush2.bf16.msra.mxu0 0
    %2673 = vmatprep.subr.bf16.mxu0 0
    %2674 = vmatpush2.bf16.msra.mxu0 0
    %2675 = vmatprep.subr.bf16.mxu0 0
    %2676 = vmatpush2.bf16.msra.mxu0 0
    %2677 = vmatprep.subr.bf16.mxu0 0
    %2678 = vmatpush2.bf16.msra.mxu0 0
    %2679 = vmatprep.mubr.bf16.mxu0 0
    %2680 = vmatmul.mubr.bf16.gmra.mxu0 %v2551
    %v2681 = vpop.f32.mrf.mxu0
    %v2682 = vadd.f32 %v1935, %v2681
    %v2683 = vpop.f32.mrf.mxu0
    %v2684 = vpop.f32.mrf.mxu0
    %v2685 = vpop.f32.mrf.mxu0
    %2686 = vdwg.mxu0
    %v2687 = vmul.f32 %v2639, %v2682
    %v2688 = vadd.f32 %v1916, %v2687
    %v2689 = vtanh.pop %v2688
    %v2690 = vsub.f32 1.0, %v2646
    %v2691 = vmul.f32 %v2690, %v2689
    %v2692 = vmul.f32 %v2646, %v2548
    %v2693 = vadd.f32 %v2691, %v2692
    %v2694 = vpack.c.bf16 %v2693, %v2693
    %v2696 = vsel %vm182, %v2694, 0
    %2698 = vmatprep.subr.bf16.mxu0 0
    %2699 = vmatpush1.bf16.msra.mxu0 0
    %2700 = vmatprep.subr.bf16.mxu0 0
    %2701 = vmatpush1.bf16.msra.mxu0 0
    %2702 = vmatprep.subr.bf16.mxu0 0
    %2703 = vmatpush1.bf16.msra.mxu0 0
    %2704 = vmatprep.subr.bf16.mxu0 0
    %2705 = vmatpush1.bf16.msra.mxu0 0
    %2706 = vmatprep.subr.bf16.mxu0 0
    %2707 = vmatpush1.bf16.msra.mxu0 0
    %2708 = vmatprep.subr.bf16.mxu0 0
    %2709 = vmatpush1.bf16.msra.mxu0 0
    %2710 = vmatprep.subr.bf16.mxu0 0
    %2711 = vmatpush1.bf16.msra.mxu0 %v1946
    %2712 = vmatprep.subr.bf16.mxu0 0
    %2713 = vmatpush1.bf16.msra.mxu0 %v1945
    %2714 = vmatprep.subr.bf16.mxu0 0
    %2715 = vmatpush2.bf16.msra.mxu0 0
    %2716 = vmatprep.subr.bf16.mxu0 0
    %2717 = vmatpush2.bf16.msra.mxu0 0
    %2718 = vmatprep.subr.bf16.mxu0 0
    %2719 = vmatpush2.bf16.msra.mxu0 0
    %2720 = vmatprep.subr.bf16.mxu0 0
    %2721 = vmatpush2.bf16.msra.mxu0 0
    %2722 = vmatprep.subr.bf16.mxu0 0
    %2723 = vmatpush2.bf16.msra.mxu0 0
    %2724 = vmatprep.subr.bf16.mxu0 0
    %2725 = vmatpush2.bf16.msra.mxu0 0
    %2726 = vmatprep.subr.bf16.mxu0 0
    %2727 = vmatpush2.bf16.msra.mxu0 0
    %2728 = vmatprep.subr.bf16.mxu0 0
    %2729 = vmatpush2.bf16.msra.mxu0 0
    %2730 = vmatprep.mubr.bf16.mxu0 0
    %2731 = vmatmul.mubr.bf16.gmra.mxu0 %v2696
    %v2732 = vpop.f32.mrf.mxu0
    %v2733 = vadd.f32 0.0, %v2732
    %v2734 = vpop.f32.mrf.mxu0
    %v2735 = vpop.f32.mrf.mxu0
    %v2736 = vpop.f32.mrf.mxu0
    %2737 = vdwg.mxu0
    %2738 = vmatprep.subr.bf16.mxu0 0
    %2739 = vmatpush1.bf16.msra.mxu0 0
    %2740 = vmatprep.subr.bf16.mxu0 0
    %2741 = vmatpush1.bf16.msra.mxu0 0
    %2742 = vmatprep.subr.bf16.mxu0 0
    %2743 = vmatpush1.bf16.msra.mxu0 0
    %2744 = vmatprep.subr.bf16.mxu0 0
    %2745 = vmatpush1.bf16.msra.mxu0 0
    %2746 = vmatprep.subr.bf16.mxu0 0
    %2747 = vmatpush1.bf16.msra.mxu0 0
    %2748 = vmatprep.subr.bf16.mxu0 0
    %2749 = vmatpush1.bf16.msra.mxu0 0
    %2750 = vmatprep.subr.bf16.mxu0 0
    %2751 = vmatpush1.bf16.msra.mxu0 %v1998
    %2752 = vmatprep.subr.bf16.mxu0 0
    %2753 = vmatpush1.bf16.msra.mxu0 %v1997
    %2754 = vmatprep.subr.bf16.mxu0 0
    %2755 = vmatpush2.bf16.msra.mxu0 0
    %2756 = vmatprep.subr.bf16.mxu0 0
    %2757 = vmatpush2.bf16.msra.mxu0 0
    %2758 = vmatprep.subr.bf16.mxu0 0
    %2759 = vmatpush2.bf16.msra.mxu0 0
    %2760 = vmatprep.subr.bf16.mxu0 0
    %2761 = vmatpush2.bf16.msra.mxu0 0
    %2762 = vmatprep.subr.bf16.mxu0 0
    %2763 = vmatpush2.bf16.msra.mxu0 0
    %2764 = vmatprep.subr.bf16.mxu0 0
    %2765 = vmatpush2.bf16.msra.mxu0 0
    %2766 = vmatprep.subr.bf16.mxu0 0
    %2767 = vmatpush2.bf16.msra.mxu0 0
    %2768 = vmatprep.subr.bf16.mxu0 0
    %2769 = vmatpush2.bf16.msra.mxu0 0
    %2770 = vmatprep.mubr.bf16.mxu0 0
    %2771 = vmatmul.mubr.bf16.gmra.mxu0 %v2696
    %v2772 = vpop.f32.mrf.mxu0
    %v2773 = vadd.f32 0.0, %v2772
    %v2774 = vpop.f32.mrf.mxu0
    %v2775 = vpop.f32.mrf.mxu0
    %v2776 = vpop.f32.mrf.mxu0
    %2777 = vdwg.mxu0
    %v2778 = vadd.f32 %v1743, %v2733
    %v2779 = vxor.u32 %v2778, 2147483648
    %v2780 = vmul.f32 %v2779, 1.442695
    %v2781 = vpow.pop %v2780
    %v2782 = vadd.f32 %v2781, 1.0
    %v2783 = vrcp.pop %v2782
    %v2784 = vmul.f32 1.0, %v2783
    %v2785 = vadd.f32 %v1831, %v2773
    %v2786 = vxor.u32 %v2785, 2147483648
    %v2787 = vmul.f32 %v2786, 1.442695
    %v2788 = vpow.pop %v2787
    %v2789 = vadd.f32 %v2788, 1.0
    %v2790 = vrcp.pop %v2789
    %v2791 = vmul.f32 1.0, %v2790
    %2792 = vmatprep.subr.bf16.mxu0 0
    %2793 = vmatpush1.bf16.msra.mxu0 0
    %2794 = vmatprep.subr.bf16.mxu0 0
    %2795 = vmatpush1.bf16.msra.mxu0 0
    %2796 = vmatprep.subr.bf16.mxu0 0
    %2797 = vmatpush1.bf16.msra.mxu0 0
    %2798 = vmatprep.subr.bf16.mxu0 0
    %2799 = vmatpush1.bf16.msra.mxu0 0
    %2800 = vmatprep.subr.bf16.mxu0 0
    %2801 = vmatpush1.bf16.msra.mxu0 0
    %2802 = vmatprep.subr.bf16.mxu0 0
    %2803 = vmatpush1.bf16.msra.mxu0 0
    %2804 = vmatprep.subr.bf16.mxu0 0
    %2805 = vmatpush1.bf16.msra.mxu0 %v2064
    %2806 = vmatprep.subr.bf16.mxu0 0
    %2807 = vmatpush1.bf16.msra.mxu0 %v2063
    %2808 = vmatprep.subr.bf16.mxu0 0
    %2809 = vmatpush2.bf16.msra.mxu0 0
    %2810 = vmatprep.subr.bf16.mxu0 0
    %2811 = vmatpush2.bf16.msra.mxu0 0
    %2812 = vmatprep.subr.bf16.mxu0 0
    %2813 = vmatpush2.bf16.msra.mxu0 0
    %2814 = vmatprep.subr.bf16.mxu0 0
    %2815 = vmatpush2.bf16.msra.mxu0 0
    %2816 = vmatprep.subr.bf16.mxu0 0
    %2817 = vmatpush2.bf16.msra.mxu0 0
    %2818 = vmatprep.subr.bf16.mxu0 0
    %2819 = vmatpush2.bf16.msra.mxu0 0
    %2820 = vmatprep.subr.bf16.mxu0 0
    %2821 = vmatpush2.bf16.msra.mxu0 0
    %2822 = vmatprep.subr.bf16.mxu0 0
    %2823 = vmatpush2.bf16.msra.mxu0 0
    %2824 = vmatprep.mubr.bf16.mxu0 0
    %2825 = vmatmul.mubr.bf16.gmra.mxu0 %v2696
    %v2826 = vpop.f32.mrf.mxu0
    %v2827 = vadd.f32 %v1935, %v2826
    %v2828 = vpop.f32.mrf.mxu0
    %v2829 = vpop.f32.mrf.mxu0
    %v2830 = vpop.f32.mrf.mxu0
    %2831 = vdwg.mxu0
    %v2832 = vmul.f32 %v2784, %v2827
    %v2833 = vadd.f32 %v1919, %v2832
    %v2834 = vtanh.pop %v2833
    %v2835 = vsub.f32 1.0, %v2791
    %v2836 = vmul.f32 %v2835, %v2834
    %v2837 = vmul.f32 %v2791, %v2693
    %v2838 = vadd.f32 %v2836, %v2837
    %v2839 = vpack.c.bf16 %v2838, %v2838
    %v2841 = vsel %vm182, %v2839, 0
    %2843 = vmatprep.subr.bf16.mxu0 0
    %2844 = vmatpush1.bf16.msra.mxu0 0
    %2845 = vmatprep.subr.bf16.mxu0 0
    %2846 = vmatpush1.bf16.msra.mxu0 0
    %2847 = vmatprep.subr.bf16.mxu0 0
    %2848 = vmatpush1.bf16.msra.mxu0 0
    %2849 = vmatprep.subr.bf16.mxu0 0
    %2850 = vmatpush1.bf16.msra.mxu0 0
    %2851 = vmatprep.subr.bf16.mxu0 0
    %2852 = vmatpush1.bf16.msra.mxu0 0
    %2853 = vmatprep.subr.bf16.mxu0 0
    %2854 = vmatpush1.bf16.msra.mxu0 0
    %2855 = vmatprep.subr.bf16.mxu0 0
    %2856 = vmatpush1.bf16.msra.mxu0 %v1946
    %2857 = vmatprep.subr.bf16.mxu0 0
    %2858 = vmatpush1.bf16.msra.mxu0 %v1945
    %2859 = vmatprep.subr.bf16.mxu0 0
    %2860 = vmatpush2.bf16.msra.mxu0 0
    %2861 = vmatprep.subr.bf16.mxu0 0
    %2862 = vmatpush2.bf16.msra.mxu0 0
    %2863 = vmatprep.subr.bf16.mxu0 0
    %2864 = vmatpush2.bf16.msra.mxu0 0
    %2865 = vmatprep.subr.bf16.mxu0 0
    %2866 = vmatpush2.bf16.msra.mxu0 0
    %2867 = vmatprep.subr.bf16.mxu0 0
    %2868 = vmatpush2.bf16.msra.mxu0 0
    %2869 = vmatprep.subr.bf16.mxu0 0
    %2870 = vmatpush2.bf16.msra.mxu0 0
    %2871 = vmatprep.subr.bf16.mxu0 0
    %2872 = vmatpush2.bf16.msra.mxu0 0
    %2873 = vmatprep.subr.bf16.mxu0 0
    %2874 = vmatpush2.bf16.msra.mxu0 0
    %2875 = vmatprep.mubr.bf16.mxu0 0
    %2876 = vmatmul.mubr.bf16.gmra.mxu0 %v2841
    %v2877 = vpop.f32.mrf.mxu0
    %v2878 = vadd.f32 0.0, %v2877
    %v2879 = vpop.f32.mrf.mxu0
    %v2880 = vpop.f32.mrf.mxu0
    %v2881 = vpop.f32.mrf.mxu0
    %2882 = vdwg.mxu0
    %2883 = vmatprep.subr.bf16.mxu0 0
    %2884 = vmatpush1.bf16.msra.mxu0 0
    %2885 = vmatprep.subr.bf16.mxu0 0
    %2886 = vmatpush1.bf16.msra.mxu0 0
    %2887 = vmatprep.subr.bf16.mxu0 0
    %2888 = vmatpush1.bf16.msra.mxu0 0
    %2889 = vmatprep.subr.bf16.mxu0 0
    %2890 = vmatpush1.bf16.msra.mxu0 0
    %2891 = vmatprep.subr.bf16.mxu0 0
    %2892 = vmatpush1.bf16.msra.mxu0 0
    %2893 = vmatprep.subr.bf16.mxu0 0
    %2894 = vmatpush1.bf16.msra.mxu0 0
    %2895 = vmatprep.subr.bf16.mxu0 0
    %2896 = vmatpush1.bf16.msra.mxu0 %v1998
    %2897 = vmatprep.subr.bf16.mxu0 0
    %2898 = vmatpush1.bf16.msra.mxu0 %v1997
    %2899 = vmatprep.subr.bf16.mxu0 0
    %2900 = vmatpush2.bf16.msra.mxu0 0
    %2901 = vmatprep.subr.bf16.mxu0 0
    %2902 = vmatpush2.bf16.msra.mxu0 0
    %2903 = vmatprep.subr.bf16.mxu0 0
    %2904 = vmatpush2.bf16.msra.mxu0 0
    %2905 = vmatprep.subr.bf16.mxu0 0
    %2906 = vmatpush2.bf16.msra.mxu0 0
    %2907 = vmatprep.subr.bf16.mxu0 0
    %2908 = vmatpush2.bf16.msra.mxu0 0
    %2909 = vmatprep.subr.bf16.mxu0 0
    %2910 = vmatpush2.bf16.msra.mxu0 0
    %2911 = vmatprep.subr.bf16.mxu0 0
    %2912 = vmatpush2.bf16.msra.mxu0 0
    %2913 = vmatprep.subr.bf16.mxu0 0
    %2914 = vmatpush2.bf16.msra.mxu0 0
    %2915 = vmatprep.mubr.bf16.mxu0 0
    %2916 = vmatmul.mubr.bf16.gmra.mxu0 %v2841
    %v2917 = vpop.f32.mrf.mxu0
    %v2918 = vadd.f32 0.0, %v2917
    %v2919 = vpop.f32.mrf.mxu0
    %v2920 = vpop.f32.mrf.mxu0
    %v2921 = vpop.f32.mrf.mxu0
    %2922 = vdwg.mxu0
    %v2923 = vadd.f32 %v1748, %v2878
    %v2924 = vxor.u32 %v2923, 2147483648
    %v2925 = vmul.f32 %v2924, 1.442695
    %v2926 = vpow.pop %v2925
    %v2927 = vadd.f32 %v2926, 1.0
    %v2928 = vrcp.pop %v2927
    %v2929 = vmul.f32 1.0, %v2928
    %v2930 = vadd.f32 %v1836, %v2918
    %v2931 = vxor.u32 %v2930, 2147483648
    %v2932 = vmul.f32 %v2931, 1.442695
    %v2933 = vpow.pop %v2932
    %v2934 = vadd.f32 %v2933, 1.0
    %v2935 = vrcp.pop %v2934
    %v2936 = vmul.f32 1.0, %v2935
    %2937 = vmatprep.subr.bf16.mxu0 0
    %2938 = vmatpush1.bf16.msra.mxu0 0
    %2939 = vmatprep.subr.bf16.mxu0 0
    %2940 = vmatpush1.bf16.msra.mxu0 0
    %2941 = vmatprep.subr.bf16.mxu0 0
    %2942 = vmatpush1.bf16.msra.mxu0 0
    %2943 = vmatprep.subr.bf16.mxu0 0
    %2944 = vmatpush1.bf16.msra.mxu0 0
    %2945 = vmatprep.subr.bf16.mxu0 0
    %2946 = vmatpush1.bf16.msra.mxu0 0
    %2947 = vmatprep.subr.bf16.mxu0 0
    %2948 = vmatpush1.bf16.msra.mxu0 0
    %2949 = vmatprep.subr.bf16.mxu0 0
    %2950 = vmatpush1.bf16.msra.mxu0 %v2064
    %2951 = vmatprep.subr.bf16.mxu0 0
    %2952 = vmatpush1.bf16.msra.mxu0 %v2063
    %2953 = vmatprep.subr.bf16.mxu0 0
    %2954 = vmatpush2.bf16.msra.mxu0 0
    %2955 = vmatprep.subr.bf16.mxu0 0
    %2956 = vmatpush2.bf16.msra.mxu0 0
    %2957 = vmatprep.subr.bf16.mxu0 0
    %2958 = vmatpush2.bf16.msra.mxu0 0
    %2959 = vmatprep.subr.bf16.mxu0 0
    %2960 = vmatpush2.bf16.msra.mxu0 0
    %2961 = vmatprep.subr.bf16.mxu0 0
    %2962 = vmatpush2.bf16.msra.mxu0 0
    %2963 = vmatprep.subr.bf16.mxu0 0
    %2964 = vmatpush2.bf16.msra.mxu0 0
    %2965 = vmatprep.subr.bf16.mxu0 0
    %2966 = vmatpush2.bf16.msra.mxu0 0
    %2967 = vmatprep.subr.bf16.mxu0 0
    %2968 = vmatpush2.bf16.msra.mxu0 0
    %2969 = vmatprep.mubr.bf16.mxu0 0
    %2970 = vmatmul.mubr.bf16.gmra.mxu0 %v2841
    %v2971 = vpop.f32.mrf.mxu0
    %v2972 = vadd.f32 %v1935, %v2971
    %v2973 = vpop.f32.mrf.mxu0
    %v2974 = vpop.f32.mrf.mxu0
    %v2975 = vpop.f32.mrf.mxu0
    %2976 = vdwg.mxu0
    %v2977 = vmul.f32 %v2929, %v2972
    %v2978 = vadd.f32 %v1924, %v2977
    %v2979 = vtanh.pop %v2978
    %v2980 = vsub.f32 1.0, %v2936
    %v2981 = vmul.f32 %v2980, %v2979
    %v2982 = vmul.f32 %v2936, %v2838
    %v2983 = vadd.f32 %v2981, %v2982
    %v2984 = vpack.c.bf16 %v2983, %v2983
    %v2986 = vsel %vm182, %v2984, 0
    %2988 = vmatprep.subr.bf16.mxu0 0
    %2989 = vmatpush1.bf16.msra.mxu0 0
    %2990 = vmatprep.subr.bf16.mxu0 0
    %2991 = vmatpush1.bf16.msra.mxu0 0
    %2992 = vmatprep.subr.bf16.mxu0 0
    %2993 = vmatpush1.bf16.msra.mxu0 0
    %2994 = vmatprep.subr.bf16.mxu0 0
    %2995 = vmatpush1.bf16.msra.mxu0 0
    %2996 = vmatprep.subr.bf16.mxu0 0
    %2997 = vmatpush1.bf16.msra.mxu0 0
    %2998 = vmatprep.subr.bf16.mxu0 0
    %2999 = vmatpush1.bf16.msra.mxu0 0
    %3000 = vmatprep.subr.bf16.mxu0 0
    %3001 = vmatpush1.bf16.msra.mxu0 %v1946
    %3002 = vmatprep.subr.bf16.mxu0 0
    %3003 = vmatpush1.bf16.msra.mxu0 %v1945
    %3004 = vmatprep.subr.bf16.mxu0 0
    %3005 = vmatpush2.bf16.msra.mxu0 0
    %3006 = vmatprep.subr.bf16.mxu0 0
    %3007 = vmatpush2.bf16.msra.mxu0 0
    %3008 = vmatprep.subr.bf16.mxu0 0
    %3009 = vmatpush2.bf16.msra.mxu0 0
    %3010 = vmatprep.subr.bf16.mxu0 0
    %3011 = vmatpush2.bf16.msra.mxu0 0
    %3012 = vmatprep.subr.bf16.mxu0 0
    %3013 = vmatpush2.bf16.msra.mxu0 0
    %3014 = vmatprep.subr.bf16.mxu0 0
    %3015 = vmatpush2.bf16.msra.mxu0 0
    %3016 = vmatprep.subr.bf16.mxu0 0
    %3017 = vmatpush2.bf16.msra.mxu0 0
    %3018 = vmatprep.subr.bf16.mxu0 0
    %3019 = vmatpush2.bf16.msra.mxu0 0
    %3020 = vmatprep.mubr.bf16.mxu0 0
    %3021 = vmatmul.mubr.bf16.gmra.mxu0 %v2986
    %v3022 = vpop.f32.mrf.mxu0
    %v3023 = vadd.f32 0.0, %v3022
    %v3024 = vpop.f32.mrf.mxu0
    %v3025 = vpop.f32.mrf.mxu0
    %v3026 = vpop.f32.mrf.mxu0
    %3027 = vdwg.mxu0
    %3028 = vmatprep.subr.bf16.mxu0 0
    %3029 = vmatpush1.bf16.msra.mxu0 0
    %3030 = vmatprep.subr.bf16.mxu0 0
    %3031 = vmatpush1.bf16.msra.mxu0 0
    %3032 = vmatprep.subr.bf16.mxu0 0
    %3033 = vmatpush1.bf16.msra.mxu0 0
    %3034 = vmatprep.subr.bf16.mxu0 0
    %3035 = vmatpush1.bf16.msra.mxu0 0
    %3036 = vmatprep.subr.bf16.mxu0 0
    %3037 = vmatpush1.bf16.msra.mxu0 0
    %3038 = vmatprep.subr.bf16.mxu0 0
    %3039 = vmatpush1.bf16.msra.mxu0 0
    %3040 = vmatprep.subr.bf16.mxu0 0
    %3041 = vmatpush1.bf16.msra.mxu0 %v1998
    %3042 = vmatprep.subr.bf16.mxu0 0
    %3043 = vmatpush1.bf16.msra.mxu0 %v1997
    %3044 = vmatprep.subr.bf16.mxu0 0
    %3045 = vmatpush2.bf16.msra.mxu0 0
    %3046 = vmatprep.subr.bf16.mxu0 0
    %3047 = vmatpush2.bf16.msra.mxu0 0
    %3048 = vmatprep.subr.bf16.mxu0 0
    %3049 = vmatpush2.bf16.msra.mxu0 0
    %3050 = vmatprep.subr.bf16.mxu0 0
    %3051 = vmatpush2.bf16.msra.mxu0 0
    %3052 = vmatprep.subr.bf16.mxu0 0
    %3053 = vmatpush2.bf16.msra.mxu0 0
    %3054 = vmatprep.subr.bf16.mxu0 0
    %3055 = vmatpush2.bf16.msra.mxu0 0
    %3056 = vmatprep.subr.bf16.mxu0 0
    %3057 = vmatpush2.bf16.msra.mxu0 0
    %3058 = vmatprep.subr.bf16.mxu0 0
    %3059 = vmatpush2.bf16.msra.mxu0 0
    %3060 = vmatprep.mubr.bf16.mxu0 0
    %3061 = vmatmul.mubr.bf16.gmra.mxu0 %v2986
    %v3062 = vpop.f32.mrf.mxu0
    %v3063 = vadd.f32 0.0, %v3062
    %v3064 = vpop.f32.mrf.mxu0
    %v3065 = vpop.f32.mrf.mxu0
    %v3066 = vpop.f32.mrf.mxu0
    %3067 = vdwg.mxu0
    %v3068 = vadd.f32 %v1751, %v3023
    %v3069 = vxor.u32 %v3068, 2147483648
    %v3070 = vmul.f32 %v3069, 1.442695
    %v3071 = vpow.pop %v3070
    %v3072 = vadd.f32 %v3071, 1.0
    %v3073 = vrcp.pop %v3072
    %v3074 = vmul.f32 1.0, %v3073
    %v3075 = vadd.f32 %v1839, %v3063
    %v3076 = vxor.u32 %v3075, 2147483648
    %v3077 = vmul.f32 %v3076, 1.442695
    %v3078 = vpow.pop %v3077
    %v3079 = vadd.f32 %v3078, 1.0
    %v3080 = vrcp.pop %v3079
    %v3081 = vmul.f32 1.0, %v3080
    %3082 = vmatprep.subr.bf16.mxu0 0
    %3083 = vmatpush1.bf16.msra.mxu0 0
    %3084 = vmatprep.subr.bf16.mxu0 0
    %3085 = vmatpush1.bf16.msra.mxu0 0
    %3086 = vmatprep.subr.bf16.mxu0 0
    %3087 = vmatpush1.bf16.msra.mxu0 0
    %3088 = vmatprep.subr.bf16.mxu0 0
    %3089 = vmatpush1.bf16.msra.mxu0 0
    %3090 = vmatprep.subr.bf16.mxu0 0
    %3091 = vmatpush1.bf16.msra.mxu0 0
    %3092 = vmatprep.subr.bf16.mxu0 0
    %3093 = vmatpush1.bf16.msra.mxu0 0
    %3094 = vmatprep.subr.bf16.mxu0 0
    %3095 = vmatpush1.bf16.msra.mxu0 %v2064
    %3096 = vmatprep.subr.bf16.mxu0 0
    %3097 = vmatpush1.bf16.msra.mxu0 %v2063
    %3098 = vmatprep.subr.bf16.mxu0 0
    %3099 = vmatpush2.bf16.msra.mxu0 0
    %3100 = vmatprep.subr.bf16.mxu0 0
    %3101 = vmatpush2.bf16.msra.mxu0 0
    %3102 = vmatprep.subr.bf16.mxu0 0
    %3103 = vmatpush2.bf16.msra.mxu0 0
    %3104 = vmatprep.subr.bf16.mxu0 0
    %3105 = vmatpush2.bf16.msra.mxu0 0
    %3106 = vmatprep.subr.bf16.mxu0 0
    %3107 = vmatpush2.bf16.msra.mxu0 0
    %3108 = vmatprep.subr.bf16.mxu0 0
    %3109 = vmatpush2.bf16.msra.mxu0 0
    %3110 = vmatprep.subr.bf16.mxu0 0
    %3111 = vmatpush2.bf16.msra.mxu0 0
    %3112 = vmatprep.subr.bf16.mxu0 0
    %3113 = vmatpush2.bf16.msra.mxu0 0
    %3114 = vmatprep.mubr.bf16.mxu0 0
    %3115 = vmatmul.mubr.bf16.gmra.mxu0 %v2986
    %v3116 = vpop.f32.mrf.mxu0
    %v3117 = vadd.f32 %v1935, %v3116
    %v3118 = vpop.f32.mrf.mxu0
    %v3119 = vpop.f32.mrf.mxu0
    %v3120 = vpop.f32.mrf.mxu0
    %3121 = vdwg.mxu0
    %v3122 = vmul.f32 %v3074, %v3117
    %v3123 = vadd.f32 %v1927, %v3122
    %v3124 = vtanh.pop %v3123
    %v3125 = vsub.f32 1.0, %v3081
    %v3126 = vmul.f32 %v3125, %v3124
    %v3127 = vmul.f32 %v3081, %v2983
    %v3128 = vadd.f32 %v3126, %v3127
    %v3129 = vpack.c.bf16 %v2258, %v2113
    %v3130 = vpack.c.bf16 %v2548, %v2403
    %v3131 = vpack.c.bf16 %v2838, %v2693
    %v3132 = vpack.c.bf16 %v3128, %v2983
    %v3133 = vld [vmem:[%s45] sm:$0xf]
    %v3134 = vld [vmem:[%s45 + $0x4] sm:$0xf]
    %v3135 = vld [vmem:[%s45 + $0x8] sm:$0xf]
    %v3136 = vld [vmem:[%s45 + $0xc] sm:$0xf]
    %v3137 = vld [vmem:[%s47] sm:$0x1]
    %v3139 = vlaneseq
    %v3140 = vshrl.u32 %v3139, 7
    %v3141 = vsub.s32 0, %v3140
    %v3142 = vrot.slane %v3137, %v3141
    %v3148 = vunpack.c.l.b16 %v3133
    %v3149 = vunpack.c.l.b16 %v3134
    %v3150 = vunpack.c.l.b16 %v3135
    %v3151 = vunpack.c.l.b16 %v3136
    %v3152 = vpack.c.b16 %v3149, %v3148
    %v3153 = vpack.c.b16 %v3151, %v3150
    %v3157 = vsel %vm182, %v3129, 0
    %v3160 = vsel %vm182, %v3130, 0
    %v3163 = vsel %vm182, %v3131, 0
    %v3166 = vsel %vm182, %v3132, 0
    %3168 = vmatprep.subr.bf16.mxu0 0
    %3169 = vmatpush1.bf16.msra.mxu0 0
    %3170 = vmatprep.subr.bf16.mxu0 0
    %3171 = vmatpush1.bf16.msra.mxu0 0
    %3172 = vmatprep.subr.bf16.mxu0 0
    %3173 = vmatpush1.bf16.msra.mxu0 0
    %3174 = vmatprep.subr.bf16.mxu0 0
    %3175 = vmatpush1.bf16.msra.mxu0 0
    %3176 = vmatprep.subr.bf16.mxu0 0
    %3177 = vmatpush1.bf16.msra.mxu0 0
    %3178 = vmatprep.subr.bf16.mxu0 0
    %3179 = vmatpush1.bf16.msra.mxu0 0
    %3180 = vmatprep.subr.bf16.mxu0 0
    %3181 = vmatpush1.bf16.msra.mxu0 %v3153
    %3182 = vmatprep.subr.bf16.mxu0 0
    %3183 = vmatpush1.bf16.msra.mxu0 %v3152
    %3184 = vmatprep.subr.bf16.mxu0 0
    %3185 = vmatpush2.bf16.msra.mxu0 0
    %3186 = vmatprep.subr.bf16.mxu0 0
    %3187 = vmatpush2.bf16.msra.mxu0 0
    %3188 = vmatprep.subr.bf16.mxu0 0
    %3189 = vmatpush2.bf16.msra.mxu0 0
    %3190 = vmatprep.subr.bf16.mxu0 0
    %3191 = vmatpush2.bf16.msra.mxu0 0
    %3192 = vmatprep.subr.bf16.mxu0 0
    %3193 = vmatpush2.bf16.msra.mxu0 0
    %3194 = vmatprep.subr.bf16.mxu0 0
    %3195 = vmatpush2.bf16.msra.mxu0 0
    %3196 = vmatprep.subr.bf16.mxu0 0
    %3197 = vmatpush2.bf16.msra.mxu0 0
    %3198 = vmatprep.subr.bf16.mxu0 0
    %3199 = vmatpush2.bf16.msra.mxu0 0
    %3200 = vmatprep.mubr.bf16.mxu0 0
    %3201 = vmatmul.mubr.bf16.gmra.mxu0 %v3157
    %v3202 = vpop.f32.mrf.mxu0
    %v3203 = vadd.f32 %v3142, %v3202
    %v3204 = vpop.f32.mrf.mxu0
    %v3205 = vpop.f32.mrf.mxu0
    %v3206 = vadd.f32 %v3142, %v3205
    %v3207 = vpop.f32.mrf.mxu0
    %3208 = vmatprep.mubr.bf16.mxu0 0
    %3209 = vmatmul.mubr.bf16.gmra.mxu0 %v3160
    %v3210 = vpop.f32.mrf.mxu0
    %v3211 = vadd.f32 %v3142, %v3210
    %v3212 = vpop.f32.mrf.mxu0
    %v3213 = vpop.f32.mrf.mxu0
    %v3214 = vadd.f32 %v3142, %v3213
    %v3215 = vpop.f32.mrf.mxu0
    %3216 = vmatprep.mubr.bf16.mxu0 0
    %3217 = vmatmul.mubr.bf16.gmra.mxu0 %v3163
    %v3218 = vpop.f32.mrf.mxu0
    %v3219 = vadd.f32 %v3142, %v3218
    %v3220 = vpop.f32.mrf.mxu0
    %v3221 = vpop.f32.mrf.mxu0
    %v3222 = vadd.f32 %v3142, %v3221
    %v3223 = vpop.f32.mrf.mxu0
    %3224 = vmatprep.mubr.bf16.mxu0 0
    %3225 = vmatmul.mubr.bf16.gmra.mxu0 %v3166
    %v3226 = vpop.f32.mrf.mxu0
    %v3227 = vadd.f32 %v3142, %v3226
    %v3228 = vpop.f32.mrf.mxu0
    %v3229 = vpop.f32.mrf.mxu0
    %v3230 = vadd.f32 %v3142, %v3229
    %v3231 = vpop.f32.mrf.mxu0
    %3232 = vdwg.mxu0
    %v3233 = vld [vmem:[%s49] sm:$0x1]
    %v3235 = vlaneseq
    %v3236 = vshrl.u32 %v3235, 7
    %v3237 = vsub.s32 0, %v3236
    %v3238 = vrot.slane %v3233, %v3237
    %v3240 = vmul.f32 %v3203, %v3238
    %v3241 = vmul.f32 %v3206, %v3238
    %v3242 = vmul.f32 %v3211, %v3238
    %v3243 = vmul.f32 %v3214, %v3238
    %v3244 = vmul.f32 %v3219, %v3238
    %v3245 = vmul.f32 %v3222, %v3238
    %v3246 = vmul.f32 %v3227, %v3238
    %v3247 = vmul.f32 %v3230, %v3238
    %vm3248 = vcmask 64512
    %v3249 = vsel %vm3248, %v3240, 0.0
    %3250 = vadd.xlane.f32.xlu0 %v3249
    %v3251 = vpop.xlane.xlu0 %3250
    %v3252 = vsel %vm3248, %v3241, 0.0
    %3253 = vadd.xlane.f32.xlu0 %v3252
    %v3254 = vpop.xlane.xlu0 %3253
    %v3255 = vsel %vm3248, %v3242, 0.0
    %3256 = vadd.xlane.f32.xlu0 %v3255
    %v3257 = vpop.xlane.xlu0 %3256
    %v3258 = vsel %vm3248, %v3243, 0.0
    %3259 = vadd.xlane.f32.xlu0 %v3258
    %v3260 = vpop.xlane.xlu0 %3259
    %v3261 = vsel %vm3248, %v3244, 0.0
    %3262 = vadd.xlane.f32.xlu0 %v3261
    %v3263 = vpop.xlane.xlu0 %3262
    %v3264 = vsel %vm3248, %v3245, 0.0
    %3265 = vadd.xlane.f32.xlu0 %v3264
    %v3266 = vpop.xlane.xlu0 %3265
    %v3267 = vsel %vm3248, %v3246, 0.0
    %3268 = vadd.xlane.f32.xlu0 %v3267
    %v3269 = vpop.xlane.xlu0 %3268
    %v3270 = vsel %vm3248, %v3247, 0.0
    %3271 = vadd.xlane.f32.xlu0 %v3270
    %v3272 = vpop.xlane.xlu0 %3271
    %v3273 = vld [vmem:[#allocation2] sm:$0x1]
    %v3275 = vlaneseq
    %v3276 = vshrl.u32 %v3275, 7
    %v3277 = vsub.s32 0, %v3276
    %v3278 = vrot.slane %v3273, %v3277
    %v3280 = vadd.f32 %v3251, %v3278
    %v3281 = vadd.f32 %v3254, %v3278
    %v3282 = vadd.f32 %v3257, %v3278
    %v3283 = vadd.f32 %v3260, %v3278
    %v3284 = vadd.f32 %v3263, %v3278
    %v3285 = vadd.f32 %v3266, %v3278
    %v3286 = vadd.f32 %v3269, %v3278
    %v3287 = vadd.f32 %v3272, %v3278
    %v3288 = vld [vmem:[%s53] sm:$0x1]
    %3290 = vset.pattern.permute.xlu0 0
    %3291 = vperm.xlu0 %3290, %v3280
    %v3292 = vpop.permute.xlu0 %3291
    %3295 = vset.pattern.permute.xlu0 0
    %3296 = vperm.xlu0 %3295, %v3281
    %v3297 = vpop.permute.xlu0 %3296
    %3300 = vset.pattern.permute.xlu0 0
    %3301 = vperm.xlu0 %3300, %v3282
    %v3302 = vpop.permute.xlu0 %3301
    %3305 = vset.pattern.permute.xlu0 0
    %3306 = vperm.xlu0 %3305, %v3283
    %v3307 = vpop.permute.xlu0 %3306
    %3310 = vset.pattern.permute.xlu0 0
    %3311 = vperm.xlu0 %3310, %v3284
    %v3312 = vpop.permute.xlu0 %3311
    %3315 = vset.pattern.permute.xlu0 0
    %3316 = vperm.xlu0 %3315, %v3285
    %v3317 = vpop.permute.xlu0 %3316
    %3320 = vset.pattern.permute.xlu0 0
    %3321 = vperm.xlu0 %3320, %v3286
    %v3322 = vpop.permute.xlu0 %3321
    %3325 = vset.pattern.permute.xlu0 0
    %3326 = vperm.xlu0 %3325, %v3287
    %v3327 = vpop.permute.xlu0 %3326
    %v3330 = vlaneseq
    %v3331 = vshrl.u32 %v3330, 7
    %v3332 = vsub.s32 0, %v3331
    %v3333 = vrot.slane %v3288, %v3332
    %v3335 = vmul.f32 %v3292, %v3333
    %v3336 = vmul.f32 %v3297, %v3333
    %v3337 = vmul.f32 %v3302, %v3333
    %v3338 = vmul.f32 %v3307, %v3333
    %v3339 = vmul.f32 %v3312, %v3333
    %v3340 = vmul.f32 %v3317, %v3333
    %v3341 = vmul.f32 %v3322, %v3333
    %v3342 = vmul.f32 %v3327, %v3333
    %v3343 = vld [vmem:[%s55] sm:$0x1]
    %v3345 = vlaneseq
    %v3346 = vshrl.u32 %v3345, 7
    %v3347 = vsub.s32 0, %v3346
    %v3348 = vrot.slane %v3343, %v3347
    %v3350 = vadd.f32 %v3335, %v3348
    %v3351 = vadd.f32 %v3336, %v3348
    %v3352 = vadd.f32 %v3337, %v3348
    %v3353 = vadd.f32 %v3338, %v3348
    %v3354 = vadd.f32 %v3339, %v3348
    %v3355 = vadd.f32 %v3340, %v3348
    %v3356 = vadd.f32 %v3341, %v3348
    %v3357 = vadd.f32 %v3342, %v3348
    %v3358 = vpack.c.bf16 %v3351, %v3350
    %v3359 = vpack.c.bf16 %v3353, %v3352
    %v3360 = vpack.c.bf16 %v3355, %v3354
    %v3361 = vpack.c.bf16 %v3357, %v3356
    %v3362 = vld [vmem:[%s57] sm:$0xf]
    %v3363 = vld [vmem:[%s59] sm:$0x1]
    %v3365 = vlaneseq
    %v3366 = vshrl.u32 %v3365, 7
    %v3367 = vsub.s32 0, %v3366
    %v3368 = vrot.slane %v3363, %v3367
    %v3371 = vsel %vm3248, %v3358, 0
    %v3374 = vsel %vm3248, %v3359, 0
    %v3377 = vsel %vm3248, %v3360, 0
    %v3380 = vsel %vm3248, %v3361, 0
    %vm3382 = vcmask 1043456
    %v3384 = vsel %vm3382, %v3362, 0
    %3386 = vmatprep.subr.bf16.mxu0 0
    %3387 = vmatpush1.bf16.msra.mxu0 0
    %3388 = vmatprep.subr.bf16.mxu0 0
    %3389 = vmatpush1.bf16.msra.mxu0 0
    %3390 = vmatprep.subr.bf16.mxu0 0
    %3391 = vmatpush1.bf16.msra.mxu0 0
    %3392 = vmatprep.subr.bf16.mxu0 0
    %3393 = vmatpush1.bf16.msra.mxu0 0
    %3394 = vmatprep.subr.bf16.mxu0 0
    %3395 = vmatpush1.bf16.msra.mxu0 0
    %3396 = vmatprep.subr.bf16.mxu0 0
    %3397 = vmatpush1.bf16.msra.mxu0 0
    %3398 = vmatprep.subr.bf16.mxu0 0
    %3399 = vmatpush1.bf16.msra.mxu0 0
    %3400 = vmatprep.subr.bf16.mxu0 0
    %3401 = vmatpush1.bf16.msra.mxu0 %v3384
    %3402 = vmatprep.subr.bf16.mxu0 0
    %3403 = vmatpush2.bf16.msra.mxu0 0
    %3404 = vmatprep.subr.bf16.mxu0 0
    %3405 = vmatpush2.bf16.msra.mxu0 0
    %3406 = vmatprep.subr.bf16.mxu0 0
    %3407 = vmatpush2.bf16.msra.mxu0 0
    %3408 = vmatprep.subr.bf16.mxu0 0
    %3409 = vmatpush2.bf16.msra.mxu0 0
    %3410 = vmatprep.subr.bf16.mxu0 0
    %3411 = vmatpush2.bf16.msra.mxu0 0
    %3412 = vmatprep.subr.bf16.mxu0 0
    %3413 = vmatpush2.bf16.msra.mxu0 0
    %3414 = vmatprep.subr.bf16.mxu0 0
    %3415 = vmatpush2.bf16.msra.mxu0 0
    %3416 = vmatprep.subr.bf16.mxu0 0
    %3417 = vmatpush2.bf16.msra.mxu0 0
    %3418 = vmatprep.mubr.bf16.mxu0 0
    %3419 = vmatmul.mubr.bf16.gmra.mxu0 %v3371
    %v3420 = vpop.f32.mrf.mxu0
    %v3421 = vadd.f32 %v3368, %v3420
    %v3422 = vpop.f32.mrf.mxu0
    %v3423 = vpop.f32.mrf.mxu0
    %v3424 = vadd.f32 %v3368, %v3423
    %v3425 = vpop.f32.mrf.mxu0
    %3426 = vmatprep.mubr.bf16.mxu0 0
    %3427 = vmatmul.mubr.bf16.gmra.mxu0 %v3374
    %v3428 = vpop.f32.mrf.mxu0
    %v3429 = vadd.f32 %v3368, %v3428
    %v3430 = vpop.f32.mrf.mxu0
    %v3431 = vpop.f32.mrf.mxu0
    %v3432 = vadd.f32 %v3368, %v3431
    %v3433 = vpop.f32.mrf.mxu0
    %3434 = vmatprep.mubr.bf16.mxu0 0
    %3435 = vmatmul.mubr.bf16.gmra.mxu0 %v3377
    %v3436 = vpop.f32.mrf.mxu0
    %v3437 = vadd.f32 %v3368, %v3436
    %v3438 = vpop.f32.mrf.mxu0
    %v3439 = vpop.f32.mrf.mxu0
    %v3440 = vadd.f32 %v3368, %v3439
    %v3441 = vpop.f32.mrf.mxu0
    %3442 = vmatprep.mubr.bf16.mxu0 0
    %3443 = vmatmul.mubr.bf16.gmra.mxu0 %v3380
    %v3444 = vpop.f32.mrf.mxu0
    %v3445 = vadd.f32 %v3368, %v3444
    %v3446 = vpop.f32.mrf.mxu0
    %v3447 = vpop.f32.mrf.mxu0
    %v3448 = vadd.f32 %v3368, %v3447
    %v3449 = vpop.f32.mrf.mxu0
    %3450 = vdwg.mxu0
    %3451 = vst.msk [vmem:[%s65] sm:$0xff] %vm182, %v3421
    %3452 = vst.msk [vmem:[%s65 + $0x8] sm:$0xff] %vm182, %v3424
    %3453 = vst.msk [vmem:[%s65 + $0x10] sm:$0xff] %vm182, %v3429
    %3454 = vst.msk [vmem:[%s65 + $0x18] sm:$0xff] %vm182, %v3432
    %3455 = vst.msk [vmem:[%s65 + $0x20] sm:$0xff] %vm182, %v3437
    %3456 = vst.msk [vmem:[%s65 + $0x28] sm:$0xff] %vm182, %v3440
    %3457 = vst.msk [vmem:[%s65 + $0x30] sm:$0xff] %vm182, %v3445
    %3458 = vst.msk [vmem:[%s65 + $0x38] sm:$0xff] %vm182, %v3448
    %v3459 = vsub.f32 %v3421, %v135
    %v3460 = vsub.f32 %v3424, %v136
    %v3461 = vsub.f32 %v3429, %v137
    %v3462 = vsub.f32 %v3432, %v138
    %v3463 = vsub.f32 %v3437, %v139
    %v3464 = vsub.f32 %v3440, %v140
    %v3465 = vsub.f32 %v3445, %v141
    %v3466 = vsub.f32 %v3448, %v142
    %v3467 = vmul.f32 %v3459, %v3459
    %v3468 = vmul.f32 %v3460, %v3460
    %v3469 = vmul.f32 %v3461, %v3461
    %v3470 = vmul.f32 %v3462, %v3462
    %v3471 = vmul.f32 %v3463, %v3463
    %v3472 = vmul.f32 %v3464, %v3464
    %v3473 = vmul.f32 %v3465, %v3465
    %v3474 = vmul.f32 %v3466, %v3466
    %v3475 = vsel %vm182, %v3467, 0.0
    %3476 = vadd.xlane.f32.xlu0 %v3475
    %v3477 = vpop.xlane.xlu0 %3476
    %v3478 = vsel %vm182, %v3468, 0.0
    %3479 = vadd.xlane.f32.xlu0 %v3478
    %v3480 = vpop.xlane.xlu0 %3479
    %v3481 = vsel %vm182, %v3469, 0.0
    %3482 = vadd.xlane.f32.xlu0 %v3481
    %v3483 = vpop.xlane.xlu0 %3482
    %v3484 = vsel %vm182, %v3470, 0.0
    %3485 = vadd.xlane.f32.xlu0 %v3484
    %v3486 = vpop.xlane.xlu0 %3485
    %v3487 = vsel %vm182, %v3471, 0.0
    %3488 = vadd.xlane.f32.xlu0 %v3487
    %v3489 = vpop.xlane.xlu0 %3488
    %v3490 = vsel %vm182, %v3472, 0.0
    %3491 = vadd.xlane.f32.xlu0 %v3490
    %v3492 = vpop.xlane.xlu0 %3491
    %v3493 = vsel %vm182, %v3473, 0.0
    %3494 = vadd.xlane.f32.xlu0 %v3493
    %v3495 = vpop.xlane.xlu0 %3494
    %v3496 = vsel %vm182, %v3474, 0.0
    %3497 = vadd.xlane.f32.xlu0 %v3496
    %v3498 = vpop.xlane.xlu0 %3497
    %v3499 = vrcp.pop 32.0
    %v3500 = vmul.f32 %v3477, %v3499
    %v3501 = vmul.f32 %v3480, %v3499
    %v3502 = vmul.f32 %v3483, %v3499
    %v3503 = vmul.f32 %v3486, %v3499
    %v3504 = vmul.f32 %v3489, %v3499
    %v3505 = vmul.f32 %v3492, %v3499
    %v3506 = vmul.f32 %v3495, %v3499
    %v3507 = vmul.f32 %v3498, %v3499
    %vm3508 = vcmask 7168
    %3509 = vst.msk [vmem:[%s63] sm:$0xff] %vm3508, %v3500
    %3510 = vst.msk [vmem:[%s63 + $0x8] sm:$0xff] %vm3508, %v3501
    %3511 = vst.msk [vmem:[%s63 + $0x10] sm:$0xff] %vm3508, %v3502
    %3512 = vst.msk [vmem:[%s63 + $0x18] sm:$0xff] %vm3508, %v3503
    %3513 = vst.msk [vmem:[%s63 + $0x20] sm:$0xff] %vm3508, %v3504
    %3514 = vst.msk [vmem:[%s63 + $0x28] sm:$0xff] %vm3508, %v3505
    %3515 = vst.msk [vmem:[%s63 + $0x30] sm:$0xff] %vm3508, %v3506
    %3516 = vst.msk [vmem:[%s63 + $0x38] sm:$0xff] %vm3508, %v3507
    %v3517 = vld [vmem:[%s3] sm:$0xff]
    %v3518 = vld [vmem:[%s3 + $0x8] sm:$0xff]
    %v3519 = vld [vmem:[%s3 + $0x10] sm:$0xff]
    %v3520 = vld [vmem:[%s3 + $0x18] sm:$0xff]
    %v3521 = vld [vmem:[%s3 + $0x20] sm:$0xff]
    %v3522 = vld [vmem:[%s3 + $0x28] sm:$0xff]
    %v3523 = vld [vmem:[%s3 + $0x30] sm:$0xff]
    %v3524 = vld [vmem:[%s3 + $0x38] sm:$0xff]
    %v3525 = vmul.f32 %v3500, %v3517
    %v3526 = vmul.f32 %v3501, %v3518
    %v3527 = vmul.f32 %v3502, %v3519
    %v3528 = vmul.f32 %v3503, %v3520
    %v3529 = vmul.f32 %v3504, %v3521
    %v3530 = vmul.f32 %v3505, %v3522
    %v3531 = vmul.f32 %v3506, %v3523
    %v3532 = vmul.f32 %v3507, %v3524
    %v3533 = vsel %vm3508, %v3525, 0.0
    %v3534 = vsel %vm3508, %v3526, 0.0
    %v3535 = vadd.f32 %v3533, %v3534
    %v3536 = vsel %vm3508, %v3527, 0.0
    %v3537 = vadd.f32 %v3535, %v3536
    %v3538 = vsel %vm3508, %v3528, 0.0
    %v3539 = vadd.f32 %v3537, %v3538
    %v3540 = vsel %vm3508, %v3529, 0.0
    %v3541 = vadd.f32 %v3539, %v3540
    %v3542 = vsel %vm3508, %v3530, 0.0
    %v3543 = vadd.f32 %v3541, %v3542
    %v3544 = vsel %vm3508, %v3531, 0.0
    %v3545 = vadd.f32 %v3543, %v3544
    %v3546 = vsel %vm3508, %v3532, 0.0
    %v3547 = vadd.f32 %v3545, %v3546
    %3548 = vadd.xlane.f32.xlu0 %v3547
    %v3549 = vpop.xlane.xlu0 %3548
    %v3550 = vrot.slane %v3549, 4
    %v3551 = vadd.f32 %v3549, %v3550
    %v3552 = vrot.slane %v3551, 2
    %v3553 = vadd.f32 %v3551, %v3552
    %v3554 = vrot.slane %v3553, 1
    %v3555 = vadd.f32 %v3553, %v3554
    %s3556 = vtos %v3555
    %s3557 = smul.f32 %s3556, 0.0625
    %s3558 = scalar_lea.smem [#allocation3], 0
    %3559 = sst [smem:[%s3558]] %s3557
    // Predicated region
    $region122: #{distillog_forward.1} parent=1 // pred_check
      _
    $region123: #{distillog_forward.1} parent=1 // pred_check_branch
      %3561 = sbr.rel (0) target = $region125
    $region124: #{distillog_forward.1} parent=1 // pred_region
      %s3563 = ssub.s32 16, 16
      %3564 = vsyncadd [#allocation4], %s3563
      %3567 = dma.smem_to_hbm [#allocation3], 16, %s61, [#allocation4]
    $region125: #{distillog_forward.1} parent=1 // pred_fallthru
      _
    // Predicated region
    $region126: #{distillog_forward.1} parent=1 // pred_check
      _
    $region127: #{distillog_forward.1} parent=1 // pred_check_branch
      %3569 = sbr.rel (0) target = $region129
    $region128: #{distillog_forward.1} parent=1 // pred_region
      _
    $region129: #{distillog_forward.1} parent=1 // pred_fallthru
      _
    // Predicated region
    $region130: #{distillog_forward.1} parent=1 // pred_check
      _
    $region131: #{distillog_forward.1} parent=1 // pred_check_branch
      %3571 = sbr.rel (0) target = $region133
    $region132: #{distillog_forward.1} parent=1 // pred_region
      _
    $region133: #{distillog_forward.1} parent=1 // pred_fallthru
      _
    // Predicated region
    $region134: #{distillog_forward.1} parent=1 // pred_check
      _
    $region135: #{distillog_forward.1} parent=1 // pred_check_branch
      %3573 = sbr.rel (0) target = $region137
    $region136: #{distillog_forward.1} parent=1 // pred_region
      %3574 = dma.done [#allocation4], 16
    $region137: #{distillog_forward.1} parent=1 // pred_fallthru
      _
    // Predicated region
    $region138: #{distillog_forward.1} parent=1 // pred_check
      _
    $region139: #{distillog_forward.1} parent=1 // pred_check_branch
      %3576 = sbr.rel (0) target = $region141
    $region140: #{distillog_forward.1} parent=1 // pred_region
      _
    $region141: #{distillog_forward.1} parent=1 // pred_fallthru
      _
    // Predicated region
    $region142: #{distillog_forward.1} parent=1 // pred_check
      _
    $region143: #{distillog_forward.1} parent=1 // pred_check_branch
      %3578 = sbr.rel (0) target = $region145
    $region144: #{distillog_forward.1} parent=1 // pred_region
      _
    $region145: #{distillog_forward.1} parent=1 // pred_fallthru
      _
    %3579 = sfence
    %3580 = vsyncpa [#allocation4], 1

</llo_original>
